<compile_context>
chip_gen: v6e
topology: v6e:2x2x1
jax: 0.10.0
libtpu: 0.0.40
codegen_flags: <defaults>
</compile_context>

<pallas_src>
import jax
import jax.numpy as jnp
import numpy as np
from jax.experimental import pallas as pl
from jax.experimental.pallas import tpu as pltpu

NEG_SLOPE = 0.2  # module default negative_slope


# ---------------------------------------------------------------------------
# Fused kernel: 1x1 conv + ReLU + attention logits + LeakyReLU + softmax +
#               neighbor aggregation + bias.  One batch element per grid step.
# ---------------------------------------------------------------------------
def gat_fused_kernel(x_ref, w_ref, ai_ref, aj_ref, ei0_ref, ei1_ref, bias_ref, o_ref):
    f32 = jnp.float32

    # --- 1x1 conv (bias=False) + ReLU on the MXU:  (N, Cin) @ (Cin, Cout) ---
    xp = jnp.dot(x_ref[...], w_ref[...], preferred_element_type=f32)
    xp = jnp.maximum(xp, 0.0)                                   # (N, Cout)

    # --- per-vertex attention scalars (x_i / x_j never materialized) ---
    s_i = jnp.sum(xp * ai_ref[...], axis=1, keepdims=True)      # (N, 1)
    s_j = jnp.sum(xp * aj_ref[...], axis=1, keepdims=True)      # (N, 1)

    ei0 = ei0_ref[...]                                          # (Kp, N) int32 source idx
    ei1 = ei1_ref[...]                                          # (Kp, N) int32 dest/center idx
    kp, nv = ei0.shape
    # row_ids[m, n] = m  (source-vertex iota on the sublane axis)
    row_ids = jax.lax.broadcasted_iota(jnp.int32, (nv, nv), 0)

    # --- logits[k, n] = s_i[ei1[k, n]] + s_j[ei0[k, n]]  (one-hot scalar gather, N on lanes) ---
    rows = []
    for k in range(kp):                                         # Kp is small -> unrolled
        oh0 = (row_ids == ei0[k:k + 1, :]).astype(f32)          # (N, N): [m,n] = (m == src of edge k of n)
        oh1 = (row_ids == ei1[k:k + 1, :]).astype(f32)
        sj_g = jnp.sum(oh0 * s_j, axis=0, keepdims=True)        # (1, N) = s_j[ei0[k, :]]
        si_g = jnp.sum(oh1 * s_i, axis=0, keepdims=True)        # (1, N) = s_i[ei1[k, :]]
        rows.append(si_g + sj_g)
    logits = jnp.concatenate(rows, axis=0)                      # (Kp, N)

    # --- LeakyReLU + softmax over the neighbor axis (sublanes); N stays lane-dense ---
    logits = jnp.where(logits >= 0.0, logits, NEG_SLOPE * logits)
    m = jnp.max(logits, axis=0, keepdims=True)                  # (1, N)
    e = jnp.exp(logits - m)                                     # (Kp, N)  (EUP)
    recip = pl.reciprocal(jnp.sum(e, axis=0, keepdims=True), approx=True)   # (1, N)  (EUP)
    # TODO(synk): attention dropout not implemented (module default p=0 / eval mode).

    # --- aggregation: scatter unnormalized weights into a dense (N_src, N_dst) matrix,
    #     then ONE MXU matmul  x'^T @ A  ->  (Cout, N); normalize + bias in the epilogue ---
    at = jnp.zeros((nv, nv), dtype=f32)
    for k in range(kp):
        oh0 = (row_ids == ei0[k:k + 1, :]).astype(f32)
        at = at + oh0 * e[k:k + 1, :]
    out_cn = jax.lax.dot_general(xp, at, (((0,), (0,)), ((), ())),
                                 preferred_element_type=f32)    # (Cout, N)
    o_ref[...] = out_cn * recip + bias_ref[...]                 # bias (Cout,1) broadcasts over lanes


# ---------------------------------------------------------------------------
# Wrapper: layout plumbing + self-loops in plain JAX, everything else in Pallas.
# ---------------------------------------------------------------------------
def gat_conv2d_forward(x_nchw, weight, att, bias, edge_index):
    B, Cin, N, _ = x_nchw.shape
    Cout = weight.shape[0]
    f32 = jnp.float32

    # channel-last vertex features for the in-kernel MXU matmul: (B, N, Cin)
    x_bnc = jnp.transpose(x_nchw[..., 0], (0, 2, 1)).astype(f32)

    # add_self_loops: append the center vertex index as an extra neighbor -> (2, B, N, K+1)
    self_idx = jnp.broadcast_to(
        jnp.arange(N, dtype=edge_index.dtype)[None, :, None], (B, N, 1))
    ei = jnp.concatenate(
        [edge_index, jnp.stack([self_idx, self_idx], axis=0)], axis=-1)
    Kp = ei.shape[-1]
    # transpose so N sits on the lane axis inside the kernel: (B, Kp, N)
    ei0 = jnp.transpose(ei[0], (0, 2, 1)).astype(jnp.int32)     # source / neighbor indices
    ei1 = jnp.transpose(ei[1], (0, 2, 1)).astype(jnp.int32)     # destination / center indices

    w_t = weight.T.astype(f32)                                  # (Cin, Cout)
    att_flat = att.reshape(2 * Cout).astype(f32)
    att_i = att_flat[:Cout].reshape(1, Cout)                    # multiplies the x_i half of the concat
    att_j = att_flat[Cout:].reshape(1, Cout)                    # multiplies the x_j half of the concat
    bias_col = bias.reshape(Cout, 1).astype(f32)

    out_bcn = pl.pallas_call(
        gat_fused_kernel,
        out_shape=jax.ShapeDtypeStruct((B, Cout, N), f32),
        grid=(B,),
        in_specs=[
            pl.BlockSpec((None, N, Cin), lambda b: (b, 0, 0)),  # per-batch vertex features
            pl.BlockSpec((Cin, Cout), lambda b: (0, 0)),        # conv weight
            pl.BlockSpec((1, Cout), lambda b: (0, 0)),          # att_i
            pl.BlockSpec((1, Cout), lambda b: (0, 0)),          # att_j
            pl.BlockSpec((None, Kp, N), lambda b: (b, 0, 0)),   # neighbor indices
            pl.BlockSpec((None, Kp, N), lambda b: (b, 0, 0)),   # center indices
            pl.BlockSpec((Cout, 1), lambda b: (0, 0)),          # bias
        ],
        out_specs=pl.BlockSpec((None, Cout, N), lambda b: (b, 0, 0)),  # lane-dense (Cout, N)
        compiler_params=pltpu.CompilerParams(dimension_semantics=("parallel",)),
    )(x_bnc, w_t, att_i, att_j, ei0, ei1, bias_col)

    # (B, Cout, N) is already NCHW-ordered; just restore the trailing W=1 axis.
    return out_bcn[..., None]


# ---------------------------------------------------------------------------
# Pure-JAX reference (mirrors the PyTorch forward, NCHW) for validation.
# ---------------------------------------------------------------------------
def reference_forward(x_nchw, weight, att, bias, edge_index):
    B, Cin, N, _ = x_nchw.shape
    xp = jnp.maximum(jnp.einsum('oc,bcn->bon', weight, x_nchw[..., 0]), 0.0)  # (B, Cout, N)
    self_idx = jnp.broadcast_to(
        jnp.arange(N, dtype=edge_index.dtype)[None, :, None], (B, N, 1))
    ei = jnp.concatenate([edge_index, jnp.stack([self_idx, self_idx], 0)], axis=-1)

    def gsel(xb, ib):            # xb: (Cout, N), ib: (N, Kp) -> (Cout, N, Kp)
        return xb[:, ib]

    x_i = jax.vmap(gsel)(xp, ei[1])                              # (B, Cout, N, Kp)
    x_j = jax.vmap(gsel)(xp, ei[0])
    alpha = (jnp.concatenate([x_i, x_j], axis=1) * att).sum(axis=1, keepdims=True)
    alpha = jnp.where(alpha >= 0.0, alpha, NEG_SLOPE * alpha)
    alpha = jax.nn.softmax(alpha, axis=-1)
    x_j = x_j * alpha
    return x_j.sum(axis=-1, keepdims=True) + bias                # (B, Cout, N, 1)


if __name__ == "__main__":
    key = jax.random.PRNGKey(0)
    # N chosen as a multiple of 128 so vertices fill the lane axis and output stores are unmasked.
    B, Cin, Cout, N, K = 2, 4, 8, 128, 8
    k1, k2, k3, k4, k5 = jax.random.split(key, 5)

    # note: the module's forward also takes `x_0`, which is unused -> omitted here.
    x = jax.random.normal(k1, (B, Cin, N, 1), dtype=jnp.float32)

    # Conv2d(in, out, 1, bias=False) weight (kernel dims squeezed).
    weight = jax.random.normal(k2, (Cout, Cin), dtype=jnp.float32) / np.sqrt(Cin)
    # glorot-uniform init for att (1, 2*Cout, 1, 1); bias is a learnable param (nonzero to test the path).
    a = float(np.sqrt(6.0 / (1 + 2 * Cout)))
    att = jax.random.uniform(k3, (1, 2 * Cout, 1, 1), minval=-a, maxval=a, dtype=jnp.float32)
    bias = 0.1 * jax.random.normal(k5, (1, Cout, 1, 1), dtype=jnp.float32)

    # dense edge_index: (2, B, N, K); row 0 = neighbor indices, row 1 = center indices.
    nbr = jax.random.randint(k4, (B, N, K), 0, N, dtype=jnp.int32)
    ctr = jnp.broadcast_to(jnp.arange(N, dtype=jnp.int32)[None, :, None], (B, N, K))
    edge_index = jnp.stack([nbr, ctr], axis=0)

    out = jax.block_until_ready(gat_conv2d_forward(x, weight, att, bias, edge_index))
    ref = reference_forward(x, weight, att, bias, edge_index)

    assert out.shape == (B, Cout, N, 1)
    # tolerance accounts for the EUP approximate reciprocal in the softmax normalization
    np.testing.assert_allclose(np.asarray(out), np.asarray(ref), rtol=2e-3, atol=2e-3)
    print("KERNEL_OK")
</pallas_src>

<mosaic_0001>
module attributes {stable_mosaic.version = 11 : i64} {
  func.func @gat_fused_kernel(%arg0: i32, %arg1: memref<1x128x4xf32, #tpu.memory_space<vmem>>, %arg2: memref<4x8xf32, #tpu.memory_space<vmem>>, %arg3: memref<1x8xf32, #tpu.memory_space<vmem>>, %arg4: memref<1x8xf32, #tpu.memory_space<vmem>>, %arg5: memref<1x9x128xi32, #tpu.memory_space<vmem>>, %arg6: memref<1x9x128xi32, #tpu.memory_space<vmem>>, %arg7: memref<8x1xf32, #tpu.memory_space<vmem>>, %arg8: memref<1x8x128xf32, #tpu.memory_space<vmem>>) attributes {dimension_semantics = [#tpu.dimension_semantics<parallel>], iteration_bounds = array<i64: 2>, scalar_prefetch = 0 : i64, scratch_operands = 0 : i64, tpu.core_type = #tpu.core_type<tc>, window_params = [{transform_indices = @transform_0, window_bounds = array<i64: 1, 128, 4>}, {pipeline_mode = #tpu.pipeline_mode<synchronous>, transform_indices = @transform_1, window_bounds = array<i64: 4, 8>}, {pipeline_mode = #tpu.pipeline_mode<synchronous>, transform_indices = @transform_2, window_bounds = array<i64: 1, 8>}, {pipeline_mode = #tpu.pipeline_mode<synchronous>, transform_indices = @transform_3, window_bounds = array<i64: 1, 8>}, {transform_indices = @transform_4, window_bounds = array<i64: 1, 9, 128>}, {transform_indices = @transform_5, window_bounds = array<i64: 1, 9, 128>}, {pipeline_mode = #tpu.pipeline_mode<synchronous>, transform_indices = @transform_6, window_bounds = array<i64: 8, 1>}, {transform_indices = @transform_7, window_bounds = array<i64: 1, 8, 128>}]} {
    %c0 = arith.constant 0 : index
    %c0_0 = arith.constant 0 : index
    %c0_1 = arith.constant 0 : index
    %0 = vector.load %arg1[%c0, %c0_0, %c0_1] : memref<1x128x4xf32, #tpu.memory_space<vmem>>, vector<1x128x4xf32>
    %1 = vector.shape_cast %0 : vector<1x128x4xf32> to vector<128x4xf32>
    %c0_2 = arith.constant 0 : index
    %c0_3 = arith.constant 0 : index
    %2 = vector.load %arg2[%c0_2, %c0_3] : memref<4x8xf32, #tpu.memory_space<vmem>>, vector<4x8xf32>
    %cst = arith.constant dense<0.000000e+00> : vector<128x8xf32>
    %3 = tpu.matmul %1, %2, %cst {dimension_numbers = #tpu.dot_dimension_numbers<[1], [0], [0], [1], [0, 0, 1, 1], [], []>} : vector<128x4xf32>, vector<4x8xf32>, vector<128x8xf32> -> vector<128x8xf32>
    %cst_4 = arith.constant 0.000000e+00 : f32
    %4 = vector.broadcast %cst_4 : f32 to vector<128x8xf32>
    %5 = arith.maximumf %3, %4 : vector<128x8xf32>
    %c0_5 = arith.constant 0 : index
    %c0_6 = arith.constant 0 : index
    %6 = vector.load %arg3[%c0_5, %c0_6] : memref<1x8xf32, #tpu.memory_space<vmem>>, vector<1x8xf32>
    %7 = vector.broadcast %6 : vector<1x8xf32> to vector<128x8xf32>
    %8 = arith.mulf %5, %7 : vector<128x8xf32>
    %cst_7 = arith.constant dense<0.000000e+00> : vector<128xf32>
    %9 = vector.multi_reduction <add>, %8, %cst_7 [1] : vector<128x8xf32> to vector<128xf32>
    %10 = vector.shape_cast %9 : vector<128xf32> to vector<128x1xf32>
    %c0_8 = arith.constant 0 : index
    %c0_9 = arith.constant 0 : index
    %11 = vector.load %arg4[%c0_8, %c0_9] : memref<1x8xf32, #tpu.memory_space<vmem>>, vector<1x8xf32>
    %12 = vector.broadcast %11 : vector<1x8xf32> to vector<128x8xf32>
    %13 = arith.mulf %5, %12 : vector<128x8xf32>
    %cst_10 = arith.constant dense<0.000000e+00> : vector<128xf32>
    %14 = vector.multi_reduction <add>, %13, %cst_10 [1] : vector<128x8xf32> to vector<128xf32>
    %15 = vector.shape_cast %14 : vector<128xf32> to vector<128x1xf32>
    %c0_11 = arith.constant 0 : index
    %c0_12 = arith.constant 0 : index
    %c0_13 = arith.constant 0 : index
    %16 = vector.load %arg5[%c0_11, %c0_12, %c0_13] : memref<1x9x128xi32, #tpu.memory_space<vmem>>, vector<1x9x128xi32>
    %17 = vector.shape_cast %16 : vector<1x9x128xi32> to vector<9x128xi32>
    %c0_14 = arith.constant 0 : index
    %c0_15 = arith.constant 0 : index
    %c0_16 = arith.constant 0 : index
    %18 = vector.load %arg6[%c0_14, %c0_15, %c0_16] : memref<1x9x128xi32, #tpu.memory_space<vmem>>, vector<1x9x128xi32>
    %19 = vector.shape_cast %18 : vector<1x9x128xi32> to vector<9x128xi32>
    %20 = tpu.iota {dimensions = array<i32: 0>} : vector<128x128xi32>
    %21 = vector.extract_strided_slice %17 {offsets = [0, 0], sizes = [1, 128], strides = [1, 1]} : vector<9x128xi32> to vector<1x128xi32>
    %22 = vector.broadcast %21 : vector<1x128xi32> to vector<128x128xi32>
    %23 = arith.cmpi eq, %20, %22 : vector<128x128xi32>
    %24 = arith.extui %23 : vector<128x128xi1> to vector<128x128xi32>
    %25 = arith.sitofp %24 : vector<128x128xi32> to vector<128x128xf32>
    %26 = vector.extract_strided_slice %19 {offsets = [0, 0], sizes = [1, 128], strides = [1, 1]} : vector<9x128xi32> to vector<1x128xi32>
    %27 = vector.broadcast %26 : vector<1x128xi32> to vector<128x128xi32>
    %28 = arith.cmpi eq, %20, %27 : vector<128x128xi32>
    %29 = arith.extui %28 : vector<128x128xi1> to vector<128x128xi32>
    %30 = arith.sitofp %29 : vector<128x128xi32> to vector<128x128xf32>
    %31 = vector.broadcast %15 : vector<128x1xf32> to vector<128x128xf32>
    %32 = arith.mulf %25, %31 : vector<128x128xf32>
    %cst_17 = arith.constant dense<0.000000e+00> : vector<128xf32>
    %33 = vector.multi_reduction <add>, %32, %cst_17 [0] : vector<128x128xf32> to vector<128xf32>
    %34 = vector.shape_cast %33 : vector<128xf32> to vector<1x128xf32>
    %35 = vector.broadcast %10 : vector<128x1xf32> to vector<128x128xf32>
    %36 = arith.mulf %30, %35 : vector<128x128xf32>
    %cst_18 = arith.constant dense<0.000000e+00> : vector<128xf32>
    %37 = vector.multi_reduction <add>, %36, %cst_18 [0] : vector<128x128xf32> to vector<128xf32>
    %38 = vector.shape_cast %37 : vector<128xf32> to vector<1x128xf32>
    %39 = arith.addf %38, %34 : vector<1x128xf32>
    %40 = vector.extract_strided_slice %17 {offsets = [1, 0], sizes = [1, 128], strides = [1, 1]} : vector<9x128xi32> to vector<1x128xi32>
    %41 = vector.broadcast %40 : vector<1x128xi32> to vector<128x128xi32>
    %42 = arith.cmpi eq, %20, %41 : vector<128x128xi32>
    %43 = arith.extui %42 : vector<128x128xi1> to vector<128x128xi32>
    %44 = arith.sitofp %43 : vector<128x128xi32> to vector<128x128xf32>
    %45 = vector.extract_strided_slice %19 {offsets = [1, 0], sizes = [1, 128], strides = [1, 1]} : vector<9x128xi32> to vector<1x128xi32>
    %46 = vector.broadcast %45 : vector<1x128xi32> to vector<128x128xi32>
    %47 = arith.cmpi eq, %20, %46 : vector<128x128xi32>
    %48 = arith.extui %47 : vector<128x128xi1> to vector<128x128xi32>
    %49 = arith.sitofp %48 : vector<128x128xi32> to vector<128x128xf32>
    %50 = vector.broadcast %15 : vector<128x1xf32> to vector<128x128xf32>
    %51 = arith.mulf %44, %50 : vector<128x128xf32>
    %cst_19 = arith.constant dense<0.000000e+00> : vector<128xf32>
    %52 = vector.multi_reduction <add>, %51, %cst_19 [0] : vector<128x128xf32> to vector<128xf32>
    %53 = vector.shape_cast %52 : vector<128xf32> to vector<1x128xf32>
    %54 = vector.broadcast %10 : vector<128x1xf32> to vector<128x128xf32>
    %55 = arith.mulf %49, %54 : vector<128x128xf32>
    %cst_20 = arith.constant dense<0.000000e+00> : vector<128xf32>
    %56 = vector.multi_reduction <add>, %55, %cst_20 [0] : vector<128x128xf32> to vector<128xf32>
    %57 = vector.shape_cast %56 : vector<128xf32> to vector<1x128xf32>
    %58 = arith.addf %57, %53 : vector<1x128xf32>
    %59 = vector.extract_strided_slice %17 {offsets = [2, 0], sizes = [1, 128], strides = [1, 1]} : vector<9x128xi32> to vector<1x128xi32>
    %60 = vector.broadcast %59 : vector<1x128xi32> to vector<128x128xi32>
    %61 = arith.cmpi eq, %20, %60 : vector<128x128xi32>
    %62 = arith.extui %61 : vector<128x128xi1> to vector<128x128xi32>
    %63 = arith.sitofp %62 : vector<128x128xi32> to vector<128x128xf32>
    %64 = vector.extract_strided_slice %19 {offsets = [2, 0], sizes = [1, 128], strides = [1, 1]} : vector<9x128xi32> to vector<1x128xi32>
    %65 = vector.broadcast %64 : vector<1x128xi32> to vector<128x128xi32>
    %66 = arith.cmpi eq, %20, %65 : vector<128x128xi32>
    %67 = arith.extui %66 : vector<128x128xi1> to vector<128x128xi32>
    %68 = arith.sitofp %67 : vector<128x128xi32> to vector<128x128xf32>
    %69 = vector.broadcast %15 : vector<128x1xf32> to vector<128x128xf32>
    %70 = arith.mulf %63, %69 : vector<128x128xf32>
    %cst_21 = arith.constant dense<0.000000e+00> : vector<128xf32>
    %71 = vector.multi_reduction <add>, %70, %cst_21 [0] : vector<128x128xf32> to vector<128xf32>
    %72 = vector.shape_cast %71 : vector<128xf32> to vector<1x128xf32>
    %73 = vector.broadcast %10 : vector<128x1xf32> to vector<128x128xf32>
    %74 = arith.mulf %68, %73 : vector<128x128xf32>
    %cst_22 = arith.constant dense<0.000000e+00> : vector<128xf32>
    %75 = vector.multi_reduction <add>, %74, %cst_22 [0] : vector<128x128xf32> to vector<128xf32>
    %76 = vector.shape_cast %75 : vector<128xf32> to vector<1x128xf32>
    %77 = arith.addf %76, %72 : vector<1x128xf32>
    %78 = vector.extract_strided_slice %17 {offsets = [3, 0], sizes = [1, 128], strides = [1, 1]} : vector<9x128xi32> to vector<1x128xi32>
    %79 = vector.broadcast %78 : vector<1x128xi32> to vector<128x128xi32>
    %80 = arith.cmpi eq, %20, %79 : vector<128x128xi32>
    %81 = arith.extui %80 : vector<128x128xi1> to vector<128x128xi32>
    %82 = arith.sitofp %81 : vector<128x128xi32> to vector<128x128xf32>
    %83 = vector.extract_strided_slice %19 {offsets = [3, 0], sizes = [1, 128], strides = [1, 1]} : vector<9x128xi32> to vector<1x128xi32>
    %84 = vector.broadcast %83 : vector<1x128xi32> to vector<128x128xi32>
    %85 = arith.cmpi eq, %20, %84 : vector<128x128xi32>
    %86 = arith.extui %85 : vector<128x128xi1> to vector<128x128xi32>
    %87 = arith.sitofp %86 : vector<128x128xi32> to vector<128x128xf32>
    %88 = vector.broadcast %15 : vector<128x1xf32> to vector<128x128xf32>
    %89 = arith.mulf %82, %88 : vector<128x128xf32>
    %cst_23 = arith.constant dense<0.000000e+00> : vector<128xf32>
    %90 = vector.multi_reduction <add>, %89, %cst_23 [0] : vector<128x128xf32> to vector<128xf32>
    %91 = vector.shape_cast %90 : vector<128xf32> to vector<1x128xf32>
    %92 = vector.broadcast %10 : vector<128x1xf32> to vector<128x128xf32>
    %93 = arith.mulf %87, %92 : vector<128x128xf32>
    %cst_24 = arith.constant dense<0.000000e+00> : vector<128xf32>
    %94 = vector.multi_reduction <add>, %93, %cst_24 [0] : vector<128x128xf32> to vector<128xf32>
    %95 = vector.shape_cast %94 : vector<128xf32> to vector<1x128xf32>
    %96 = arith.addf %95, %91 : vector<1x128xf32>
    %97 = vector.extract_strided_slice %17 {offsets = [4, 0], sizes = [1, 128], strides = [1, 1]} : vector<9x128xi32> to vector<1x128xi32>
    %98 = vector.broadcast %97 : vector<1x128xi32> to vector<128x128xi32>
    %99 = arith.cmpi eq, %20, %98 : vector<128x128xi32>
    %100 = arith.extui %99 : vector<128x128xi1> to vector<128x128xi32>
    %101 = arith.sitofp %100 : vector<128x128xi32> to vector<128x128xf32>
    %102 = vector.extract_strided_slice %19 {offsets = [4, 0], sizes = [1, 128], strides = [1, 1]} : vector<9x128xi32> to vector<1x128xi32>
    %103 = vector.broadcast %102 : vector<1x128xi32> to vector<128x128xi32>
    %104 = arith.cmpi eq, %20, %103 : vector<128x128xi32>
    %105 = arith.extui %104 : vector<128x128xi1> to vector<128x128xi32>
    %106 = arith.sitofp %105 : vector<128x128xi32> to vector<128x128xf32>
    %107 = vector.broadcast %15 : vector<128x1xf32> to vector<128x128xf32>
    %108 = arith.mulf %101, %107 : vector<128x128xf32>
    %cst_25 = arith.constant dense<0.000000e+00> : vector<128xf32>
    %109 = vector.multi_reduction <add>, %108, %cst_25 [0] : vector<128x128xf32> to vector<128xf32>
    %110 = vector.shape_cast %109 : vector<128xf32> to vector<1x128xf32>
    %111 = vector.broadcast %10 : vector<128x1xf32> to vector<128x128xf32>
    %112 = arith.mulf %106, %111 : vector<128x128xf32>
    %cst_26 = arith.constant dense<0.000000e+00> : vector<128xf32>
    %113 = vector.multi_reduction <add>, %112, %cst_26 [0] : vector<128x128xf32> to vector<128xf32>
    %114 = vector.shape_cast %113 : vector<128xf32> to vector<1x128xf32>
    %115 = arith.addf %114, %110 : vector<1x128xf32>
    %116 = vector.extract_strided_slice %17 {offsets = [5, 0], sizes = [1, 128], strides = [1, 1]} : vector<9x128xi32> to vector<1x128xi32>
    %117 = vector.broadcast %116 : vector<1x128xi32> to vector<128x128xi32>
    %118 = arith.cmpi eq, %20, %117 : vector<128x128xi32>
    %119 = arith.extui %118 : vector<128x128xi1> to vector<128x128xi32>
    %120 = arith.sitofp %119 : vector<128x128xi32> to vector<128x128xf32>
    %121 = vector.extract_strided_slice %19 {offsets = [5, 0], sizes = [1, 128], strides = [1, 1]} : vector<9x128xi32> to vector<1x128xi32>
    %122 = vector.broadcast %121 : vector<1x128xi32> to vector<128x128xi32>
    %123 = arith.cmpi eq, %20, %122 : vector<128x128xi32>
    %124 = arith.extui %123 : vector<128x128xi1> to vector<128x128xi32>
    %125 = arith.sitofp %124 : vector<128x128xi32> to vector<128x128xf32>
    %126 = vector.broadcast %15 : vector<128x1xf32> to vector<128x128xf32>
    %127 = arith.mulf %120, %126 : vector<128x128xf32>
    %cst_27 = arith.constant dense<0.000000e+00> : vector<128xf32>
    %128 = vector.multi_reduction <add>, %127, %cst_27 [0] : vector<128x128xf32> to vector<128xf32>
    %129 = vector.shape_cast %128 : vector<128xf32> to vector<1x128xf32>
    %130 = vector.broadcast %10 : vector<128x1xf32> to vector<128x128xf32>
    %131 = arith.mulf %125, %130 : vector<128x128xf32>
    %cst_28 = arith.constant dense<0.000000e+00> : vector<128xf32>
    %132 = vector.multi_reduction <add>, %131, %cst_28 [0] : vector<128x128xf32> to vector<128xf32>
    %133 = vector.shape_cast %132 : vector<128xf32> to vector<1x128xf32>
    %134 = arith.addf %133, %129 : vector<1x128xf32>
    %135 = vector.extract_strided_slice %17 {offsets = [6, 0], sizes = [1, 128], strides = [1, 1]} : vector<9x128xi32> to vector<1x128xi32>
    %136 = vector.broadcast %135 : vector<1x128xi32> to vector<128x128xi32>
    %137 = arith.cmpi eq, %20, %136 : vector<128x128xi32>
    %138 = arith.extui %137 : vector<128x128xi1> to vector<128x128xi32>
    %139 = arith.sitofp %138 : vector<128x128xi32> to vector<128x128xf32>
    %140 = vector.extract_strided_slice %19 {offsets = [6, 0], sizes = [1, 128], strides = [1, 1]} : vector<9x128xi32> to vector<1x128xi32>
    %141 = vector.broadcast %140 : vector<1x128xi32> to vector<128x128xi32>
    %142 = arith.cmpi eq, %20, %141 : vector<128x128xi32>
    %143 = arith.extui %142 : vector<128x128xi1> to vector<128x128xi32>
    %144 = arith.sitofp %143 : vector<128x128xi32> to vector<128x128xf32>
    %145 = vector.broadcast %15 : vector<128x1xf32> to vector<128x128xf32>
    %146 = arith.mulf %139, %145 : vector<128x128xf32>
    %cst_29 = arith.constant dense<0.000000e+00> : vector<128xf32>
    %147 = vector.multi_reduction <add>, %146, %cst_29 [0] : vector<128x128xf32> to vector<128xf32>
    %148 = vector.shape_cast %147 : vector<128xf32> to vector<1x128xf32>
    %149 = vector.broadcast %10 : vector<128x1xf32> to vector<128x128xf32>
    %150 = arith.mulf %144, %149 : vector<128x128xf32>
    %cst_30 = arith.constant dense<0.000000e+00> : vector<128xf32>
    %151 = vector.multi_reduction <add>, %150, %cst_30 [0] : vector<128x128xf32> to vector<128xf32>
    %152 = vector.shape_cast %151 : vector<128xf32> to vector<1x128xf32>
    %153 = arith.addf %152, %148 : vector<1x128xf32>
    %154 = vector.extract_strided_slice %17 {offsets = [7, 0], sizes = [1, 128], strides = [1, 1]} : vector<9x128xi32> to vector<1x128xi32>
    %155 = vector.broadcast %154 : vector<1x128xi32> to vector<128x128xi32>
    %156 = arith.cmpi eq, %20, %155 : vector<128x128xi32>
    %157 = arith.extui %156 : vector<128x128xi1> to vector<128x128xi32>
    %158 = arith.sitofp %157 : vector<128x128xi32> to vector<128x128xf32>
    %159 = vector.extract_strided_slice %19 {offsets = [7, 0], sizes = [1, 128], strides = [1, 1]} : vector<9x128xi32> to vector<1x128xi32>
    %160 = vector.broadcast %159 : vector<1x128xi32> to vector<128x128xi32>
    %161 = arith.cmpi eq, %20, %160 : vector<128x128xi32>
    %162 = arith.extui %161 : vector<128x128xi1> to vector<128x128xi32>
    %163 = arith.sitofp %162 : vector<128x128xi32> to vector<128x128xf32>
    %164 = vector.broadcast %15 : vector<128x1xf32> to vector<128x128xf32>
    %165 = arith.mulf %158, %164 : vector<128x128xf32>
    %cst_31 = arith.constant dense<0.000000e+00> : vector<128xf32>
    %166 = vector.multi_reduction <add>, %165, %cst_31 [0] : vector<128x128xf32> to vector<128xf32>
    %167 = vector.shape_cast %166 : vector<128xf32> to vector<1x128xf32>
    %168 = vector.broadcast %10 : vector<128x1xf32> to vector<128x128xf32>
    %169 = arith.mulf %163, %168 : vector<128x128xf32>
    %cst_32 = arith.constant dense<0.000000e+00> : vector<128xf32>
    %170 = vector.multi_reduction <add>, %169, %cst_32 [0] : vector<128x128xf32> to vector<128xf32>
    %171 = vector.shape_cast %170 : vector<128xf32> to vector<1x128xf32>
    %172 = arith.addf %171, %167 : vector<1x128xf32>
    %173 = vector.extract_strided_slice %17 {offsets = [8, 0], sizes = [1, 128], strides = [1, 1]} : vector<9x128xi32> to vector<1x128xi32>
    %174 = vector.broadcast %173 : vector<1x128xi32> to vector<128x128xi32>
    %175 = arith.cmpi eq, %20, %174 : vector<128x128xi32>
    %176 = arith.extui %175 : vector<128x128xi1> to vector<128x128xi32>
    %177 = arith.sitofp %176 : vector<128x128xi32> to vector<128x128xf32>
    %178 = vector.extract_strided_slice %19 {offsets = [8, 0], sizes = [1, 128], strides = [1, 1]} : vector<9x128xi32> to vector<1x128xi32>
    %179 = vector.broadcast %178 : vector<1x128xi32> to vector<128x128xi32>
    %180 = arith.cmpi eq, %20, %179 : vector<128x128xi32>
    %181 = arith.extui %180 : vector<128x128xi1> to vector<128x128xi32>
    %182 = arith.sitofp %181 : vector<128x128xi32> to vector<128x128xf32>
    %183 = vector.broadcast %15 : vector<128x1xf32> to vector<128x128xf32>
    %184 = arith.mulf %177, %183 : vector<128x128xf32>
    %cst_33 = arith.constant dense<0.000000e+00> : vector<128xf32>
    %185 = vector.multi_reduction <add>, %184, %cst_33 [0] : vector<128x128xf32> to vector<128xf32>
    %186 = vector.shape_cast %185 : vector<128xf32> to vector<1x128xf32>
    %187 = vector.broadcast %10 : vector<128x1xf32> to vector<128x128xf32>
    %188 = arith.mulf %182, %187 : vector<128x128xf32>
    %cst_34 = arith.constant dense<0.000000e+00> : vector<128xf32>
    %189 = vector.multi_reduction <add>, %188, %cst_34 [0] : vector<128x128xf32> to vector<128xf32>
    %190 = vector.shape_cast %189 : vector<128xf32> to vector<1x128xf32>
    %191 = arith.addf %190, %186 : vector<1x128xf32>
    %192 = tpu.concatenate %39, %58, %77, %96, %115, %134, %153, %172, %191 in 0 : vector<1x128xf32>, vector<1x128xf32>, vector<1x128xf32>, vector<1x128xf32>, vector<1x128xf32>, vector<1x128xf32>, vector<1x128xf32>, vector<1x128xf32>, vector<1x128xf32> -> vector<9x128xf32>
    %cst_35 = arith.constant 0.000000e+00 : f32
    %193 = vector.broadcast %cst_35 : f32 to vector<9x128xf32>
    %194 = arith.cmpf oge, %192, %193 : vector<9x128xf32>
    %cst_36 = arith.constant 2.000000e-01 : f32
    %195 = vector.broadcast %cst_36 : f32 to vector<9x128xf32>
    %196 = arith.mulf %195, %192 : vector<9x128xf32>
    %197 = arith.select %194, %192, %196 : vector<9x128xi1>, vector<9x128xf32>
    %cst_37 = arith.constant dense<0xFF800000> : vector<128xf32>
    %198 = vector.multi_reduction <maximumf>, %197, %cst_37 [0] : vector<9x128xf32> to vector<128xf32>
    %199 = vector.shape_cast %198 : vector<128xf32> to vector<1x128xf32>
    %200 = vector.broadcast %199 : vector<1x128xf32> to vector<9x128xf32>
    %201 = arith.subf %197, %200 : vector<9x128xf32>
    %202 = math.exp %201 : vector<9x128xf32>
    %cst_38 = arith.constant dense<0.000000e+00> : vector<128xf32>
    %203 = vector.multi_reduction <add>, %202, %cst_38 [0] : vector<9x128xf32> to vector<128xf32>
    %204 = vector.shape_cast %203 : vector<128xf32> to vector<1x128xf32>
    %205 = tpu.reciprocal %204 {approx = true} : vector<1x128xf32> -> vector<1x128xf32>
    %cst_39 = arith.constant 0.000000e+00 : f32
    %206 = vector.broadcast %cst_39 : f32 to vector<128x128xf32>
    %207 = vector.extract_strided_slice %17 {offsets = [0, 0], sizes = [1, 128], strides = [1, 1]} : vector<9x128xi32> to vector<1x128xi32>
    %208 = vector.broadcast %207 : vector<1x128xi32> to vector<128x128xi32>
    %209 = arith.cmpi eq, %20, %208 : vector<128x128xi32>
    %210 = arith.extui %209 : vector<128x128xi1> to vector<128x128xi32>
    %211 = arith.sitofp %210 : vector<128x128xi32> to vector<128x128xf32>
    %212 = vector.extract_strided_slice %202 {offsets = [0, 0], sizes = [1, 128], strides = [1, 1]} : vector<9x128xf32> to vector<1x128xf32>
    %213 = vector.broadcast %212 : vector<1x128xf32> to vector<128x128xf32>
    %214 = arith.mulf %211, %213 : vector<128x128xf32>
    %215 = arith.addf %206, %214 : vector<128x128xf32>
    %216 = vector.extract_strided_slice %17 {offsets = [1, 0], sizes = [1, 128], strides = [1, 1]} : vector<9x128xi32> to vector<1x128xi32>
    %217 = vector.broadcast %216 : vector<1x128xi32> to vector<128x128xi32>
    %218 = arith.cmpi eq, %20, %217 : vector<128x128xi32>
    %219 = arith.extui %218 : vector<128x128xi1> to vector<128x128xi32>
    %220 = arith.sitofp %219 : vector<128x128xi32> to vector<128x128xf32>
    %221 = vector.extract_strided_slice %202 {offsets = [1, 0], sizes = [1, 128], strides = [1, 1]} : vector<9x128xf32> to vector<1x128xf32>
    %222 = vector.broadcast %221 : vector<1x128xf32> to vector<128x128xf32>
    %223 = arith.mulf %220, %222 : vector<128x128xf32>
    %224 = arith.addf %215, %223 : vector<128x128xf32>
    %225 = vector.extract_strided_slice %17 {offsets = [2, 0], sizes = [1, 128], strides = [1, 1]} : vector<9x128xi32> to vector<1x128xi32>
    %226 = vector.broadcast %225 : vector<1x128xi32> to vector<128x128xi32>
    %227 = arith.cmpi eq, %20, %226 : vector<128x128xi32>
    %228 = arith.extui %227 : vector<128x128xi1> to vector<128x128xi32>
    %229 = arith.sitofp %228 : vector<128x128xi32> to vector<128x128xf32>
    %230 = vector.extract_strided_slice %202 {offsets = [2, 0], sizes = [1, 128], strides = [1, 1]} : vector<9x128xf32> to vector<1x128xf32>
    %231 = vector.broadcast %230 : vector<1x128xf32> to vector<128x128xf32>
    %232 = arith.mulf %229, %231 : vector<128x128xf32>
    %233 = arith.addf %224, %232 : vector<128x128xf32>
    %234 = vector.extract_strided_slice %17 {offsets = [3, 0], sizes = [1, 128], strides = [1, 1]} : vector<9x128xi32> to vector<1x128xi32>
    %235 = vector.broadcast %234 : vector<1x128xi32> to vector<128x128xi32>
    %236 = arith.cmpi eq, %20, %235 : vector<128x128xi32>
    %237 = arith.extui %236 : vector<128x128xi1> to vector<128x128xi32>
    %238 = arith.sitofp %237 : vector<128x128xi32> to vector<128x128xf32>
    %239 = vector.extract_strided_slice %202 {offsets = [3, 0], sizes = [1, 128], strides = [1, 1]} : vector<9x128xf32> to vector<1x128xf32>
    %240 = vector.broadcast %239 : vector<1x128xf32> to vector<128x128xf32>
    %241 = arith.mulf %238, %240 : vector<128x128xf32>
    %242 = arith.addf %233, %241 : vector<128x128xf32>
    %243 = vector.extract_strided_slice %17 {offsets = [4, 0], sizes = [1, 128], strides = [1, 1]} : vector<9x128xi32> to vector<1x128xi32>
    %244 = vector.broadcast %243 : vector<1x128xi32> to vector<128x128xi32>
    %245 = arith.cmpi eq, %20, %244 : vector<128x128xi32>
    %246 = arith.extui %245 : vector<128x128xi1> to vector<128x128xi32>
    %247 = arith.sitofp %246 : vector<128x128xi32> to vector<128x128xf32>
    %248 = vector.extract_strided_slice %202 {offsets = [4, 0], sizes = [1, 128], strides = [1, 1]} : vector<9x128xf32> to vector<1x128xf32>
    %249 = vector.broadcast %248 : vector<1x128xf32> to vector<128x128xf32>
    %250 = arith.mulf %247, %249 : vector<128x128xf32>
    %251 = arith.addf %242, %250 : vector<128x128xf32>
    %252 = vector.extract_strided_slice %17 {offsets = [5, 0], sizes = [1, 128], strides = [1, 1]} : vector<9x128xi32> to vector<1x128xi32>
    %253 = vector.broadcast %252 : vector<1x128xi32> to vector<128x128xi32>
    %254 = arith.cmpi eq, %20, %253 : vector<128x128xi32>
    %255 = arith.extui %254 : vector<128x128xi1> to vector<128x128xi32>
    %256 = arith.sitofp %255 : vector<128x128xi32> to vector<128x128xf32>
    %257 = vector.extract_strided_slice %202 {offsets = [5, 0], sizes = [1, 128], strides = [1, 1]} : vector<9x128xf32> to vector<1x128xf32>
    %258 = vector.broadcast %257 : vector<1x128xf32> to vector<128x128xf32>
    %259 = arith.mulf %256, %258 : vector<128x128xf32>
    %260 = arith.addf %251, %259 : vector<128x128xf32>
    %261 = vector.extract_strided_slice %17 {offsets = [6, 0], sizes = [1, 128], strides = [1, 1]} : vector<9x128xi32> to vector<1x128xi32>
    %262 = vector.broadcast %261 : vector<1x128xi32> to vector<128x128xi32>
    %263 = arith.cmpi eq, %20, %262 : vector<128x128xi32>
    %264 = arith.extui %263 : vector<128x128xi1> to vector<128x128xi32>
    %265 = arith.sitofp %264 : vector<128x128xi32> to vector<128x128xf32>
    %266 = vector.extract_strided_slice %202 {offsets = [6, 0], sizes = [1, 128], strides = [1, 1]} : vector<9x128xf32> to vector<1x128xf32>
    %267 = vector.broadcast %266 : vector<1x128xf32> to vector<128x128xf32>
    %268 = arith.mulf %265, %267 : vector<128x128xf32>
    %269 = arith.addf %260, %268 : vector<128x128xf32>
    %270 = vector.extract_strided_slice %17 {offsets = [7, 0], sizes = [1, 128], strides = [1, 1]} : vector<9x128xi32> to vector<1x128xi32>
    %271 = vector.broadcast %270 : vector<1x128xi32> to vector<128x128xi32>
    %272 = arith.cmpi eq, %20, %271 : vector<128x128xi32>
    %273 = arith.extui %272 : vector<128x128xi1> to vector<128x128xi32>
    %274 = arith.sitofp %273 : vector<128x128xi32> to vector<128x128xf32>
    %275 = vector.extract_strided_slice %202 {offsets = [7, 0], sizes = [1, 128], strides = [1, 1]} : vector<9x128xf32> to vector<1x128xf32>
    %276 = vector.broadcast %275 : vector<1x128xf32> to vector<128x128xf32>
    %277 = arith.mulf %274, %276 : vector<128x128xf32>
    %278 = arith.addf %269, %277 : vector<128x128xf32>
    %279 = vector.extract_strided_slice %17 {offsets = [8, 0], sizes = [1, 128], strides = [1, 1]} : vector<9x128xi32> to vector<1x128xi32>
    %280 = vector.broadcast %279 : vector<1x128xi32> to vector<128x128xi32>
    %281 = arith.cmpi eq, %20, %280 : vector<128x128xi32>
    %282 = arith.extui %281 : vector<128x128xi1> to vector<128x128xi32>
    %283 = arith.sitofp %282 : vector<128x128xi32> to vector<128x128xf32>
    %284 = vector.extract_strided_slice %202 {offsets = [8, 0], sizes = [1, 128], strides = [1, 1]} : vector<9x128xf32> to vector<1x128xf32>
    %285 = vector.broadcast %284 : vector<1x128xf32> to vector<128x128xf32>
    %286 = arith.mulf %283, %285 : vector<128x128xf32>
    %287 = arith.addf %278, %286 : vector<128x128xf32>
    %cst_40 = arith.constant dense<0.000000e+00> : vector<8x128xf32>
    %288 = tpu.matmul %5, %287, %cst_40 {dimension_numbers = #tpu.dot_dimension_numbers<[0], [0], [1], [1], [0, 1, 1, 1], [], []>} : vector<128x8xf32>, vector<128x128xf32>, vector<8x128xf32> -> vector<8x128xf32>
    %289 = vector.broadcast %205 : vector<1x128xf32> to vector<8x128xf32>
    %290 = arith.mulf %288, %289 : vector<8x128xf32>
    %c0_41 = arith.constant 0 : index
    %c0_42 = arith.constant 0 : index
    %291 = vector.load %arg7[%c0_41, %c0_42] : memref<8x1xf32, #tpu.memory_space<vmem>>, vector<8x1xf32>
    %292 = vector.broadcast %291 : vector<8x1xf32> to vector<8x128xf32>
    %293 = arith.addf %290, %292 : vector<8x128xf32>
    %c0_43 = arith.constant 0 : index
    %c0_44 = arith.constant 0 : index
    %c0_45 = arith.constant 0 : index
    %294 = vector.load %arg8[%c0_43, %c0_44, %c0_45] : memref<1x8x128xf32, #tpu.memory_space<vmem>>, vector<1x8x128xf32>
    %295 = vector.shape_cast %294 : vector<1x8x128xf32> to vector<8x128xf32>
    %296 = vector.shape_cast %293 : vector<8x128xf32> to vector<1x8x128xf32>
    tpu.vector_store %arg8[%c0_43, %c0_44, %c0_45], %296 {strides = array<i32>} : memref<1x8x128xf32, #tpu.memory_space<vmem>>, vector<1x8x128xf32>,
    return
  }
  func.func @transform_0(%arg0: i32) -> (i32, i32, i32) {
    %c0_i32 = arith.constant 0 : i32
    %c0_i32_0 = arith.constant 0 : i32
    %c0_i32_1 = arith.constant 0 : i32
    return %arg0, %c0_i32, %c0_i32_0 : i32, i32, i32
  }
  func.func @transform_1(%arg0: i32) -> (i32, i32) {
    %c0_i32 = arith.constant 0 : i32
    %c0_i32_0 = arith.constant 0 : i32
    %c0_i32_1 = arith.constant 0 : i32
    return %c0_i32, %c0_i32_0 : i32, i32
  }
  func.func @transform_2(%arg0: i32) -> (i32, i32) {
    %c0_i32 = arith.constant 0 : i32
    %c0_i32_0 = arith.constant 0 : i32
    %c0_i32_1 = arith.constant 0 : i32
    return %c0_i32, %c0_i32_0 : i32, i32
  }
  func.func @transform_3(%arg0: i32) -> (i32, i32) {
    %c0_i32 = arith.constant 0 : i32
    %c0_i32_0 = arith.constant 0 : i32
    %c0_i32_1 = arith.constant 0 : i32
    return %c0_i32, %c0_i32_0 : i32, i32
  }
  func.func @transform_4(%arg0: i32) -> (i32, i32, i32) {
    %c0_i32 = arith.constant 0 : i32
    %c0_i32_0 = arith.constant 0 : i32
    %c0_i32_1 = arith.constant 0 : i32
    return %arg0, %c0_i32, %c0_i32_0 : i32, i32, i32
  }
  func.func @transform_5(%arg0: i32) -> (i32, i32, i32) {
    %c0_i32 = arith.constant 0 : i32
    %c0_i32_0 = arith.constant 0 : i32
    %c0_i32_1 = arith.constant 0 : i32
    return %arg0, %c0_i32, %c0_i32_0 : i32, i32, i32
  }
  func.func @transform_6(%arg0: i32) -> (i32, i32) {
    %c0_i32 = arith.constant 0 : i32
    %c0_i32_0 = arith.constant 0 : i32
    %c0_i32_1 = arith.constant 0 : i32
    return %c0_i32, %c0_i32_0 : i32, i32
  }
  func.func @transform_7(%arg0: i32) -> (i32, i32, i32) {
    %c0_i32 = arith.constant 0 : i32
    %c0_i32_0 = arith.constant 0 : i32
    %c0_i32_1 = arith.constant 0 : i32
    return %arg0, %c0_i32, %c0_i32_0 : i32, i32, i32
  }
}

</mosaic_0001>

<llo_original>
// kernel: tpu_custom_call.1
$region0: #{tpu_custom_call.1}
  #allocation0 [shape = 'u32[]', space=smem, size = 0x4, offset = 0x4, fixed_abs, tag = 'smem constant byte address 0x4 - core index']
  #allocation1 [shape = 'u32[144,128]{1,0:T(1,128)}', space=vmem, size = 0x12000, scoped, tag = 'internal scratch']
  %s0 = inlined_call_operand.vmem [shape: f32[2,128,4], index: 0, kind: input, shape index: {}]
  %s1 = inlined_call_operand.vmem [shape: f32[4,8], index: 1, kind: input, shape index: {}]
  %s2 = inlined_call_operand.vmem [shape: f32[1,8], index: 2, kind: input, shape index: {}]
  %s3 = inlined_call_operand.vmem [shape: f32[1,8], index: 3, kind: input, shape index: {}]
  %s4 = inlined_call_operand.vmem [shape: s32[2,9,128], index: 4, kind: input, shape index: {}]
  %s5 = inlined_call_operand.vmem [shape: s32[2,9,128], index: 5, kind: input, shape index: {}]
  %s6 = inlined_call_operand.vmem [shape: f32[8,1], index: 6, kind: input, shape index: {}]
  %s7 = inlined_call_operand.hbm [shape: f32[2,8,128], index: 7, kind: output, shape index: {}]
  %s8 = sld [smem:[#allocation0]]
  $region61: #{tpu_custom_call.1} parent=0
    _
  %s10 = ssub.s32 1, %s8
  %s11 = scalar_select 0, %s10, %s8
  $region1: #{tpu_custom_call.1} parent=0
    #allocation2 [shape = 'u8[8192]{0}', space=vmem, size = 0x2000, scoped, tag = 'output window, operand 0']
    #allocation3 [shape = 's32[2]{0}', space=sflag, size = 0x8, scoped, tag = 'scoped memory for tpu_custom_call.1']
    %12 = vsyncpa [#allocation3], 0
    %s13 = scalar_lea.sflag [#allocation3], 1
    %14 = vsyncpa %s13, 0
    loop: start=0, step=1, limit=4
    $region2: #{tpu_custom_call.1} parent=1 // loop_pre_header
      _
    $region3: #{tpu_custom_call.1} parent=1 // loop_header
      %s16 = sphi 0, %s20
      %p17 = scmp.ge.s32.totalorder %s16, 4
      %s26 = sphi 0, %s28
      %s29 = sphi 0, %s26
      %s30 = sphi 0, %s29
      %s46 = sphi 0, %s30
      %s50 = sphi 0, %s50
      %s52 = sphi 0, %s50
      %s53 = sphi 0, %s52
      %s67 = sphi 0, %s53
      %s71 = sphi 0, %s71
      %s73 = sphi 0, %s71
      %s74 = sphi 0, %s73
      %s88 = sphi 0, %s74
      %s92 = sphi 0, %s92
      %s94 = sphi 0, %s92
      %s95 = sphi 0, %s94
      %s109 = sphi 0, %s95
      %s115 = sphi 0, %s117
      %s118 = sphi 0, %s115
      %s119 = sphi 0, %s118
      %s135 = sphi 0, %s119
      %s141 = sphi 0, %s143
      %s144 = sphi 0, %s141
      %s145 = sphi 0, %s144
      %s161 = sphi 0, %s145
      %s165 = sphi 0, %s165
      %s167 = sphi 0, %s165
      %s168 = sphi 0, %s167
      %s182 = sphi 0, %s168
      %s188 = sphi 0, %s190
      %s191 = sphi 0, %s188
      %s192 = sphi 0, %s191
      %s208 = sphi 0, %s192
    $region4: #{tpu_custom_call.1} parent=1 // loop_header_branch
      %19 = sbr.rel (%p17) target = $region8
    $region5: #{tpu_custom_call.1} parent=1 // loop_body
      %s21 = ssub.s32 %s16, 1
      %s22 = ssub.s32 %s16, 2
      %s23 = sadd.s32 %s16, 1
      %s24 = ssub.s32 %s16, %s23
      %p25 = scmp.eq.s32.totalorder %s24, 0
      %s27 = sadd.s32 %s26, 1
      %s28 = scalar_select %p25, %s26, %s27
      %p31 = pneg %p25
      %p32 = scmp.eq.s32.totalorder %s16, 1
      %p33 = por %p31, %p32
      %p34 = scmp.ne.s32.totalorder %s26, %s29
      %p35 = scmp.eq.s32.totalorder %s16, 0
      %p36 = por %p34, %p35
      %p37 = scmp.ne.s32.totalorder %s26, %s29
      %p38 = scmp.eq.s32.totalorder %s21, 1
      %p39 = por %p37, %p38
      %p40 = scmp.ne.s32.totalorder %s29, %s30
      %p41 = scmp.eq.s32.totalorder %s21, 0
      %p42 = por %p40, %p41
      %p43 = scmp.ne.s32.totalorder %s29, %s30
      %p44 = scmp.eq.s32.totalorder %s22, 1
      %p45 = por %p43, %p44
      %p47 = scmp.ne.s32.totalorder %s30, %s46
      %p48 = scmp.eq.s32.totalorder %s22, 0
      %p49 = por %p47, %p48
      %s51 = sadd.s32 %s50, 1
      %p54 = scmp.eq.s32.totalorder %s16, 1
      %p55 = scmp.ne.s32.totalorder %s50, %s52
      %p56 = scmp.eq.s32.totalorder %s16, 0
      %p57 = por %p55, %p56
      %p58 = scmp.ne.s32.totalorder %s50, %s52
      %p59 = scmp.eq.s32.totalorder %s21, 1
      %p60 = por %p58, %p59
      %p61 = scmp.ne.s32.totalorder %s52, %s53
      %p62 = scmp.eq.s32.totalorder %s21, 0
      %p63 = por %p61, %p62
      %p64 = scmp.ne.s32.totalorder %s52, %s53
      %p65 = scmp.eq.s32.totalorder %s22, 1
      %p66 = por %p64, %p65
      %p68 = scmp.ne.s32.totalorder %s53, %s67
      %p69 = scmp.eq.s32.totalorder %s22, 0
      %p70 = por %p68, %p69
      %s72 = sadd.s32 %s71, 1
      %p75 = scmp.eq.s32.totalorder %s16, 1
      %p76 = scmp.ne.s32.totalorder %s71, %s73
      %p77 = scmp.eq.s32.totalorder %s16, 0
      %p78 = por %p76, %p77
      %p79 = scmp.ne.s32.totalorder %s71, %s73
      %p80 = scmp.eq.s32.totalorder %s21, 1
      %p81 = por %p79, %p80
      %p82 = scmp.ne.s32.totalorder %s73, %s74
      %p83 = scmp.eq.s32.totalorder %s21, 0
      %p84 = por %p82, %p83
      %p85 = scmp.ne.s32.totalorder %s73, %s74
      %p86 = scmp.eq.s32.totalorder %s22, 1
      %p87 = por %p85, %p86
      %p89 = scmp.ne.s32.totalorder %s74, %s88
      %p90 = scmp.eq.s32.totalorder %s22, 0
      %p91 = por %p89, %p90
      %s93 = sadd.s32 %s92, 1
      %p96 = scmp.eq.s32.totalorder %s16, 1
      %p97 = scmp.ne.s32.totalorder %s92, %s94
      %p98 = scmp.eq.s32.totalorder %s16, 0
      %p99 = por %p97, %p98
      %p100 = scmp.ne.s32.totalorder %s92, %s94
      %p101 = scmp.eq.s32.totalorder %s21, 1
      %p102 = por %p100, %p101
      %p103 = scmp.ne.s32.totalorder %s94, %s95
      %p104 = scmp.eq.s32.totalorder %s21, 0
      %p105 = por %p103, %p104
      %p106 = scmp.ne.s32.totalorder %s94, %s95
      %p107 = scmp.eq.s32.totalorder %s22, 1
      %p108 = por %p106, %p107
      %p110 = scmp.ne.s32.totalorder %s95, %s109
      %p111 = scmp.eq.s32.totalorder %s22, 0
      %p112 = por %p110, %p111
      %s113 = ssub.s32 %s16, %s23
      %p114 = scmp.eq.s32.totalorder %s113, 0
      %s116 = sadd.s32 %s115, 1
      %s117 = scalar_select %p114, %s115, %s116
      %p120 = pneg %p114
      %p121 = scmp.eq.s32.totalorder %s16, 1
      %p122 = por %p120, %p121
      %p123 = scmp.ne.s32.totalorder %s115, %s118
      %p124 = scmp.eq.s32.totalorder %s16, 0
      %p125 = por %p123, %p124
      %p126 = scmp.ne.s32.totalorder %s115, %s118
      %p127 = scmp.eq.s32.totalorder %s21, 1
      %p128 = por %p126, %p127
      %p129 = scmp.ne.s32.totalorder %s118, %s119
      %p130 = scmp.eq.s32.totalorder %s21, 0
      %p131 = por %p129, %p130
      %p132 = scmp.ne.s32.totalorder %s118, %s119
      %p133 = scmp.eq.s32.totalorder %s22, 1
      %p134 = por %p132, %p133
      %p136 = scmp.ne.s32.totalorder %s119, %s135
      %p137 = scmp.eq.s32.totalorder %s22, 0
      %p138 = por %p136, %p137
      %s139 = ssub.s32 %s16, %s23
      %p140 = scmp.eq.s32.totalorder %s139, 0
      %s142 = sadd.s32 %s141, 1
      %s143 = scalar_select %p140, %s141, %s142
      %p146 = pneg %p140
      %p147 = scmp.eq.s32.totalorder %s16, 1
      %p148 = por %p146, %p147
      %p149 = scmp.ne.s32.totalorder %s141, %s144
      %p150 = scmp.eq.s32.totalorder %s16, 0
      %p151 = por %p149, %p150
      %p152 = scmp.ne.s32.totalorder %s141, %s144
      %p153 = scmp.eq.s32.totalorder %s21, 1
      %p154 = por %p152, %p153
      %p155 = scmp.ne.s32.totalorder %s144, %s145
      %p156 = scmp.eq.s32.totalorder %s21, 0
      %p157 = por %p155, %p156
      %p158 = scmp.ne.s32.totalorder %s144, %s145
      %p159 = scmp.eq.s32.totalorder %s22, 1
      %p160 = por %p158, %p159
      %p162 = scmp.ne.s32.totalorder %s145, %s161
      %p163 = scmp.eq.s32.totalorder %s22, 0
      %p164 = por %p162, %p163
      %s166 = sadd.s32 %s165, 1
      %p169 = scmp.eq.s32.totalorder %s16, 1
      %p170 = scmp.ne.s32.totalorder %s165, %s167
      %p171 = scmp.eq.s32.totalorder %s16, 0
      %p172 = por %p170, %p171
      %p173 = scmp.ne.s32.totalorder %s165, %s167
      %p174 = scmp.eq.s32.totalorder %s21, 1
      %p175 = por %p173, %p174
      %p176 = scmp.ne.s32.totalorder %s167, %s168
      %p177 = scmp.eq.s32.totalorder %s21, 0
      %p178 = por %p176, %p177
      %p179 = scmp.ne.s32.totalorder %s167, %s168
      %p180 = scmp.eq.s32.totalorder %s22, 1
      %p181 = por %p179, %p180
      %p183 = scmp.ne.s32.totalorder %s168, %s182
      %p184 = scmp.eq.s32.totalorder %s22, 0
      %p185 = por %p183, %p184
      %s186 = ssub.s32 %s16, %s23
      %p187 = scmp.eq.s32.totalorder %s186, 0
      %s189 = sadd.s32 %s188, 1
      %s190 = scalar_select %p187, %s188, %s189
      %p193 = pneg %p187
      %p194 = scmp.eq.s32.totalorder %s16, 1
      %p195 = por %p193, %p194
      %p196 = scmp.ne.s32.totalorder %s188, %s191
      %p197 = scmp.eq.s32.totalorder %s16, 0
      %p198 = por %p196, %p197
      %p199 = scmp.ne.s32.totalorder %s188, %s191
      %p200 = scmp.eq.s32.totalorder %s21, 1
      %p201 = por %p199, %p200
      %p202 = scmp.ne.s32.totalorder %s191, %s192
      %p203 = scmp.eq.s32.totalorder %s21, 0
      %p204 = por %p202, %p203
      %p205 = scmp.ne.s32.totalorder %s191, %s192
      %p206 = scmp.eq.s32.totalorder %s22, 1
      %p207 = por %p205, %p206
      %p209 = scmp.ne.s32.totalorder %s192, %s208
      %p210 = scmp.eq.s32.totalorder %s22, 0
      %p211 = por %p209, %p210
      %p212 = scmp.le.s32.totalorder 1, %s16
      %p213 = scmp.lt.s32.totalorder %s16, 3
      %p214 = pnand %p212, %p213
      %p215 = pneg %p214
      // Predicated region
      $region9: #{tpu_custom_call.1} parent=5 // pred_check
        _
      $region10: #{tpu_custom_call.1} parent=5 // pred_check_branch
        %217 = sbr.rel (%p214) target = $region12
      $region11: #{tpu_custom_call.1} parent=5 // pred_region
        %s218 = ssub.s32 %s16, 1
        // Predicated region
        $region13: #{tpu_custom_call.1} parent=11 // pred_check
          %p219 = pneg %p63
        $region14: #{tpu_custom_call.1} parent=11 // pred_check_branch
          %221 = sbr.rel (%p219) target = $region16
        $region15: #{tpu_custom_call.1} parent=11 // pred_region
          _
        $region16: #{tpu_custom_call.1} parent=11 // pred_fallthru
          _
        // Predicated region
        $region17: #{tpu_custom_call.1} parent=11 // pred_check
          %p222 = pneg %p84
        $region18: #{tpu_custom_call.1} parent=11 // pred_check_branch
          %224 = sbr.rel (%p222) target = $region20
        $region19: #{tpu_custom_call.1} parent=11 // pred_region
          _
        $region20: #{tpu_custom_call.1} parent=11 // pred_fallthru
          _
        // Predicated region
        $region21: #{tpu_custom_call.1} parent=11 // pred_check
          %p225 = pneg %p105
        $region22: #{tpu_custom_call.1} parent=11 // pred_check_branch
          %227 = sbr.rel (%p225) target = $region24
        $region23: #{tpu_custom_call.1} parent=11 // pred_region
          _
        $region24: #{tpu_custom_call.1} parent=11 // pred_fallthru
          _
        // Predicated region
        $region25: #{tpu_custom_call.1} parent=11 // pred_check
          %p228 = pneg %p178
        $region26: #{tpu_custom_call.1} parent=11 // pred_check_branch
          %230 = sbr.rel (%p228) target = $region28
        $region27: #{tpu_custom_call.1} parent=11 // pred_region
          _
        $region28: #{tpu_custom_call.1} parent=11 // pred_fallthru
          _
      $region12: #{tpu_custom_call.1} parent=5 // pred_fallthru
        _
      %p231 = scmp.lt.s32.totalorder %s16, 2
      // Predicated region
      $region29: #{tpu_custom_call.1} parent=5 // pred_check
        %p232 = pneg %p231
      $region30: #{tpu_custom_call.1} parent=5 // pred_check_branch
        %234 = sbr.rel (%p232) target = $region32
      $region31: #{tpu_custom_call.1} parent=5 // pred_region
        // Predicated region
        $region33: #{tpu_custom_call.1} parent=31 // pred_check
          %p235 = pneg %p36
        $region34: #{tpu_custom_call.1} parent=31 // pred_check_branch
          %237 = sbr.rel (%p235) target = $region36
        $region35: #{tpu_custom_call.1} parent=31 // pred_region
          %p238 = scmp.lt.s32.totalorder %s16, 1
          %s239 = scalar_select %p238, %s16, 1
          %s240 = smul.addr %s239, 16
          %s241 = smul.addr %s240, 8
          %s242 = scalar_lea.vmem %s0, %s241
        $region36: #{tpu_custom_call.1} parent=31 // pred_fallthru
          _
        // Predicated region
        $region37: #{tpu_custom_call.1} parent=31 // pred_check
          %p243 = pneg %p125
        $region38: #{tpu_custom_call.1} parent=31 // pred_check_branch
          %245 = sbr.rel (%p243) target = $region40
        $region39: #{tpu_custom_call.1} parent=31 // pred_region
          %p246 = scmp.lt.s32.totalorder %s16, 1
          %s247 = scalar_select %p246, %s16, 1
          %s248 = smul.addr %s247, 2
          %s249 = smul.addr %s248, 8
          %s250 = scalar_lea.vmem %s4, %s249
        $region40: #{tpu_custom_call.1} parent=31 // pred_fallthru
          _
        // Predicated region
        $region41: #{tpu_custom_call.1} parent=31 // pred_check
          %p251 = pneg %p151
        $region42: #{tpu_custom_call.1} parent=31 // pred_check_branch
          %253 = sbr.rel (%p251) target = $region44
        $region43: #{tpu_custom_call.1} parent=31 // pred_region
          %p254 = scmp.lt.s32.totalorder %s16, 1
          %s255 = scalar_select %p254, %s16, 1
          %s256 = smul.addr %s255, 2
          %s257 = smul.addr %s256, 8
          %s258 = scalar_lea.vmem %s5, %s257
        $region44: #{tpu_custom_call.1} parent=31 // pred_fallthru
          _
      $region32: #{tpu_custom_call.1} parent=5 // pred_fallthru
        _
      %p259 = scmp.le.s32.totalorder 1, %s16
      %p260 = scmp.lt.s32.totalorder %s16, 3
      %p261 = pnand %p259, %p260
      %p262 = pneg %p261
      // Predicated region
      $region45: #{tpu_custom_call.1} parent=5 // pred_check
        _
      $region46: #{tpu_custom_call.1} parent=5 // pred_check_branch
        %264 = sbr.rel (%p261) target = $region48
      $region47: #{tpu_custom_call.1} parent=5 // pred_region
        %s265 = ssub.s32 %s16, 1
        %p266 = scmp.lt.s32.totalorder %s21, 1
        %s267 = scalar_select %p266, %s21, 1
        %s268 = smul.addr %s267, 16
        %s269 = smul.addr %s268, 8
        %s270 = scalar_lea.vmem %s0, %s269
        %p271 = pneg %p42
        %p272 = pneg %p39
        %p273 = pneg %p63
        %p274 = pneg %p60
        %p275 = pneg %p84
        %p276 = pneg %p81
        %p277 = pneg %p105
        %p278 = pneg %p102
        %p279 = scmp.lt.s32.totalorder %s21, 1
        %s280 = scalar_select %p279, %s21, 1
        %s281 = smul.addr %s280, 2
        %s282 = smul.addr %s281, 8
        %s283 = scalar_lea.vmem %s4, %s282
        %p284 = pneg %p131
        %p285 = pneg %p128
        %p286 = scmp.lt.s32.totalorder %s21, 1
        %s287 = scalar_select %p286, %s21, 1
        %s288 = smul.addr %s287, 2
        %s289 = smul.addr %s288, 8
        %s290 = scalar_lea.vmem %s5, %s289
        %p291 = pneg %p157
        %p292 = pneg %p154
        %p293 = pneg %p178
        %p294 = pneg %p175
        %p295 = pneg %p204
        %p296 = pneg %p201
        %s297 = sand.u32 %s191, 1
        %s298 = scalar_lea.sflag [#allocation3], %s297
        %s299 = sand.u32 %s191, 1
        %s300 = smul.addr %s299, 8
        %s301 = scalar_lea.vmem [#allocation2], %s300
        %p302 = scmp.lt.s32.totalorder %s21, 1
        %s303 = scalar_select %p302, %s21, 1
        %s304 = smul.addr %s303, 16
        %s305 = smul.addr %s304, 8
        %s306 = scalar_lea.vmem %s0, %s305
        %p307 = scmp.lt.s32.totalorder %s21, 1
        %s308 = scalar_select %p307, %s21, 1
        %s309 = smul.addr %s308, 2
        %s310 = smul.addr %s309, 8
        %s311 = scalar_lea.vmem %s4, %s310
        %p312 = scmp.lt.s32.totalorder %s21, 1
        %s313 = scalar_select %p312, %s21, 1
        %s314 = smul.addr %s313, 2
        %s315 = smul.addr %s314, 8
        %s316 = scalar_lea.vmem %s5, %s315
        %v317 = vld [vmem:[%s306] sm:$0xff]
        %v318 = vld [vmem:[%s306 + $0x8] sm:$0xff]
        %v319 = vld [vmem:[%s306 + $0x10] sm:$0xff]
        %v320 = vld [vmem:[%s306 + $0x18] sm:$0xff]
        %v321 = vld [vmem:[%s306 + $0x20] sm:$0xff]
        %v322 = vld [vmem:[%s306 + $0x28] sm:$0xff]
        %v323 = vld [vmem:[%s306 + $0x30] sm:$0xff]
        %v324 = vld [vmem:[%s306 + $0x38] sm:$0xff]
        %v325 = vld [vmem:[%s306 + $0x40] sm:$0xff]
        %v326 = vld [vmem:[%s306 + $0x48] sm:$0xff]
        %v327 = vld [vmem:[%s306 + $0x50] sm:$0xff]
        %v328 = vld [vmem:[%s306 + $0x58] sm:$0xff]
        %v329 = vld [vmem:[%s306 + $0x60] sm:$0xff]
        %v330 = vld [vmem:[%s306 + $0x68] sm:$0xff]
        %v331 = vld [vmem:[%s306 + $0x70] sm:$0xff]
        %v332 = vld [vmem:[%s306 + $0x78] sm:$0xff]
        %v333 = vld [vmem:[%s1] sm:$0xf]
        %vm334 = vcmask 31744
        %v336 = vsel %vm334, %v317, 0
        %v339 = vsel %vm334, %v318, 0
        %v342 = vsel %vm334, %v319, 0
        %v345 = vsel %vm334, %v320, 0
        %v348 = vsel %vm334, %v321, 0
        %v351 = vsel %vm334, %v322, 0
        %v354 = vsel %vm334, %v323, 0
        %v357 = vsel %vm334, %v324, 0
        %v360 = vsel %vm334, %v325, 0
        %v363 = vsel %vm334, %v326, 0
        %v366 = vsel %vm334, %v327, 0
        %v369 = vsel %vm334, %v328, 0
        %v372 = vsel %vm334, %v329, 0
        %v375 = vsel %vm334, %v330, 0
        %v378 = vsel %vm334, %v331, 0
        %v381 = vsel %vm334, %v332, 0
        %vm383 = vcmask 1043456
        %v385 = vsel %vm383, %v333, 0
        %387 = vmatprep.subr.mxu0 0.0
        %388 = vmatpush1.msra.mxu0 0.0
        %389 = vmatprep.subr.mxu0 0.0
        %390 = vmatpush1.msra.mxu0 0.0
        %391 = vmatprep.subr.mxu0 0.0
        %392 = vmatpush1.msra.mxu0 0.0
        %393 = vmatprep.subr.mxu0 0.0
        %394 = vmatpush1.msra.mxu0 0.0
        %395 = vmatprep.subr.mxu0 0.0
        %396 = vmatpush1.msra.mxu0 0.0
        %397 = vmatprep.subr.mxu0 0.0
        %398 = vmatpush1.msra.mxu0 0.0
        %399 = vmatprep.subr.mxu0 0.0
        %400 = vmatpush1.msra.mxu0 0.0
        %401 = vmatprep.subr.mxu0 0.0
        %402 = vmatpush1.msra.mxu0 0.0
        %403 = vmatprep.subr.mxu0 0.0
        %404 = vmatpush1.msra.mxu0 0.0
        %405 = vmatprep.subr.mxu0 0.0
        %406 = vmatpush1.msra.mxu0 0.0
        %407 = vmatprep.subr.mxu0 0.0
        %408 = vmatpush1.msra.mxu0 0.0
        %409 = vmatprep.subr.mxu0 0.0
        %410 = vmatpush1.msra.mxu0 0.0
        %411 = vmatprep.subr.mxu0 0.0
        %412 = vmatpush1.msra.mxu0 0.0
        %413 = vmatprep.subr.mxu0 0.0
        %414 = vmatpush1.msra.mxu0 0.0
        %415 = vmatprep.subr.mxu0 0.0
        %416 = vmatpush1.msra.mxu0 0.0
        %417 = vmatprep.subr.mxu0 0.0
        %418 = vmatpush1.msra.mxu0 %v385
        %419 = vmatprep.subr.mxu0 0.0
        %420 = vmatpush2.msra.mxu0 0.0
        %421 = vmatprep.subr.mxu0 0.0
        %422 = vmatpush2.msra.mxu0 0.0
        %423 = vmatprep.subr.mxu0 0.0
        %424 = vmatpush2.msra.mxu0 0.0
        %425 = vmatprep.subr.mxu0 0.0
        %426 = vmatpush2.msra.mxu0 0.0
        %427 = vmatprep.subr.mxu0 0.0
        %428 = vmatpush2.msra.mxu0 0.0
        %429 = vmatprep.subr.mxu0 0.0
        %430 = vmatpush2.msra.mxu0 0.0
        %431 = vmatprep.subr.mxu0 0.0
        %432 = vmatpush2.msra.mxu0 0.0
        %433 = vmatprep.subr.mxu0 0.0
        %434 = vmatpush2.msra.mxu0 0.0
        %435 = vmatprep.subr.mxu0 0.0
        %436 = vmatpush2.msra.mxu0 0.0
        %437 = vmatprep.subr.mxu0 0.0
        %438 = vmatpush2.msra.mxu0 0.0
        %439 = vmatprep.subr.mxu0 0.0
        %440 = vmatpush2.msra.mxu0 0.0
        %441 = vmatprep.subr.mxu0 0.0
        %442 = vmatpush2.msra.mxu0 0.0
        %443 = vmatprep.subr.mxu0 0.0
        %444 = vmatpush2.msra.mxu0 0.0
        %445 = vmatprep.subr.mxu0 0.0
        %446 = vmatpush2.msra.mxu0 0.0
        %447 = vmatprep.subr.mxu0 0.0
        %448 = vmatpush2.msra.mxu0 0.0
        %449 = vmatprep.subr.mxu0 0.0
        %450 = vmatpush2.msra.mxu0 0.0
        %451 = vmatprep.mubr.f32.mxu0 0.0
        %452 = vmatmul.mubr.f32.gmra.mxu0 %v336
        %v453 = vpop.f32.mrf.mxu0
        %v454 = vadd.f32 0.0, %v453
        %v455 = vpop.f32.mrf.mxu0
        %456 = vmatprep.mubr.f32.mxu0 0.0
        %457 = vmatmul.mubr.f32.gmra.mxu0 %v339
        %v458 = vpop.f32.mrf.mxu0
        %v459 = vadd.f32 0.0, %v458
        %v460 = vpop.f32.mrf.mxu0
        %461 = vmatprep.mubr.f32.mxu0 0.0
        %462 = vmatmul.mubr.f32.gmra.mxu0 %v342
        %v463 = vpop.f32.mrf.mxu0
        %v464 = vadd.f32 0.0, %v463
        %v465 = vpop.f32.mrf.mxu0
        %466 = vmatprep.mubr.f32.mxu0 0.0
        %467 = vmatmul.mubr.f32.gmra.mxu0 %v345
        %v468 = vpop.f32.mrf.mxu0
        %v469 = vadd.f32 0.0, %v468
        %v470 = vpop.f32.mrf.mxu0
        %471 = vmatprep.mubr.f32.mxu0 0.0
        %472 = vmatmul.mubr.f32.gmra.mxu0 %v348
        %v473 = vpop.f32.mrf.mxu0
        %v474 = vadd.f32 0.0, %v473
        %v475 = vpop.f32.mrf.mxu0
        %476 = vmatprep.mubr.f32.mxu0 0.0
        %477 = vmatmul.mubr.f32.gmra.mxu0 %v351
        %v478 = vpop.f32.mrf.mxu0
        %v479 = vadd.f32 0.0, %v478
        %v480 = vpop.f32.mrf.mxu0
        %481 = vmatprep.mubr.f32.mxu0 0.0
        %482 = vmatmul.mubr.f32.gmra.mxu0 %v354
        %v483 = vpop.f32.mrf.mxu0
        %v484 = vadd.f32 0.0, %v483
        %v485 = vpop.f32.mrf.mxu0
        %486 = vmatprep.mubr.f32.mxu0 0.0
        %487 = vmatmul.mubr.f32.gmra.mxu0 %v357
        %v488 = vpop.f32.mrf.mxu0
        %v489 = vadd.f32 0.0, %v488
        %v490 = vpop.f32.mrf.mxu0
        %491 = vmatprep.mubr.f32.mxu0 0.0
        %492 = vmatmul.mubr.f32.gmra.mxu0 %v360
        %v493 = vpop.f32.mrf.mxu0
        %v494 = vadd.f32 0.0, %v493
        %v495 = vpop.f32.mrf.mxu0
        %496 = vmatprep.mubr.f32.mxu0 0.0
        %497 = vmatmul.mubr.f32.gmra.mxu0 %v363
        %v498 = vpop.f32.mrf.mxu0
        %v499 = vadd.f32 0.0, %v498
        %v500 = vpop.f32.mrf.mxu0
        %501 = vmatprep.mubr.f32.mxu0 0.0
        %502 = vmatmul.mubr.f32.gmra.mxu0 %v366
        %v503 = vpop.f32.mrf.mxu0
        %v504 = vadd.f32 0.0, %v503
        %v505 = vpop.f32.mrf.mxu0
        %506 = vmatprep.mubr.f32.mxu0 0.0
        %507 = vmatmul.mubr.f32.gmra.mxu0 %v369
        %v508 = vpop.f32.mrf.mxu0
        %v509 = vadd.f32 0.0, %v508
        %v510 = vpop.f32.mrf.mxu0
        %511 = vmatprep.mubr.f32.mxu0 0.0
        %512 = vmatmul.mubr.f32.gmra.mxu0 %v372
        %v513 = vpop.f32.mrf.mxu0
        %v514 = vadd.f32 0.0, %v513
        %v515 = vpop.f32.mrf.mxu0
        %516 = vmatprep.mubr.f32.mxu0 0.0
        %517 = vmatmul.mubr.f32.gmra.mxu0 %v375
        %v518 = vpop.f32.mrf.mxu0
        %v519 = vadd.f32 0.0, %v518
        %v520 = vpop.f32.mrf.mxu0
        %521 = vmatprep.mubr.f32.mxu0 0.0
        %522 = vmatmul.mubr.f32.gmra.mxu0 %v378
        %v523 = vpop.f32.mrf.mxu0
        %v524 = vadd.f32 0.0, %v523
        %v525 = vpop.f32.mrf.mxu0
        %526 = vmatprep.mubr.f32.mxu0 0.0
        %527 = vmatmul.mubr.f32.gmra.mxu0 %v381
        %v528 = vpop.f32.mrf.mxu0
        %v529 = vadd.f32 0.0, %v528
        %v530 = vpop.f32.mrf.mxu0
        %531 = vdwg.mxu0
        %v532 = vmax.f32 %v454, 0.0
        %v533 = vmax.f32 %v459, 0.0
        %v534 = vmax.f32 %v464, 0.0
        %v535 = vmax.f32 %v469, 0.0
        %v536 = vmax.f32 %v474, 0.0
        %v537 = vmax.f32 %v479, 0.0
        %v538 = vmax.f32 %v484, 0.0
        %v539 = vmax.f32 %v489, 0.0
        %v540 = vmax.f32 %v494, 0.0
        %v541 = vmax.f32 %v499, 0.0
        %v542 = vmax.f32 %v504, 0.0
        %v543 = vmax.f32 %v509, 0.0
        %v544 = vmax.f32 %v514, 0.0
        %v545 = vmax.f32 %v519, 0.0
        %v546 = vmax.f32 %v524, 0.0
        %v547 = vmax.f32 %v529, 0.0
        %v548 = vld [vmem:[%s2] sm:$0x1]
        %v550 = vlaneseq
        %v551 = vshrl.u32 %v550, 7
        %v552 = vsub.s32 0, %v551
        %v553 = vrot.slane %v548, %v552
        %v555 = vmul.f32 %v532, %v553
        %v556 = vmul.f32 %v533, %v553
        %v557 = vmul.f32 %v534, %v553
        %v558 = vmul.f32 %v535, %v553
        %v559 = vmul.f32 %v536, %v553
        %v560 = vmul.f32 %v537, %v553
        %v561 = vmul.f32 %v538, %v553
        %v562 = vmul.f32 %v539, %v553
        %v563 = vmul.f32 %v540, %v553
        %v564 = vmul.f32 %v541, %v553
        %v565 = vmul.f32 %v542, %v553
        %v566 = vmul.f32 %v543, %v553
        %v567 = vmul.f32 %v544, %v553
        %v568 = vmul.f32 %v545, %v553
        %v569 = vmul.f32 %v546, %v553
        %v570 = vmul.f32 %v547, %v553
        %vm571 = vcmask 64512
        %v572 = vsel %vm571, %v555, 0.0
        %573 = vadd.xlane.f32.xlu0 %v572
        %v574 = vpop.xlane.xlu0 %573
        %v575 = vsel %vm571, %v556, 0.0
        %576 = vadd.xlane.f32.xlu0 %v575
        %v577 = vpop.xlane.xlu0 %576
        %v578 = vsel %vm571, %v557, 0.0
        %579 = vadd.xlane.f32.xlu0 %v578
        %v580 = vpop.xlane.xlu0 %579
        %v581 = vsel %vm571, %v558, 0.0
        %582 = vadd.xlane.f32.xlu0 %v581
        %v583 = vpop.xlane.xlu0 %582
        %v584 = vsel %vm571, %v559, 0.0
        %585 = vadd.xlane.f32.xlu0 %v584
        %v586 = vpop.xlane.xlu0 %585
        %v587 = vsel %vm571, %v560, 0.0
        %588 = vadd.xlane.f32.xlu0 %v587
        %v589 = vpop.xlane.xlu0 %588
        %v590 = vsel %vm571, %v561, 0.0
        %591 = vadd.xlane.f32.xlu0 %v590
        %v592 = vpop.xlane.xlu0 %591
        %v593 = vsel %vm571, %v562, 0.0
        %594 = vadd.xlane.f32.xlu0 %v593
        %v595 = vpop.xlane.xlu0 %594
        %v596 = vsel %vm571, %v563, 0.0
        %597 = vadd.xlane.f32.xlu0 %v596
        %v598 = vpop.xlane.xlu0 %597
        %v599 = vsel %vm571, %v564, 0.0
        %600 = vadd.xlane.f32.xlu0 %v599
        %v601 = vpop.xlane.xlu0 %600
        %v602 = vsel %vm571, %v565, 0.0
        %603 = vadd.xlane.f32.xlu0 %v602
        %v604 = vpop.xlane.xlu0 %603
        %v605 = vsel %vm571, %v566, 0.0
        %606 = vadd.xlane.f32.xlu0 %v605
        %v607 = vpop.xlane.xlu0 %606
        %v608 = vsel %vm571, %v567, 0.0
        %609 = vadd.xlane.f32.xlu0 %v608
        %v610 = vpop.xlane.xlu0 %609
        %v611 = vsel %vm571, %v568, 0.0
        %612 = vadd.xlane.f32.xlu0 %v611
        %v613 = vpop.xlane.xlu0 %612
        %v614 = vsel %vm571, %v569, 0.0
        %615 = vadd.xlane.f32.xlu0 %v614
        %v616 = vpop.xlane.xlu0 %615
        %v617 = vsel %vm571, %v570, 0.0
        %618 = vadd.xlane.f32.xlu0 %v617
        %v619 = vpop.xlane.xlu0 %618
        %v620 = vld [vmem:[%s3] sm:$0x1]
        %v622 = vlaneseq
        %v623 = vshrl.u32 %v622, 7
        %v624 = vsub.s32 0, %v623
        %v625 = vrot.slane %v620, %v624
        %v627 = vmul.f32 %v532, %v625
        %v628 = vmul.f32 %v533, %v625
        %v629 = vmul.f32 %v534, %v625
        %v630 = vmul.f32 %v535, %v625
        %v631 = vmul.f32 %v536, %v625
        %v632 = vmul.f32 %v537, %v625
        %v633 = vmul.f32 %v538, %v625
        %v634 = vmul.f32 %v539, %v625
        %v635 = vmul.f32 %v540, %v625
        %v636 = vmul.f32 %v541, %v625
        %v637 = vmul.f32 %v542, %v625
        %v638 = vmul.f32 %v543, %v625
        %v639 = vmul.f32 %v544, %v625
        %v640 = vmul.f32 %v545, %v625
        %v641 = vmul.f32 %v546, %v625
        %v642 = vmul.f32 %v547, %v625
        %v643 = vsel %vm571, %v627, 0.0
        %644 = vadd.xlane.f32.xlu0 %v643
        %v645 = vpop.xlane.xlu0 %644
        %v646 = vsel %vm571, %v628, 0.0
        %647 = vadd.xlane.f32.xlu0 %v646
        %v648 = vpop.xlane.xlu0 %647
        %v649 = vsel %vm571, %v629, 0.0
        %650 = vadd.xlane.f32.xlu0 %v649
        %v651 = vpop.xlane.xlu0 %650
        %v652 = vsel %vm571, %v630, 0.0
        %653 = vadd.xlane.f32.xlu0 %v652
        %v654 = vpop.xlane.xlu0 %653
        %v655 = vsel %vm571, %v631, 0.0
        %656 = vadd.xlane.f32.xlu0 %v655
        %v657 = vpop.xlane.xlu0 %656
        %v658 = vsel %vm571, %v632, 0.0
        %659 = vadd.xlane.f32.xlu0 %v658
        %v660 = vpop.xlane.xlu0 %659
        %v661 = vsel %vm571, %v633, 0.0
        %662 = vadd.xlane.f32.xlu0 %v661
        %v663 = vpop.xlane.xlu0 %662
        %v664 = vsel %vm571, %v634, 0.0
        %665 = vadd.xlane.f32.xlu0 %v664
        %v666 = vpop.xlane.xlu0 %665
        %v667 = vsel %vm571, %v635, 0.0
        %668 = vadd.xlane.f32.xlu0 %v667
        %v669 = vpop.xlane.xlu0 %668
        %v670 = vsel %vm571, %v636, 0.0
        %671 = vadd.xlane.f32.xlu0 %v670
        %v672 = vpop.xlane.xlu0 %671
        %v673 = vsel %vm571, %v637, 0.0
        %674 = vadd.xlane.f32.xlu0 %v673
        %v675 = vpop.xlane.xlu0 %674
        %v676 = vsel %vm571, %v638, 0.0
        %677 = vadd.xlane.f32.xlu0 %v676
        %v678 = vpop.xlane.xlu0 %677
        %v679 = vsel %vm571, %v639, 0.0
        %680 = vadd.xlane.f32.xlu0 %v679
        %v681 = vpop.xlane.xlu0 %680
        %v682 = vsel %vm571, %v640, 0.0
        %683 = vadd.xlane.f32.xlu0 %v682
        %v684 = vpop.xlane.xlu0 %683
        %v685 = vsel %vm571, %v641, 0.0
        %686 = vadd.xlane.f32.xlu0 %v685
        %v687 = vpop.xlane.xlu0 %686
        %v688 = vsel %vm571, %v642, 0.0
        %689 = vadd.xlane.f32.xlu0 %v688
        %v690 = vpop.xlane.xlu0 %689
        %v691 = vld [vmem:[%s311] sm:$0xff]
        %v692 = vld [vmem:[%s311 + $0x8] sm:$0x1]
        %v693 = vld [vmem:[%s316] sm:$0xff]
        %v694 = vld [vmem:[%s316 + $0x8] sm:$0x1]
        %v695 = vlaneseq
        %v696 = vshrl.u32 %v695, 7
        %v697 = vadd.s32 %v696, 8
        %v698 = vadd.s32 %v696, 16
        %v699 = vadd.s32 %v696, 24
        %v700 = vadd.s32 %v696, 32
        %v701 = vadd.s32 %v696, 40
        %v702 = vadd.s32 %v696, 48
        %v703 = vadd.s32 %v696, 56
        %v704 = vadd.s32 %v696, 64
        %v705 = vadd.s32 %v696, 72
        %v706 = vadd.s32 %v696, 80
        %v707 = vadd.s32 %v696, 88
        %v708 = vadd.s32 %v696, 96
        %v709 = vadd.s32 %v696, 104
        %v710 = vadd.s32 %v696, 112
        %v711 = vadd.s32 %v696, 120
        %v712 = vlaneseq
        %v713 = vshrl.u32 %v712, 7
        %v714 = vsub.s32 0, %v713
        %v715 = vrot.slane %v691, %v714
        %vm716 = vcmp.eq.s32.totalorder %v696, %v715
        %vm717 = vcmp.eq.s32.totalorder %v697, %v715
        %vm718 = vcmp.eq.s32.totalorder %v698, %v715
        %vm719 = vcmp.eq.s32.totalorder %v699, %v715
        %vm720 = vcmp.eq.s32.totalorder %v700, %v715
        %vm721 = vcmp.eq.s32.totalorder %v701, %v715
        %vm722 = vcmp.eq.s32.totalorder %v702, %v715
        %vm723 = vcmp.eq.s32.totalorder %v703, %v715
        %vm724 = vcmp.eq.s32.totalorder %v704, %v715
        %vm725 = vcmp.eq.s32.totalorder %v705, %v715
        %vm726 = vcmp.eq.s32.totalorder %v706, %v715
        %vm727 = vcmp.eq.s32.totalorder %v707, %v715
        %vm728 = vcmp.eq.s32.totalorder %v708, %v715
        %vm729 = vcmp.eq.s32.totalorder %v709, %v715
        %vm730 = vcmp.eq.s32.totalorder %v710, %v715
        %vm731 = vcmp.eq.s32.totalorder %v711, %v715
        %v732 = vsel %vm716, 1, 0
        %v733 = vsel %vm717, 1, 0
        %v734 = vsel %vm718, 1, 0
        %v735 = vsel %vm719, 1, 0
        %v736 = vsel %vm720, 1, 0
        %v737 = vsel %vm721, 1, 0
        %v738 = vsel %vm722, 1, 0
        %v739 = vsel %vm723, 1, 0
        %v740 = vsel %vm724, 1, 0
        %v741 = vsel %vm725, 1, 0
        %v742 = vsel %vm726, 1, 0
        %v743 = vsel %vm727, 1, 0
        %v744 = vsel %vm728, 1, 0
        %v745 = vsel %vm729, 1, 0
        %v746 = vsel %vm730, 1, 0
        %v747 = vsel %vm731, 1, 0
        %v748 = vcvt.s32.f32 %v732
        %v749 = vcvt.s32.f32 %v733
        %v750 = vcvt.s32.f32 %v734
        %v751 = vcvt.s32.f32 %v735
        %v752 = vcvt.s32.f32 %v736
        %v753 = vcvt.s32.f32 %v737
        %v754 = vcvt.s32.f32 %v738
        %v755 = vcvt.s32.f32 %v739
        %v756 = vcvt.s32.f32 %v740
        %v757 = vcvt.s32.f32 %v741
        %v758 = vcvt.s32.f32 %v742
        %v759 = vcvt.s32.f32 %v743
        %v760 = vcvt.s32.f32 %v744
        %v761 = vcvt.s32.f32 %v745
        %v762 = vcvt.s32.f32 %v746
        %v763 = vcvt.s32.f32 %v747
        %v764 = vlaneseq
        %v765 = vshrl.u32 %v764, 7
        %v766 = vsub.s32 0, %v765
        %v767 = vrot.slane %v693, %v766
        %vm768 = vcmp.eq.s32.totalorder %v696, %v767
        %vm769 = vcmp.eq.s32.totalorder %v697, %v767
        %vm770 = vcmp.eq.s32.totalorder %v698, %v767
        %vm771 = vcmp.eq.s32.totalorder %v699, %v767
        %vm772 = vcmp.eq.s32.totalorder %v700, %v767
        %vm773 = vcmp.eq.s32.totalorder %v701, %v767
        %vm774 = vcmp.eq.s32.totalorder %v702, %v767
        %vm775 = vcmp.eq.s32.totalorder %v703, %v767
        %vm776 = vcmp.eq.s32.totalorder %v704, %v767
        %vm777 = vcmp.eq.s32.totalorder %v705, %v767
        %vm778 = vcmp.eq.s32.totalorder %v706, %v767
        %vm779 = vcmp.eq.s32.totalorder %v707, %v767
        %vm780 = vcmp.eq.s32.totalorder %v708, %v767
        %vm781 = vcmp.eq.s32.totalorder %v709, %v767
        %vm782 = vcmp.eq.s32.totalorder %v710, %v767
        %vm783 = vcmp.eq.s32.totalorder %v711, %v767
        %v784 = vsel %vm768, 1, 0
        %v785 = vsel %vm769, 1, 0
        %v786 = vsel %vm770, 1, 0
        %v787 = vsel %vm771, 1, 0
        %v788 = vsel %vm772, 1, 0
        %v789 = vsel %vm773, 1, 0
        %v790 = vsel %vm774, 1, 0
        %v791 = vsel %vm775, 1, 0
        %v792 = vsel %vm776, 1, 0
        %v793 = vsel %vm777, 1, 0
        %v794 = vsel %vm778, 1, 0
        %v795 = vsel %vm779, 1, 0
        %v796 = vsel %vm780, 1, 0
        %v797 = vsel %vm781, 1, 0
        %v798 = vsel %vm782, 1, 0
        %v799 = vsel %vm783, 1, 0
        %v800 = vcvt.s32.f32 %v784
        %v801 = vcvt.s32.f32 %v785
        %v802 = vcvt.s32.f32 %v786
        %v803 = vcvt.s32.f32 %v787
        %v804 = vcvt.s32.f32 %v788
        %v805 = vcvt.s32.f32 %v789
        %v806 = vcvt.s32.f32 %v790
        %v807 = vcvt.s32.f32 %v791
        %v808 = vcvt.s32.f32 %v792
        %v809 = vcvt.s32.f32 %v793
        %v810 = vcvt.s32.f32 %v794
        %v811 = vcvt.s32.f32 %v795
        %v812 = vcvt.s32.f32 %v796
        %v813 = vcvt.s32.f32 %v797
        %v814 = vcvt.s32.f32 %v798
        %v815 = vcvt.s32.f32 %v799
        %v816 = vmul.f32 %v748, %v645
        %v817 = vmul.f32 %v749, %v648
        %v818 = vmul.f32 %v750, %v651
        %v819 = vmul.f32 %v751, %v654
        %v820 = vmul.f32 %v752, %v657
        %v821 = vmul.f32 %v753, %v660
        %v822 = vmul.f32 %v754, %v663
        %v823 = vmul.f32 %v755, %v666
        %v824 = vmul.f32 %v756, %v669
        %v825 = vmul.f32 %v757, %v672
        %v826 = vmul.f32 %v758, %v675
        %v827 = vmul.f32 %v759, %v678
        %v828 = vmul.f32 %v760, %v681
        %v829 = vmul.f32 %v761, %v684
        %v830 = vmul.f32 %v762, %v687
        %v831 = vmul.f32 %v763, %v690
        %v832 = vadd.f32 %v816, %v817
        %v833 = vadd.f32 %v832, %v818
        %v834 = vadd.f32 %v833, %v819
        %v835 = vadd.f32 %v834, %v820
        %v836 = vadd.f32 %v835, %v821
        %v837 = vadd.f32 %v836, %v822
        %v838 = vadd.f32 %v837, %v823
        %v839 = vadd.f32 %v838, %v824
        %v840 = vadd.f32 %v839, %v825
        %v841 = vadd.f32 %v840, %v826
        %v842 = vadd.f32 %v841, %v827
        %v843 = vadd.f32 %v842, %v828
        %v844 = vadd.f32 %v843, %v829
        %v845 = vadd.f32 %v844, %v830
        %v846 = vadd.f32 %v845, %v831
        %v847 = vrot.slane %v846, 4
        %v848 = vadd.f32 %v846, %v847
        %v849 = vrot.slane %v848, 2
        %v850 = vadd.f32 %v848, %v849
        %v851 = vrot.slane %v850, 1
        %v852 = vadd.f32 %v850, %v851
        %v853 = vmul.f32 %v800, %v574
        %v854 = vmul.f32 %v801, %v577
        %v855 = vmul.f32 %v802, %v580
        %v856 = vmul.f32 %v803, %v583
        %v857 = vmul.f32 %v804, %v586
        %v858 = vmul.f32 %v805, %v589
        %v859 = vmul.f32 %v806, %v592
        %v860 = vmul.f32 %v807, %v595
        %v861 = vmul.f32 %v808, %v598
        %v862 = vmul.f32 %v809, %v601
        %v863 = vmul.f32 %v810, %v604
        %v864 = vmul.f32 %v811, %v607
        %v865 = vmul.f32 %v812, %v610
        %v866 = vmul.f32 %v813, %v613
        %v867 = vmul.f32 %v814, %v616
        %v868 = vmul.f32 %v815, %v619
        %v869 = vadd.f32 %v853, %v854
        %v870 = vadd.f32 %v869, %v855
        %v871 = vadd.f32 %v870, %v856
        %v872 = vadd.f32 %v871, %v857
        %v873 = vadd.f32 %v872, %v858
        %v874 = vadd.f32 %v873, %v859
        %v875 = vadd.f32 %v874, %v860
        %v876 = vadd.f32 %v875, %v861
        %v877 = vadd.f32 %v876, %v862
        %v878 = vadd.f32 %v877, %v863
        %v879 = vadd.f32 %v878, %v864
        %v880 = vadd.f32 %v879, %v865
        %v881 = vadd.f32 %v880, %v866
        %v882 = vadd.f32 %v881, %v867
        %v883 = vadd.f32 %v882, %v868
        %v884 = vrot.slane %v883, 4
        %v885 = vadd.f32 %v883, %v884
        %v886 = vrot.slane %v885, 2
        %v887 = vadd.f32 %v885, %v886
        %v888 = vrot.slane %v887, 1
        %v889 = vadd.f32 %v887, %v888
        %v890 = vadd.f32 %v889, %v852
        %v891 = vlaneseq
        %v892 = vshrl.u32 %v891, 7
        %v893 = vsub.s32 1, %v892
        %v894 = vrot.slane %v691, %v893
        %vm895 = vcmp.eq.s32.totalorder %v696, %v894
        %vm896 = vcmp.eq.s32.totalorder %v697, %v894
        %vm897 = vcmp.eq.s32.totalorder %v698, %v894
        %vm898 = vcmp.eq.s32.totalorder %v699, %v894
        %vm899 = vcmp.eq.s32.totalorder %v700, %v894
        %vm900 = vcmp.eq.s32.totalorder %v701, %v894
        %vm901 = vcmp.eq.s32.totalorder %v702, %v894
        %vm902 = vcmp.eq.s32.totalorder %v703, %v894
        %vm903 = vcmp.eq.s32.totalorder %v704, %v894
        %vm904 = vcmp.eq.s32.totalorder %v705, %v894
        %vm905 = vcmp.eq.s32.totalorder %v706, %v894
        %vm906 = vcmp.eq.s32.totalorder %v707, %v894
        %vm907 = vcmp.eq.s32.totalorder %v708, %v894
        %vm908 = vcmp.eq.s32.totalorder %v709, %v894
        %vm909 = vcmp.eq.s32.totalorder %v710, %v894
        %vm910 = vcmp.eq.s32.totalorder %v711, %v894
        %v911 = vsel %vm895, 1, 0
        %v912 = vsel %vm896, 1, 0
        %v913 = vsel %vm897, 1, 0
        %v914 = vsel %vm898, 1, 0
        %v915 = vsel %vm899, 1, 0
        %v916 = vsel %vm900, 1, 0
        %v917 = vsel %vm901, 1, 0
        %v918 = vsel %vm902, 1, 0
        %v919 = vsel %vm903, 1, 0
        %v920 = vsel %vm904, 1, 0
        %v921 = vsel %vm905, 1, 0
        %v922 = vsel %vm906, 1, 0
        %v923 = vsel %vm907, 1, 0
        %v924 = vsel %vm908, 1, 0
        %v925 = vsel %vm909, 1, 0
        %v926 = vsel %vm910, 1, 0
        %v927 = vcvt.s32.f32 %v911
        %v928 = vcvt.s32.f32 %v912
        %v929 = vcvt.s32.f32 %v913
        %v930 = vcvt.s32.f32 %v914
        %v931 = vcvt.s32.f32 %v915
        %v932 = vcvt.s32.f32 %v916
        %v933 = vcvt.s32.f32 %v917
        %v934 = vcvt.s32.f32 %v918
        %v935 = vcvt.s32.f32 %v919
        %v936 = vcvt.s32.f32 %v920
        %v937 = vcvt.s32.f32 %v921
        %v938 = vcvt.s32.f32 %v922
        %v939 = vcvt.s32.f32 %v923
        %v940 = vcvt.s32.f32 %v924
        %v941 = vcvt.s32.f32 %v925
        %v942 = vcvt.s32.f32 %v926
        %v943 = vlaneseq
        %v944 = vshrl.u32 %v943, 7
        %v945 = vsub.s32 1, %v944
        %v946 = vrot.slane %v693, %v945
        %vm947 = vcmp.eq.s32.totalorder %v696, %v946
        %vm948 = vcmp.eq.s32.totalorder %v697, %v946
        %vm949 = vcmp.eq.s32.totalorder %v698, %v946
        %vm950 = vcmp.eq.s32.totalorder %v699, %v946
        %vm951 = vcmp.eq.s32.totalorder %v700, %v946
        %vm952 = vcmp.eq.s32.totalorder %v701, %v946
        %vm953 = vcmp.eq.s32.totalorder %v702, %v946
        %vm954 = vcmp.eq.s32.totalorder %v703, %v946
        %vm955 = vcmp.eq.s32.totalorder %v704, %v946
        %vm956 = vcmp.eq.s32.totalorder %v705, %v946
        %vm957 = vcmp.eq.s32.totalorder %v706, %v946
        %vm958 = vcmp.eq.s32.totalorder %v707, %v946
        %vm959 = vcmp.eq.s32.totalorder %v708, %v946
        %vm960 = vcmp.eq.s32.totalorder %v709, %v946
        %vm961 = vcmp.eq.s32.totalorder %v710, %v946
        %vm962 = vcmp.eq.s32.totalorder %v711, %v946
        %v963 = vsel %vm947, 1, 0
        %v964 = vsel %vm948, 1, 0
        %v965 = vsel %vm949, 1, 0
        %v966 = vsel %vm950, 1, 0
        %v967 = vsel %vm951, 1, 0
        %v968 = vsel %vm952, 1, 0
        %v969 = vsel %vm953, 1, 0
        %v970 = vsel %vm954, 1, 0
        %v971 = vsel %vm955, 1, 0
        %v972 = vsel %vm956, 1, 0
        %v973 = vsel %vm957, 1, 0
        %v974 = vsel %vm958, 1, 0
        %v975 = vsel %vm959, 1, 0
        %v976 = vsel %vm960, 1, 0
        %v977 = vsel %vm961, 1, 0
        %v978 = vsel %vm962, 1, 0
        %v979 = vcvt.s32.f32 %v963
        %v980 = vcvt.s32.f32 %v964
        %v981 = vcvt.s32.f32 %v965
        %v982 = vcvt.s32.f32 %v966
        %v983 = vcvt.s32.f32 %v967
        %v984 = vcvt.s32.f32 %v968
        %v985 = vcvt.s32.f32 %v969
        %v986 = vcvt.s32.f32 %v970
        %v987 = vcvt.s32.f32 %v971
        %v988 = vcvt.s32.f32 %v972
        %v989 = vcvt.s32.f32 %v973
        %v990 = vcvt.s32.f32 %v974
        %v991 = vcvt.s32.f32 %v975
        %v992 = vcvt.s32.f32 %v976
        %v993 = vcvt.s32.f32 %v977
        %v994 = vcvt.s32.f32 %v978
        %v995 = vmul.f32 %v927, %v645
        %v996 = vmul.f32 %v928, %v648
        %v997 = vmul.f32 %v929, %v651
        %v998 = vmul.f32 %v930, %v654
        %v999 = vmul.f32 %v931, %v657
        %v1000 = vmul.f32 %v932, %v660
        %v1001 = vmul.f32 %v933, %v663
        %v1002 = vmul.f32 %v934, %v666
        %v1003 = vmul.f32 %v935, %v669
        %v1004 = vmul.f32 %v936, %v672
        %v1005 = vmul.f32 %v937, %v675
        %v1006 = vmul.f32 %v938, %v678
        %v1007 = vmul.f32 %v939, %v681
        %v1008 = vmul.f32 %v940, %v684
        %v1009 = vmul.f32 %v941, %v687
        %v1010 = vmul.f32 %v942, %v690
        %v1011 = vadd.f32 %v995, %v996
        %v1012 = vadd.f32 %v1011, %v997
        %v1013 = vadd.f32 %v1012, %v998
        %v1014 = vadd.f32 %v1013, %v999
        %v1015 = vadd.f32 %v1014, %v1000
        %v1016 = vadd.f32 %v1015, %v1001
        %v1017 = vadd.f32 %v1016, %v1002
        %v1018 = vadd.f32 %v1017, %v1003
        %v1019 = vadd.f32 %v1018, %v1004
        %v1020 = vadd.f32 %v1019, %v1005
        %v1021 = vadd.f32 %v1020, %v1006
        %v1022 = vadd.f32 %v1021, %v1007
        %v1023 = vadd.f32 %v1022, %v1008
        %v1024 = vadd.f32 %v1023, %v1009
        %v1025 = vadd.f32 %v1024, %v1010
        %v1026 = vrot.slane %v1025, 4
        %v1027 = vadd.f32 %v1025, %v1026
        %v1028 = vrot.slane %v1027, 2
        %v1029 = vadd.f32 %v1027, %v1028
        %v1030 = vrot.slane %v1029, 1
        %v1031 = vadd.f32 %v1029, %v1030
        %v1032 = vmul.f32 %v979, %v574
        %v1033 = vmul.f32 %v980, %v577
        %v1034 = vmul.f32 %v981, %v580
        %v1035 = vmul.f32 %v982, %v583
        %v1036 = vmul.f32 %v983, %v586
        %v1037 = vmul.f32 %v984, %v589
        %v1038 = vmul.f32 %v985, %v592
        %v1039 = vmul.f32 %v986, %v595
        %v1040 = vmul.f32 %v987, %v598
        %v1041 = vmul.f32 %v988, %v601
        %v1042 = vmul.f32 %v989, %v604
        %v1043 = vmul.f32 %v990, %v607
        %v1044 = vmul.f32 %v991, %v610
        %v1045 = vmul.f32 %v992, %v613
        %v1046 = vmul.f32 %v993, %v616
        %v1047 = vmul.f32 %v994, %v619
        %v1048 = vadd.f32 %v1032, %v1033
        %v1049 = vadd.f32 %v1048, %v1034
        %v1050 = vadd.f32 %v1049, %v1035
        %v1051 = vadd.f32 %v1050, %v1036
        %v1052 = vadd.f32 %v1051, %v1037
        %v1053 = vadd.f32 %v1052, %v1038
        %v1054 = vadd.f32 %v1053, %v1039
        %v1055 = vadd.f32 %v1054, %v1040
        %v1056 = vadd.f32 %v1055, %v1041
        %v1057 = vadd.f32 %v1056, %v1042
        %v1058 = vadd.f32 %v1057, %v1043
        %v1059 = vadd.f32 %v1058, %v1044
        %v1060 = vadd.f32 %v1059, %v1045
        %v1061 = vadd.f32 %v1060, %v1046
        %v1062 = vadd.f32 %v1061, %v1047
        %v1063 = vrot.slane %v1062, 4
        %v1064 = vadd.f32 %v1062, %v1063
        %v1065 = vrot.slane %v1064, 2
        %v1066 = vadd.f32 %v1064, %v1065
        %v1067 = vrot.slane %v1066, 1
        %v1068 = vadd.f32 %v1066, %v1067
        %v1069 = vadd.f32 %v1068, %v1031
        %v1070 = vlaneseq
        %v1071 = vshrl.u32 %v1070, 7
        %v1072 = vsub.s32 2, %v1071
        %v1073 = vrot.slane %v691, %v1072
        %vm1074 = vcmp.eq.s32.totalorder %v696, %v1073
        %vm1075 = vcmp.eq.s32.totalorder %v697, %v1073
        %vm1076 = vcmp.eq.s32.totalorder %v698, %v1073
        %vm1077 = vcmp.eq.s32.totalorder %v699, %v1073
        %vm1078 = vcmp.eq.s32.totalorder %v700, %v1073
        %vm1079 = vcmp.eq.s32.totalorder %v701, %v1073
        %vm1080 = vcmp.eq.s32.totalorder %v702, %v1073
        %vm1081 = vcmp.eq.s32.totalorder %v703, %v1073
        %vm1082 = vcmp.eq.s32.totalorder %v704, %v1073
        %vm1083 = vcmp.eq.s32.totalorder %v705, %v1073
        %vm1084 = vcmp.eq.s32.totalorder %v706, %v1073
        %vm1085 = vcmp.eq.s32.totalorder %v707, %v1073
        %vm1086 = vcmp.eq.s32.totalorder %v708, %v1073
        %vm1087 = vcmp.eq.s32.totalorder %v709, %v1073
        %vm1088 = vcmp.eq.s32.totalorder %v710, %v1073
        %vm1089 = vcmp.eq.s32.totalorder %v711, %v1073
        %v1090 = vsel %vm1074, 1, 0
        %v1091 = vsel %vm1075, 1, 0
        %v1092 = vsel %vm1076, 1, 0
        %v1093 = vsel %vm1077, 1, 0
        %v1094 = vsel %vm1078, 1, 0
        %v1095 = vsel %vm1079, 1, 0
        %v1096 = vsel %vm1080, 1, 0
        %v1097 = vsel %vm1081, 1, 0
        %v1098 = vsel %vm1082, 1, 0
        %v1099 = vsel %vm1083, 1, 0
        %v1100 = vsel %vm1084, 1, 0
        %v1101 = vsel %vm1085, 1, 0
        %v1102 = vsel %vm1086, 1, 0
        %v1103 = vsel %vm1087, 1, 0
        %v1104 = vsel %vm1088, 1, 0
        %v1105 = vsel %vm1089, 1, 0
        %v1106 = vcvt.s32.f32 %v1090
        %v1107 = vcvt.s32.f32 %v1091
        %v1108 = vcvt.s32.f32 %v1092
        %v1109 = vcvt.s32.f32 %v1093
        %v1110 = vcvt.s32.f32 %v1094
        %v1111 = vcvt.s32.f32 %v1095
        %v1112 = vcvt.s32.f32 %v1096
        %v1113 = vcvt.s32.f32 %v1097
        %v1114 = vcvt.s32.f32 %v1098
        %v1115 = vcvt.s32.f32 %v1099
        %v1116 = vcvt.s32.f32 %v1100
        %v1117 = vcvt.s32.f32 %v1101
        %v1118 = vcvt.s32.f32 %v1102
        %v1119 = vcvt.s32.f32 %v1103
        %v1120 = vcvt.s32.f32 %v1104
        %v1121 = vcvt.s32.f32 %v1105
        %v1122 = vlaneseq
        %v1123 = vshrl.u32 %v1122, 7
        %v1124 = vsub.s32 2, %v1123
        %v1125 = vrot.slane %v693, %v1124
        %vm1126 = vcmp.eq.s32.totalorder %v696, %v1125
        %vm1127 = vcmp.eq.s32.totalorder %v697, %v1125
        %vm1128 = vcmp.eq.s32.totalorder %v698, %v1125
        %vm1129 = vcmp.eq.s32.totalorder %v699, %v1125
        %vm1130 = vcmp.eq.s32.totalorder %v700, %v1125
        %vm1131 = vcmp.eq.s32.totalorder %v701, %v1125
        %vm1132 = vcmp.eq.s32.totalorder %v702, %v1125
        %vm1133 = vcmp.eq.s32.totalorder %v703, %v1125
        %vm1134 = vcmp.eq.s32.totalorder %v704, %v1125
        %vm1135 = vcmp.eq.s32.totalorder %v705, %v1125
        %vm1136 = vcmp.eq.s32.totalorder %v706, %v1125
        %vm1137 = vcmp.eq.s32.totalorder %v707, %v1125
        %vm1138 = vcmp.eq.s32.totalorder %v708, %v1125
        %vm1139 = vcmp.eq.s32.totalorder %v709, %v1125
        %vm1140 = vcmp.eq.s32.totalorder %v710, %v1125
        %vm1141 = vcmp.eq.s32.totalorder %v711, %v1125
        %v1142 = vsel %vm1126, 1, 0
        %v1143 = vsel %vm1127, 1, 0
        %v1144 = vsel %vm1128, 1, 0
        %v1145 = vsel %vm1129, 1, 0
        %v1146 = vsel %vm1130, 1, 0
        %v1147 = vsel %vm1131, 1, 0
        %v1148 = vsel %vm1132, 1, 0
        %v1149 = vsel %vm1133, 1, 0
        %v1150 = vsel %vm1134, 1, 0
        %v1151 = vsel %vm1135, 1, 0
        %v1152 = vsel %vm1136, 1, 0
        %v1153 = vsel %vm1137, 1, 0
        %v1154 = vsel %vm1138, 1, 0
        %v1155 = vsel %vm1139, 1, 0
        %v1156 = vsel %vm1140, 1, 0
        %v1157 = vsel %vm1141, 1, 0
        %v1158 = vcvt.s32.f32 %v1142
        %v1159 = vcvt.s32.f32 %v1143
        %v1160 = vcvt.s32.f32 %v1144
        %v1161 = vcvt.s32.f32 %v1145
        %v1162 = vcvt.s32.f32 %v1146
        %v1163 = vcvt.s32.f32 %v1147
        %v1164 = vcvt.s32.f32 %v1148
        %v1165 = vcvt.s32.f32 %v1149
        %v1166 = vcvt.s32.f32 %v1150
        %v1167 = vcvt.s32.f32 %v1151
        %v1168 = vcvt.s32.f32 %v1152
        %v1169 = vcvt.s32.f32 %v1153
        %v1170 = vcvt.s32.f32 %v1154
        %v1171 = vcvt.s32.f32 %v1155
        %v1172 = vcvt.s32.f32 %v1156
        %v1173 = vcvt.s32.f32 %v1157
        %v1174 = vmul.f32 %v1106, %v645
        %v1175 = vmul.f32 %v1107, %v648
        %v1176 = vmul.f32 %v1108, %v651
        %v1177 = vmul.f32 %v1109, %v654
        %v1178 = vmul.f32 %v1110, %v657
        %v1179 = vmul.f32 %v1111, %v660
        %v1180 = vmul.f32 %v1112, %v663
        %v1181 = vmul.f32 %v1113, %v666
        %v1182 = vmul.f32 %v1114, %v669
        %v1183 = vmul.f32 %v1115, %v672
        %v1184 = vmul.f32 %v1116, %v675
        %v1185 = vmul.f32 %v1117, %v678
        %v1186 = vmul.f32 %v1118, %v681
        %v1187 = vmul.f32 %v1119, %v684
        %v1188 = vmul.f32 %v1120, %v687
        %v1189 = vmul.f32 %v1121, %v690
        %v1190 = vadd.f32 %v1174, %v1175
        %v1191 = vadd.f32 %v1190, %v1176
        %v1192 = vadd.f32 %v1191, %v1177
        %v1193 = vadd.f32 %v1192, %v1178
        %v1194 = vadd.f32 %v1193, %v1179
        %v1195 = vadd.f32 %v1194, %v1180
        %v1196 = vadd.f32 %v1195, %v1181
        %v1197 = vadd.f32 %v1196, %v1182
        %v1198 = vadd.f32 %v1197, %v1183
        %v1199 = vadd.f32 %v1198, %v1184
        %v1200 = vadd.f32 %v1199, %v1185
        %v1201 = vadd.f32 %v1200, %v1186
        %v1202 = vadd.f32 %v1201, %v1187
        %v1203 = vadd.f32 %v1202, %v1188
        %v1204 = vadd.f32 %v1203, %v1189
        %v1205 = vrot.slane %v1204, 4
        %v1206 = vadd.f32 %v1204, %v1205
        %v1207 = vrot.slane %v1206, 2
        %v1208 = vadd.f32 %v1206, %v1207
        %v1209 = vrot.slane %v1208, 1
        %v1210 = vadd.f32 %v1208, %v1209
        %v1211 = vmul.f32 %v1158, %v574
        %v1212 = vmul.f32 %v1159, %v577
        %v1213 = vmul.f32 %v1160, %v580
        %v1214 = vmul.f32 %v1161, %v583
        %v1215 = vmul.f32 %v1162, %v586
        %v1216 = vmul.f32 %v1163, %v589
        %v1217 = vmul.f32 %v1164, %v592
        %v1218 = vmul.f32 %v1165, %v595
        %v1219 = vmul.f32 %v1166, %v598
        %v1220 = vmul.f32 %v1167, %v601
        %v1221 = vmul.f32 %v1168, %v604
        %v1222 = vmul.f32 %v1169, %v607
        %v1223 = vmul.f32 %v1170, %v610
        %v1224 = vmul.f32 %v1171, %v613
        %v1225 = vmul.f32 %v1172, %v616
        %v1226 = vmul.f32 %v1173, %v619
        %v1227 = vadd.f32 %v1211, %v1212
        %v1228 = vadd.f32 %v1227, %v1213
        %v1229 = vadd.f32 %v1228, %v1214
        %v1230 = vadd.f32 %v1229, %v1215
        %v1231 = vadd.f32 %v1230, %v1216
        %v1232 = vadd.f32 %v1231, %v1217
        %v1233 = vadd.f32 %v1232, %v1218
        %v1234 = vadd.f32 %v1233, %v1219
        %v1235 = vadd.f32 %v1234, %v1220
        %v1236 = vadd.f32 %v1235, %v1221
        %v1237 = vadd.f32 %v1236, %v1222
        %v1238 = vadd.f32 %v1237, %v1223
        %v1239 = vadd.f32 %v1238, %v1224
        %v1240 = vadd.f32 %v1239, %v1225
        %v1241 = vadd.f32 %v1240, %v1226
        %v1242 = vrot.slane %v1241, 4
        %v1243 = vadd.f32 %v1241, %v1242
        %v1244 = vrot.slane %v1243, 2
        %v1245 = vadd.f32 %v1243, %v1244
        %v1246 = vrot.slane %v1245, 1
        %v1247 = vadd.f32 %v1245, %v1246
        %v1248 = vadd.f32 %v1247, %v1210
        %v1249 = vlaneseq
        %v1250 = vshrl.u32 %v1249, 7
        %v1251 = vsub.s32 3, %v1250
        %v1252 = vrot.slane %v691, %v1251
        %vm1253 = vcmp.eq.s32.totalorder %v696, %v1252
        %vm1254 = vcmp.eq.s32.totalorder %v697, %v1252
        %vm1255 = vcmp.eq.s32.totalorder %v698, %v1252
        %vm1256 = vcmp.eq.s32.totalorder %v699, %v1252
        %vm1257 = vcmp.eq.s32.totalorder %v700, %v1252
        %vm1258 = vcmp.eq.s32.totalorder %v701, %v1252
        %vm1259 = vcmp.eq.s32.totalorder %v702, %v1252
        %vm1260 = vcmp.eq.s32.totalorder %v703, %v1252
        %vm1261 = vcmp.eq.s32.totalorder %v704, %v1252
        %vm1262 = vcmp.eq.s32.totalorder %v705, %v1252
        %vm1263 = vcmp.eq.s32.totalorder %v706, %v1252
        %vm1264 = vcmp.eq.s32.totalorder %v707, %v1252
        %vm1265 = vcmp.eq.s32.totalorder %v708, %v1252
        %vm1266 = vcmp.eq.s32.totalorder %v709, %v1252
        %vm1267 = vcmp.eq.s32.totalorder %v710, %v1252
        %vm1268 = vcmp.eq.s32.totalorder %v711, %v1252
        %v1269 = vsel %vm1253, 1, 0
        %v1270 = vsel %vm1254, 1, 0
        %v1271 = vsel %vm1255, 1, 0
        %v1272 = vsel %vm1256, 1, 0
        %v1273 = vsel %vm1257, 1, 0
        %v1274 = vsel %vm1258, 1, 0
        %v1275 = vsel %vm1259, 1, 0
        %v1276 = vsel %vm1260, 1, 0
        %v1277 = vsel %vm1261, 1, 0
        %v1278 = vsel %vm1262, 1, 0
        %v1279 = vsel %vm1263, 1, 0
        %v1280 = vsel %vm1264, 1, 0
        %v1281 = vsel %vm1265, 1, 0
        %v1282 = vsel %vm1266, 1, 0
        %v1283 = vsel %vm1267, 1, 0
        %v1284 = vsel %vm1268, 1, 0
        %v1285 = vcvt.s32.f32 %v1269
        %v1286 = vcvt.s32.f32 %v1270
        %v1287 = vcvt.s32.f32 %v1271
        %v1288 = vcvt.s32.f32 %v1272
        %v1289 = vcvt.s32.f32 %v1273
        %v1290 = vcvt.s32.f32 %v1274
        %v1291 = vcvt.s32.f32 %v1275
        %v1292 = vcvt.s32.f32 %v1276
        %v1293 = vcvt.s32.f32 %v1277
        %v1294 = vcvt.s32.f32 %v1278
        %v1295 = vcvt.s32.f32 %v1279
        %v1296 = vcvt.s32.f32 %v1280
        %v1297 = vcvt.s32.f32 %v1281
        %v1298 = vcvt.s32.f32 %v1282
        %v1299 = vcvt.s32.f32 %v1283
        %v1300 = vcvt.s32.f32 %v1284
        %v1301 = vlaneseq
        %v1302 = vshrl.u32 %v1301, 7
        %v1303 = vsub.s32 3, %v1302
        %v1304 = vrot.slane %v693, %v1303
        %vm1305 = vcmp.eq.s32.totalorder %v696, %v1304
        %vm1306 = vcmp.eq.s32.totalorder %v697, %v1304
        %vm1307 = vcmp.eq.s32.totalorder %v698, %v1304
        %vm1308 = vcmp.eq.s32.totalorder %v699, %v1304
        %vm1309 = vcmp.eq.s32.totalorder %v700, %v1304
        %vm1310 = vcmp.eq.s32.totalorder %v701, %v1304
        %vm1311 = vcmp.eq.s32.totalorder %v702, %v1304
        %vm1312 = vcmp.eq.s32.totalorder %v703, %v1304
        %vm1313 = vcmp.eq.s32.totalorder %v704, %v1304
        %vm1314 = vcmp.eq.s32.totalorder %v705, %v1304
        %vm1315 = vcmp.eq.s32.totalorder %v706, %v1304
        %vm1316 = vcmp.eq.s32.totalorder %v707, %v1304
        %vm1317 = vcmp.eq.s32.totalorder %v708, %v1304
        %vm1318 = vcmp.eq.s32.totalorder %v709, %v1304
        %vm1319 = vcmp.eq.s32.totalorder %v710, %v1304
        %vm1320 = vcmp.eq.s32.totalorder %v711, %v1304
        %v1321 = vsel %vm1305, 1, 0
        %v1322 = vsel %vm1306, 1, 0
        %v1323 = vsel %vm1307, 1, 0
        %v1324 = vsel %vm1308, 1, 0
        %v1325 = vsel %vm1309, 1, 0
        %v1326 = vsel %vm1310, 1, 0
        %v1327 = vsel %vm1311, 1, 0
        %v1328 = vsel %vm1312, 1, 0
        %v1329 = vsel %vm1313, 1, 0
        %v1330 = vsel %vm1314, 1, 0
        %v1331 = vsel %vm1315, 1, 0
        %v1332 = vsel %vm1316, 1, 0
        %v1333 = vsel %vm1317, 1, 0
        %v1334 = vsel %vm1318, 1, 0
        %v1335 = vsel %vm1319, 1, 0
        %v1336 = vsel %vm1320, 1, 0
        %v1337 = vcvt.s32.f32 %v1321
        %v1338 = vcvt.s32.f32 %v1322
        %v1339 = vcvt.s32.f32 %v1323
        %v1340 = vcvt.s32.f32 %v1324
        %v1341 = vcvt.s32.f32 %v1325
        %v1342 = vcvt.s32.f32 %v1326
        %v1343 = vcvt.s32.f32 %v1327
        %v1344 = vcvt.s32.f32 %v1328
        %v1345 = vcvt.s32.f32 %v1329
        %v1346 = vcvt.s32.f32 %v1330
        %v1347 = vcvt.s32.f32 %v1331
        %v1348 = vcvt.s32.f32 %v1332
        %v1349 = vcvt.s32.f32 %v1333
        %v1350 = vcvt.s32.f32 %v1334
        %v1351 = vcvt.s32.f32 %v1335
        %v1352 = vcvt.s32.f32 %v1336
        %v1353 = vmul.f32 %v1285, %v645
        %v1354 = vmul.f32 %v1286, %v648
        %v1355 = vmul.f32 %v1287, %v651
        %v1356 = vmul.f32 %v1288, %v654
        %v1357 = vmul.f32 %v1289, %v657
        %v1358 = vmul.f32 %v1290, %v660
        %v1359 = vmul.f32 %v1291, %v663
        %v1360 = vmul.f32 %v1292, %v666
        %v1361 = vmul.f32 %v1293, %v669
        %v1362 = vmul.f32 %v1294, %v672
        %v1363 = vmul.f32 %v1295, %v675
        %v1364 = vmul.f32 %v1296, %v678
        %v1365 = vmul.f32 %v1297, %v681
        %v1366 = vmul.f32 %v1298, %v684
        %v1367 = vmul.f32 %v1299, %v687
        %v1368 = vmul.f32 %v1300, %v690
        %v1369 = vadd.f32 %v1353, %v1354
        %v1370 = vadd.f32 %v1369, %v1355
        %v1371 = vadd.f32 %v1370, %v1356
        %v1372 = vadd.f32 %v1371, %v1357
        %v1373 = vadd.f32 %v1372, %v1358
        %v1374 = vadd.f32 %v1373, %v1359
        %v1375 = vadd.f32 %v1374, %v1360
        %v1376 = vadd.f32 %v1375, %v1361
        %v1377 = vadd.f32 %v1376, %v1362
        %v1378 = vadd.f32 %v1377, %v1363
        %v1379 = vadd.f32 %v1378, %v1364
        %v1380 = vadd.f32 %v1379, %v1365
        %v1381 = vadd.f32 %v1380, %v1366
        %v1382 = vadd.f32 %v1381, %v1367
        %v1383 = vadd.f32 %v1382, %v1368
        %v1384 = vrot.slane %v1383, 4
        %v1385 = vadd.f32 %v1383, %v1384
        %v1386 = vrot.slane %v1385, 2
        %v1387 = vadd.f32 %v1385, %v1386
        %v1388 = vrot.slane %v1387, 1
        %v1389 = vadd.f32 %v1387, %v1388
        %v1390 = vmul.f32 %v1337, %v574
        %v1391 = vmul.f32 %v1338, %v577
        %v1392 = vmul.f32 %v1339, %v580
        %v1393 = vmul.f32 %v1340, %v583
        %v1394 = vmul.f32 %v1341, %v586
        %v1395 = vmul.f32 %v1342, %v589
        %v1396 = vmul.f32 %v1343, %v592
        %v1397 = vmul.f32 %v1344, %v595
        %v1398 = vmul.f32 %v1345, %v598
        %v1399 = vmul.f32 %v1346, %v601
        %v1400 = vmul.f32 %v1347, %v604
        %v1401 = vmul.f32 %v1348, %v607
        %v1402 = vmul.f32 %v1349, %v610
        %v1403 = vmul.f32 %v1350, %v613
        %v1404 = vmul.f32 %v1351, %v616
        %v1405 = vmul.f32 %v1352, %v619
        %v1406 = vadd.f32 %v1390, %v1391
        %v1407 = vadd.f32 %v1406, %v1392
        %v1408 = vadd.f32 %v1407, %v1393
        %v1409 = vadd.f32 %v1408, %v1394
        %v1410 = vadd.f32 %v1409, %v1395
        %v1411 = vadd.f32 %v1410, %v1396
        %v1412 = vadd.f32 %v1411, %v1397
        %v1413 = vadd.f32 %v1412, %v1398
        %v1414 = vadd.f32 %v1413, %v1399
        %v1415 = vadd.f32 %v1414, %v1400
        %v1416 = vadd.f32 %v1415, %v1401
        %v1417 = vadd.f32 %v1416, %v1402
        %v1418 = vadd.f32 %v1417, %v1403
        %v1419 = vadd.f32 %v1418, %v1404
        %v1420 = vadd.f32 %v1419, %v1405
        %v1421 = vrot.slane %v1420, 4
        %v1422 = vadd.f32 %v1420, %v1421
        %v1423 = vrot.slane %v1422, 2
        %v1424 = vadd.f32 %v1422, %v1423
        %v1425 = vrot.slane %v1424, 1
        %v1426 = vadd.f32 %v1424, %v1425
        %v1427 = vadd.f32 %v1426, %v1389
        %v1428 = vlaneseq
        %v1429 = vshrl.u32 %v1428, 7
        %v1430 = vsub.s32 4, %v1429
        %v1431 = vrot.slane %v691, %v1430
        %vm1432 = vcmp.eq.s32.totalorder %v696, %v1431
        %vm1433 = vcmp.eq.s32.totalorder %v697, %v1431
        %vm1434 = vcmp.eq.s32.totalorder %v698, %v1431
        %vm1435 = vcmp.eq.s32.totalorder %v699, %v1431
        %vm1436 = vcmp.eq.s32.totalorder %v700, %v1431
        %vm1437 = vcmp.eq.s32.totalorder %v701, %v1431
        %vm1438 = vcmp.eq.s32.totalorder %v702, %v1431
        %vm1439 = vcmp.eq.s32.totalorder %v703, %v1431
        %vm1440 = vcmp.eq.s32.totalorder %v704, %v1431
        %vm1441 = vcmp.eq.s32.totalorder %v705, %v1431
        %vm1442 = vcmp.eq.s32.totalorder %v706, %v1431
        %vm1443 = vcmp.eq.s32.totalorder %v707, %v1431
        %vm1444 = vcmp.eq.s32.totalorder %v708, %v1431
        %vm1445 = vcmp.eq.s32.totalorder %v709, %v1431
        %vm1446 = vcmp.eq.s32.totalorder %v710, %v1431
        %vm1447 = vcmp.eq.s32.totalorder %v711, %v1431
        %v1448 = vsel %vm1432, 1, 0
        %v1449 = vsel %vm1433, 1, 0
        %v1450 = vsel %vm1434, 1, 0
        %v1451 = vsel %vm1435, 1, 0
        %v1452 = vsel %vm1436, 1, 0
        %v1453 = vsel %vm1437, 1, 0
        %v1454 = vsel %vm1438, 1, 0
        %v1455 = vsel %vm1439, 1, 0
        %v1456 = vsel %vm1440, 1, 0
        %v1457 = vsel %vm1441, 1, 0
        %v1458 = vsel %vm1442, 1, 0
        %v1459 = vsel %vm1443, 1, 0
        %v1460 = vsel %vm1444, 1, 0
        %v1461 = vsel %vm1445, 1, 0
        %v1462 = vsel %vm1446, 1, 0
        %v1463 = vsel %vm1447, 1, 0
        %v1464 = vcvt.s32.f32 %v1448
        %v1465 = vcvt.s32.f32 %v1449
        %v1466 = vcvt.s32.f32 %v1450
        %v1467 = vcvt.s32.f32 %v1451
        %v1468 = vcvt.s32.f32 %v1452
        %v1469 = vcvt.s32.f32 %v1453
        %v1470 = vcvt.s32.f32 %v1454
        %v1471 = vcvt.s32.f32 %v1455
        %v1472 = vcvt.s32.f32 %v1456
        %v1473 = vcvt.s32.f32 %v1457
        %v1474 = vcvt.s32.f32 %v1458
        %v1475 = vcvt.s32.f32 %v1459
        %v1476 = vcvt.s32.f32 %v1460
        %v1477 = vcvt.s32.f32 %v1461
        %v1478 = vcvt.s32.f32 %v1462
        %v1479 = vcvt.s32.f32 %v1463
        %v1480 = vlaneseq
        %v1481 = vshrl.u32 %v1480, 7
        %v1482 = vsub.s32 4, %v1481
        %v1483 = vrot.slane %v693, %v1482
        %vm1484 = vcmp.eq.s32.totalorder %v696, %v1483
        %vm1485 = vcmp.eq.s32.totalorder %v697, %v1483
        %vm1486 = vcmp.eq.s32.totalorder %v698, %v1483
        %vm1487 = vcmp.eq.s32.totalorder %v699, %v1483
        %vm1488 = vcmp.eq.s32.totalorder %v700, %v1483
        %vm1489 = vcmp.eq.s32.totalorder %v701, %v1483
        %vm1490 = vcmp.eq.s32.totalorder %v702, %v1483
        %vm1491 = vcmp.eq.s32.totalorder %v703, %v1483
        %vm1492 = vcmp.eq.s32.totalorder %v704, %v1483
        %vm1493 = vcmp.eq.s32.totalorder %v705, %v1483
        %vm1494 = vcmp.eq.s32.totalorder %v706, %v1483
        %vm1495 = vcmp.eq.s32.totalorder %v707, %v1483
        %vm1496 = vcmp.eq.s32.totalorder %v708, %v1483
        %vm1497 = vcmp.eq.s32.totalorder %v709, %v1483
        %vm1498 = vcmp.eq.s32.totalorder %v710, %v1483
        %vm1499 = vcmp.eq.s32.totalorder %v711, %v1483
        %v1500 = vsel %vm1484, 1, 0
        %v1501 = vsel %vm1485, 1, 0
        %v1502 = vsel %vm1486, 1, 0
        %v1503 = vsel %vm1487, 1, 0
        %v1504 = vsel %vm1488, 1, 0
        %v1505 = vsel %vm1489, 1, 0
        %v1506 = vsel %vm1490, 1, 0
        %v1507 = vsel %vm1491, 1, 0
        %v1508 = vsel %vm1492, 1, 0
        %v1509 = vsel %vm1493, 1, 0
        %v1510 = vsel %vm1494, 1, 0
        %v1511 = vsel %vm1495, 1, 0
        %v1512 = vsel %vm1496, 1, 0
        %v1513 = vsel %vm1497, 1, 0
        %v1514 = vsel %vm1498, 1, 0
        %v1515 = vsel %vm1499, 1, 0
        %v1516 = vcvt.s32.f32 %v1500
        %v1517 = vcvt.s32.f32 %v1501
        %v1518 = vcvt.s32.f32 %v1502
        %v1519 = vcvt.s32.f32 %v1503
        %v1520 = vcvt.s32.f32 %v1504
        %v1521 = vcvt.s32.f32 %v1505
        %v1522 = vcvt.s32.f32 %v1506
        %v1523 = vcvt.s32.f32 %v1507
        %v1524 = vcvt.s32.f32 %v1508
        %v1525 = vcvt.s32.f32 %v1509
        %v1526 = vcvt.s32.f32 %v1510
        %v1527 = vcvt.s32.f32 %v1511
        %v1528 = vcvt.s32.f32 %v1512
        %v1529 = vcvt.s32.f32 %v1513
        %v1530 = vcvt.s32.f32 %v1514
        %v1531 = vcvt.s32.f32 %v1515
        %v1532 = vmul.f32 %v1464, %v645
        %v1533 = vmul.f32 %v1465, %v648
        %v1534 = vmul.f32 %v1466, %v651
        %v1535 = vmul.f32 %v1467, %v654
        %v1536 = vmul.f32 %v1468, %v657
        %v1537 = vmul.f32 %v1469, %v660
        %v1538 = vmul.f32 %v1470, %v663
        %v1539 = vmul.f32 %v1471, %v666
        %v1540 = vmul.f32 %v1472, %v669
        %v1541 = vmul.f32 %v1473, %v672
        %v1542 = vmul.f32 %v1474, %v675
        %v1543 = vmul.f32 %v1475, %v678
        %v1544 = vmul.f32 %v1476, %v681
        %v1545 = vmul.f32 %v1477, %v684
        %v1546 = vmul.f32 %v1478, %v687
        %v1547 = vmul.f32 %v1479, %v690
        %v1548 = vadd.f32 %v1532, %v1533
        %v1549 = vadd.f32 %v1548, %v1534
        %v1550 = vadd.f32 %v1549, %v1535
        %v1551 = vadd.f32 %v1550, %v1536
        %v1552 = vadd.f32 %v1551, %v1537
        %v1553 = vadd.f32 %v1552, %v1538
        %v1554 = vadd.f32 %v1553, %v1539
        %v1555 = vadd.f32 %v1554, %v1540
        %v1556 = vadd.f32 %v1555, %v1541
        %v1557 = vadd.f32 %v1556, %v1542
        %v1558 = vadd.f32 %v1557, %v1543
        %v1559 = vadd.f32 %v1558, %v1544
        %v1560 = vadd.f32 %v1559, %v1545
        %v1561 = vadd.f32 %v1560, %v1546
        %v1562 = vadd.f32 %v1561, %v1547
        %v1563 = vrot.slane %v1562, 4
        %v1564 = vadd.f32 %v1562, %v1563
        %v1565 = vrot.slane %v1564, 2
        %v1566 = vadd.f32 %v1564, %v1565
        %v1567 = vrot.slane %v1566, 1
        %v1568 = vadd.f32 %v1566, %v1567
        %v1569 = vmul.f32 %v1516, %v574
        %v1570 = vmul.f32 %v1517, %v577
        %v1571 = vmul.f32 %v1518, %v580
        %v1572 = vmul.f32 %v1519, %v583
        %v1573 = vmul.f32 %v1520, %v586
        %v1574 = vmul.f32 %v1521, %v589
        %v1575 = vmul.f32 %v1522, %v592
        %v1576 = vmul.f32 %v1523, %v595
        %v1577 = vmul.f32 %v1524, %v598
        %v1578 = vmul.f32 %v1525, %v601
        %v1579 = vmul.f32 %v1526, %v604
        %v1580 = vmul.f32 %v1527, %v607
        %v1581 = vmul.f32 %v1528, %v610
        %v1582 = vmul.f32 %v1529, %v613
        %v1583 = vmul.f32 %v1530, %v616
        %v1584 = vmul.f32 %v1531, %v619
        %v1585 = vadd.f32 %v1569, %v1570
        %v1586 = vadd.f32 %v1585, %v1571
        %v1587 = vadd.f32 %v1586, %v1572
        %v1588 = vadd.f32 %v1587, %v1573
        %v1589 = vadd.f32 %v1588, %v1574
        %v1590 = vadd.f32 %v1589, %v1575
        %v1591 = vadd.f32 %v1590, %v1576
        %v1592 = vadd.f32 %v1591, %v1577
        %v1593 = vadd.f32 %v1592, %v1578
        %v1594 = vadd.f32 %v1593, %v1579
        %v1595 = vadd.f32 %v1594, %v1580
        %v1596 = vadd.f32 %v1595, %v1581
        %v1597 = vadd.f32 %v1596, %v1582
        %v1598 = vadd.f32 %v1597, %v1583
        %v1599 = vadd.f32 %v1598, %v1584
        %v1600 = vrot.slane %v1599, 4
        %v1601 = vadd.f32 %v1599, %v1600
        %v1602 = vrot.slane %v1601, 2
        %v1603 = vadd.f32 %v1601, %v1602
        %v1604 = vrot.slane %v1603, 1
        %v1605 = vadd.f32 %v1603, %v1604
        %v1606 = vadd.f32 %v1605, %v1568
        %v1607 = vlaneseq
        %v1608 = vshrl.u32 %v1607, 7
        %v1609 = vsub.s32 5, %v1608
        %v1610 = vrot.slane %v691, %v1609
        %vm1611 = vcmp.eq.s32.totalorder %v696, %v1610
        %vm1612 = vcmp.eq.s32.totalorder %v697, %v1610
        %vm1613 = vcmp.eq.s32.totalorder %v698, %v1610
        %vm1614 = vcmp.eq.s32.totalorder %v699, %v1610
        %vm1615 = vcmp.eq.s32.totalorder %v700, %v1610
        %vm1616 = vcmp.eq.s32.totalorder %v701, %v1610
        %vm1617 = vcmp.eq.s32.totalorder %v702, %v1610
        %vm1618 = vcmp.eq.s32.totalorder %v703, %v1610
        %vm1619 = vcmp.eq.s32.totalorder %v704, %v1610
        %vm1620 = vcmp.eq.s32.totalorder %v705, %v1610
        %vm1621 = vcmp.eq.s32.totalorder %v706, %v1610
        %vm1622 = vcmp.eq.s32.totalorder %v707, %v1610
        %vm1623 = vcmp.eq.s32.totalorder %v708, %v1610
        %vm1624 = vcmp.eq.s32.totalorder %v709, %v1610
        %vm1625 = vcmp.eq.s32.totalorder %v710, %v1610
        %vm1626 = vcmp.eq.s32.totalorder %v711, %v1610
        %v1627 = vsel %vm1611, 1, 0
        %v1628 = vsel %vm1612, 1, 0
        %v1629 = vsel %vm1613, 1, 0
        %v1630 = vsel %vm1614, 1, 0
        %v1631 = vsel %vm1615, 1, 0
        %v1632 = vsel %vm1616, 1, 0
        %v1633 = vsel %vm1617, 1, 0
        %v1634 = vsel %vm1618, 1, 0
        %v1635 = vsel %vm1619, 1, 0
        %v1636 = vsel %vm1620, 1, 0
        %v1637 = vsel %vm1621, 1, 0
        %v1638 = vsel %vm1622, 1, 0
        %v1639 = vsel %vm1623, 1, 0
        %v1640 = vsel %vm1624, 1, 0
        %v1641 = vsel %vm1625, 1, 0
        %v1642 = vsel %vm1626, 1, 0
        %v1643 = vcvt.s32.f32 %v1627
        %v1644 = vcvt.s32.f32 %v1628
        %v1645 = vcvt.s32.f32 %v1629
        %v1646 = vcvt.s32.f32 %v1630
        %v1647 = vcvt.s32.f32 %v1631
        %v1648 = vcvt.s32.f32 %v1632
        %v1649 = vcvt.s32.f32 %v1633
        %v1650 = vcvt.s32.f32 %v1634
        %v1651 = vcvt.s32.f32 %v1635
        %v1652 = vcvt.s32.f32 %v1636
        %v1653 = vcvt.s32.f32 %v1637
        %v1654 = vcvt.s32.f32 %v1638
        %v1655 = vcvt.s32.f32 %v1639
        %v1656 = vcvt.s32.f32 %v1640
        %v1657 = vcvt.s32.f32 %v1641
        %v1658 = vcvt.s32.f32 %v1642
        %v1659 = vlaneseq
        %v1660 = vshrl.u32 %v1659, 7
        %v1661 = vsub.s32 5, %v1660
        %v1662 = vrot.slane %v693, %v1661
        %vm1663 = vcmp.eq.s32.totalorder %v696, %v1662
        %vm1664 = vcmp.eq.s32.totalorder %v697, %v1662
        %vm1665 = vcmp.eq.s32.totalorder %v698, %v1662
        %vm1666 = vcmp.eq.s32.totalorder %v699, %v1662
        %vm1667 = vcmp.eq.s32.totalorder %v700, %v1662
        %vm1668 = vcmp.eq.s32.totalorder %v701, %v1662
        %vm1669 = vcmp.eq.s32.totalorder %v702, %v1662
        %vm1670 = vcmp.eq.s32.totalorder %v703, %v1662
        %vm1671 = vcmp.eq.s32.totalorder %v704, %v1662
        %vm1672 = vcmp.eq.s32.totalorder %v705, %v1662
        %vm1673 = vcmp.eq.s32.totalorder %v706, %v1662
        %vm1674 = vcmp.eq.s32.totalorder %v707, %v1662
        %vm1675 = vcmp.eq.s32.totalorder %v708, %v1662
        %vm1676 = vcmp.eq.s32.totalorder %v709, %v1662
        %vm1677 = vcmp.eq.s32.totalorder %v710, %v1662
        %vm1678 = vcmp.eq.s32.totalorder %v711, %v1662
        %v1679 = vsel %vm1663, 1, 0
        %v1680 = vsel %vm1664, 1, 0
        %v1681 = vsel %vm1665, 1, 0
        %v1682 = vsel %vm1666, 1, 0
        %v1683 = vsel %vm1667, 1, 0
        %v1684 = vsel %vm1668, 1, 0
        %v1685 = vsel %vm1669, 1, 0
        %v1686 = vsel %vm1670, 1, 0
        %v1687 = vsel %vm1671, 1, 0
        %v1688 = vsel %vm1672, 1, 0
        %v1689 = vsel %vm1673, 1, 0
        %v1690 = vsel %vm1674, 1, 0
        %v1691 = vsel %vm1675, 1, 0
        %v1692 = vsel %vm1676, 1, 0
        %v1693 = vsel %vm1677, 1, 0
        %v1694 = vsel %vm1678, 1, 0
        %v1695 = vcvt.s32.f32 %v1679
        %v1696 = vcvt.s32.f32 %v1680
        %v1697 = vcvt.s32.f32 %v1681
        %v1698 = vcvt.s32.f32 %v1682
        %v1699 = vcvt.s32.f32 %v1683
        %v1700 = vcvt.s32.f32 %v1684
        %v1701 = vcvt.s32.f32 %v1685
        %v1702 = vcvt.s32.f32 %v1686
        %v1703 = vcvt.s32.f32 %v1687
        %v1704 = vcvt.s32.f32 %v1688
        %v1705 = vcvt.s32.f32 %v1689
        %v1706 = vcvt.s32.f32 %v1690
        %v1707 = vcvt.s32.f32 %v1691
        %v1708 = vcvt.s32.f32 %v1692
        %v1709 = vcvt.s32.f32 %v1693
        %v1710 = vcvt.s32.f32 %v1694
        %v1711 = vmul.f32 %v1643, %v645
        %v1712 = vmul.f32 %v1644, %v648
        %v1713 = vmul.f32 %v1645, %v651
        %v1714 = vmul.f32 %v1646, %v654
        %v1715 = vmul.f32 %v1647, %v657
        %v1716 = vmul.f32 %v1648, %v660
        %v1717 = vmul.f32 %v1649, %v663
        %v1718 = vmul.f32 %v1650, %v666
        %v1719 = vmul.f32 %v1651, %v669
        %v1720 = vmul.f32 %v1652, %v672
        %v1721 = vmul.f32 %v1653, %v675
        %v1722 = vmul.f32 %v1654, %v678
        %v1723 = vmul.f32 %v1655, %v681
        %v1724 = vmul.f32 %v1656, %v684
        %v1725 = vmul.f32 %v1657, %v687
        %v1726 = vmul.f32 %v1658, %v690
        %v1727 = vadd.f32 %v1711, %v1712
        %v1728 = vadd.f32 %v1727, %v1713
        %v1729 = vadd.f32 %v1728, %v1714
        %v1730 = vadd.f32 %v1729, %v1715
        %v1731 = vadd.f32 %v1730, %v1716
        %v1732 = vadd.f32 %v1731, %v1717
        %v1733 = vadd.f32 %v1732, %v1718
        %v1734 = vadd.f32 %v1733, %v1719
        %v1735 = vadd.f32 %v1734, %v1720
        %v1736 = vadd.f32 %v1735, %v1721
        %v1737 = vadd.f32 %v1736, %v1722
        %v1738 = vadd.f32 %v1737, %v1723
        %v1739 = vadd.f32 %v1738, %v1724
        %v1740 = vadd.f32 %v1739, %v1725
        %v1741 = vadd.f32 %v1740, %v1726
        %v1742 = vrot.slane %v1741, 4
        %v1743 = vadd.f32 %v1741, %v1742
        %v1744 = vrot.slane %v1743, 2
        %v1745 = vadd.f32 %v1743, %v1744
        %v1746 = vrot.slane %v1745, 1
        %v1747 = vadd.f32 %v1745, %v1746
        %v1748 = vmul.f32 %v1695, %v574
        %v1749 = vmul.f32 %v1696, %v577
        %v1750 = vmul.f32 %v1697, %v580
        %v1751 = vmul.f32 %v1698, %v583
        %v1752 = vmul.f32 %v1699, %v586
        %v1753 = vmul.f32 %v1700, %v589
        %v1754 = vmul.f32 %v1701, %v592
        %v1755 = vmul.f32 %v1702, %v595
        %v1756 = vmul.f32 %v1703, %v598
        %v1757 = vmul.f32 %v1704, %v601
        %v1758 = vmul.f32 %v1705, %v604
        %v1759 = vmul.f32 %v1706, %v607
        %v1760 = vmul.f32 %v1707, %v610
        %v1761 = vmul.f32 %v1708, %v613
        %v1762 = vmul.f32 %v1709, %v616
        %v1763 = vmul.f32 %v1710, %v619
        %v1764 = vadd.f32 %v1748, %v1749
        %v1765 = vadd.f32 %v1764, %v1750
        %v1766 = vadd.f32 %v1765, %v1751
        %v1767 = vadd.f32 %v1766, %v1752
        %v1768 = vadd.f32 %v1767, %v1753
        %v1769 = vadd.f32 %v1768, %v1754
        %v1770 = vadd.f32 %v1769, %v1755
        %v1771 = vadd.f32 %v1770, %v1756
        %v1772 = vadd.f32 %v1771, %v1757
        %v1773 = vadd.f32 %v1772, %v1758
        %v1774 = vadd.f32 %v1773, %v1759
        %v1775 = vadd.f32 %v1774, %v1760
        %v1776 = vadd.f32 %v1775, %v1761
        %v1777 = vadd.f32 %v1776, %v1762
        %v1778 = vadd.f32 %v1777, %v1763
        %v1779 = vrot.slane %v1778, 4
        %v1780 = vadd.f32 %v1778, %v1779
        %v1781 = vrot.slane %v1780, 2
        %v1782 = vadd.f32 %v1780, %v1781
        %v1783 = vrot.slane %v1782, 1
        %v1784 = vadd.f32 %v1782, %v1783
        %v1785 = vadd.f32 %v1784, %v1747
        %v1786 = vlaneseq
        %v1787 = vshrl.u32 %v1786, 7
        %v1788 = vsub.s32 6, %v1787
        %v1789 = vrot.slane %v691, %v1788
        %vm1790 = vcmp.eq.s32.totalorder %v696, %v1789
        %vm1791 = vcmp.eq.s32.totalorder %v697, %v1789
        %vm1792 = vcmp.eq.s32.totalorder %v698, %v1789
        %vm1793 = vcmp.eq.s32.totalorder %v699, %v1789
        %vm1794 = vcmp.eq.s32.totalorder %v700, %v1789
        %vm1795 = vcmp.eq.s32.totalorder %v701, %v1789
        %vm1796 = vcmp.eq.s32.totalorder %v702, %v1789
        %vm1797 = vcmp.eq.s32.totalorder %v703, %v1789
        %vm1798 = vcmp.eq.s32.totalorder %v704, %v1789
        %vm1799 = vcmp.eq.s32.totalorder %v705, %v1789
        %vm1800 = vcmp.eq.s32.totalorder %v706, %v1789
        %vm1801 = vcmp.eq.s32.totalorder %v707, %v1789
        %vm1802 = vcmp.eq.s32.totalorder %v708, %v1789
        %vm1803 = vcmp.eq.s32.totalorder %v709, %v1789
        %vm1804 = vcmp.eq.s32.totalorder %v710, %v1789
        %vm1805 = vcmp.eq.s32.totalorder %v711, %v1789
        %v1806 = vsel %vm1790, 1, 0
        %v1807 = vsel %vm1791, 1, 0
        %v1808 = vsel %vm1792, 1, 0
        %v1809 = vsel %vm1793, 1, 0
        %v1810 = vsel %vm1794, 1, 0
        %v1811 = vsel %vm1795, 1, 0
        %v1812 = vsel %vm1796, 1, 0
        %v1813 = vsel %vm1797, 1, 0
        %v1814 = vsel %vm1798, 1, 0
        %v1815 = vsel %vm1799, 1, 0
        %v1816 = vsel %vm1800, 1, 0
        %v1817 = vsel %vm1801, 1, 0
        %v1818 = vsel %vm1802, 1, 0
        %v1819 = vsel %vm1803, 1, 0
        %v1820 = vsel %vm1804, 1, 0
        %v1821 = vsel %vm1805, 1, 0
        %v1822 = vcvt.s32.f32 %v1806
        %v1823 = vcvt.s32.f32 %v1807
        %v1824 = vcvt.s32.f32 %v1808
        %v1825 = vcvt.s32.f32 %v1809
        %v1826 = vcvt.s32.f32 %v1810
        %v1827 = vcvt.s32.f32 %v1811
        %v1828 = vcvt.s32.f32 %v1812
        %v1829 = vcvt.s32.f32 %v1813
        %v1830 = vcvt.s32.f32 %v1814
        %v1831 = vcvt.s32.f32 %v1815
        %v1832 = vcvt.s32.f32 %v1816
        %v1833 = vcvt.s32.f32 %v1817
        %v1834 = vcvt.s32.f32 %v1818
        %v1835 = vcvt.s32.f32 %v1819
        %v1836 = vcvt.s32.f32 %v1820
        %v1837 = vcvt.s32.f32 %v1821
        %v1838 = vlaneseq
        %v1839 = vshrl.u32 %v1838, 7
        %v1840 = vsub.s32 6, %v1839
        %v1841 = vrot.slane %v693, %v1840
        %vm1842 = vcmp.eq.s32.totalorder %v696, %v1841
        %vm1843 = vcmp.eq.s32.totalorder %v697, %v1841
        %vm1844 = vcmp.eq.s32.totalorder %v698, %v1841
        %vm1845 = vcmp.eq.s32.totalorder %v699, %v1841
        %vm1846 = vcmp.eq.s32.totalorder %v700, %v1841
        %vm1847 = vcmp.eq.s32.totalorder %v701, %v1841
        %vm1848 = vcmp.eq.s32.totalorder %v702, %v1841
        %vm1849 = vcmp.eq.s32.totalorder %v703, %v1841
        %vm1850 = vcmp.eq.s32.totalorder %v704, %v1841
        %vm1851 = vcmp.eq.s32.totalorder %v705, %v1841
        %vm1852 = vcmp.eq.s32.totalorder %v706, %v1841
        %vm1853 = vcmp.eq.s32.totalorder %v707, %v1841
        %vm1854 = vcmp.eq.s32.totalorder %v708, %v1841
        %vm1855 = vcmp.eq.s32.totalorder %v709, %v1841
        %vm1856 = vcmp.eq.s32.totalorder %v710, %v1841
        %vm1857 = vcmp.eq.s32.totalorder %v711, %v1841
        %v1858 = vsel %vm1842, 1, 0
        %v1859 = vsel %vm1843, 1, 0
        %v1860 = vsel %vm1844, 1, 0
        %v1861 = vsel %vm1845, 1, 0
        %v1862 = vsel %vm1846, 1, 0
        %v1863 = vsel %vm1847, 1, 0
        %v1864 = vsel %vm1848, 1, 0
        %v1865 = vsel %vm1849, 1, 0
        %v1866 = vsel %vm1850, 1, 0
        %v1867 = vsel %vm1851, 1, 0
        %v1868 = vsel %vm1852, 1, 0
        %v1869 = vsel %vm1853, 1, 0
        %v1870 = vsel %vm1854, 1, 0
        %v1871 = vsel %vm1855, 1, 0
        %v1872 = vsel %vm1856, 1, 0
        %v1873 = vsel %vm1857, 1, 0
        %v1874 = vcvt.s32.f32 %v1858
        %v1875 = vcvt.s32.f32 %v1859
        %v1876 = vcvt.s32.f32 %v1860
        %v1877 = vcvt.s32.f32 %v1861
        %v1878 = vcvt.s32.f32 %v1862
        %v1879 = vcvt.s32.f32 %v1863
        %v1880 = vcvt.s32.f32 %v1864
        %v1881 = vcvt.s32.f32 %v1865
        %v1882 = vcvt.s32.f32 %v1866
        %v1883 = vcvt.s32.f32 %v1867
        %v1884 = vcvt.s32.f32 %v1868
        %v1885 = vcvt.s32.f32 %v1869
        %v1886 = vcvt.s32.f32 %v1870
        %v1887 = vcvt.s32.f32 %v1871
        %v1888 = vcvt.s32.f32 %v1872
        %v1889 = vcvt.s32.f32 %v1873
        %v1890 = vmul.f32 %v1822, %v645
        %v1891 = vmul.f32 %v1823, %v648
        %v1892 = vmul.f32 %v1824, %v651
        %v1893 = vmul.f32 %v1825, %v654
        %v1894 = vmul.f32 %v1826, %v657
        %v1895 = vmul.f32 %v1827, %v660
        %v1896 = vmul.f32 %v1828, %v663
        %v1897 = vmul.f32 %v1829, %v666
        %v1898 = vmul.f32 %v1830, %v669
        %v1899 = vmul.f32 %v1831, %v672
        %v1900 = vmul.f32 %v1832, %v675
        %v1901 = vmul.f32 %v1833, %v678
        %v1902 = vmul.f32 %v1834, %v681
        %v1903 = vmul.f32 %v1835, %v684
        %v1904 = vmul.f32 %v1836, %v687
        %v1905 = vmul.f32 %v1837, %v690
        %v1906 = vadd.f32 %v1890, %v1891
        %v1907 = vadd.f32 %v1906, %v1892
        %v1908 = vadd.f32 %v1907, %v1893
        %v1909 = vadd.f32 %v1908, %v1894
        %v1910 = vadd.f32 %v1909, %v1895
        %v1911 = vadd.f32 %v1910, %v1896
        %v1912 = vadd.f32 %v1911, %v1897
        %v1913 = vadd.f32 %v1912, %v1898
        %v1914 = vadd.f32 %v1913, %v1899
        %v1915 = vadd.f32 %v1914, %v1900
        %v1916 = vadd.f32 %v1915, %v1901
        %v1917 = vadd.f32 %v1916, %v1902
        %v1918 = vadd.f32 %v1917, %v1903
        %v1919 = vadd.f32 %v1918, %v1904
        %v1920 = vadd.f32 %v1919, %v1905
        %v1921 = vrot.slane %v1920, 4
        %v1922 = vadd.f32 %v1920, %v1921
        %v1923 = vrot.slane %v1922, 2
        %v1924 = vadd.f32 %v1922, %v1923
        %v1925 = vrot.slane %v1924, 1
        %v1926 = vadd.f32 %v1924, %v1925
        %v1927 = vmul.f32 %v1874, %v574
        %v1928 = vmul.f32 %v1875, %v577
        %v1929 = vmul.f32 %v1876, %v580
        %v1930 = vmul.f32 %v1877, %v583
        %v1931 = vmul.f32 %v1878, %v586
        %v1932 = vmul.f32 %v1879, %v589
        %v1933 = vmul.f32 %v1880, %v592
        %v1934 = vmul.f32 %v1881, %v595
        %v1935 = vmul.f32 %v1882, %v598
        %v1936 = vmul.f32 %v1883, %v601
        %v1937 = vmul.f32 %v1884, %v604
        %v1938 = vmul.f32 %v1885, %v607
        %v1939 = vmul.f32 %v1886, %v610
        %v1940 = vmul.f32 %v1887, %v613
        %v1941 = vmul.f32 %v1888, %v616
        %v1942 = vmul.f32 %v1889, %v619
        %v1943 = vadd.f32 %v1927, %v1928
        %v1944 = vadd.f32 %v1943, %v1929
        %v1945 = vadd.f32 %v1944, %v1930
        %v1946 = vadd.f32 %v1945, %v1931
        %v1947 = vadd.f32 %v1946, %v1932
        %v1948 = vadd.f32 %v1947, %v1933
        %v1949 = vadd.f32 %v1948, %v1934
        %v1950 = vadd.f32 %v1949, %v1935
        %v1951 = vadd.f32 %v1950, %v1936
        %v1952 = vadd.f32 %v1951, %v1937
        %v1953 = vadd.f32 %v1952, %v1938
        %v1954 = vadd.f32 %v1953, %v1939
        %v1955 = vadd.f32 %v1954, %v1940
        %v1956 = vadd.f32 %v1955, %v1941
        %v1957 = vadd.f32 %v1956, %v1942
        %v1958 = vrot.slane %v1957, 4
        %v1959 = vadd.f32 %v1957, %v1958
        %v1960 = vrot.slane %v1959, 2
        %v1961 = vadd.f32 %v1959, %v1960
        %v1962 = vrot.slane %v1961, 1
        %v1963 = vadd.f32 %v1961, %v1962
        %v1964 = vadd.f32 %v1963, %v1926
        %v1965 = vlaneseq
        %v1966 = vshrl.u32 %v1965, 7
        %v1967 = vsub.s32 7, %v1966
        %v1968 = vrot.slane %v691, %v1967
        %vm1969 = vcmp.eq.s32.totalorder %v696, %v1968
        %vm1970 = vcmp.eq.s32.totalorder %v697, %v1968
        %vm1971 = vcmp.eq.s32.totalorder %v698, %v1968
        %vm1972 = vcmp.eq.s32.totalorder %v699, %v1968
        %vm1973 = vcmp.eq.s32.totalorder %v700, %v1968
        %vm1974 = vcmp.eq.s32.totalorder %v701, %v1968
        %vm1975 = vcmp.eq.s32.totalorder %v702, %v1968
        %vm1976 = vcmp.eq.s32.totalorder %v703, %v1968
        %vm1977 = vcmp.eq.s32.totalorder %v704, %v1968
        %vm1978 = vcmp.eq.s32.totalorder %v705, %v1968
        %vm1979 = vcmp.eq.s32.totalorder %v706, %v1968
        %vm1980 = vcmp.eq.s32.totalorder %v707, %v1968
        %vm1981 = vcmp.eq.s32.totalorder %v708, %v1968
        %vm1982 = vcmp.eq.s32.totalorder %v709, %v1968
        %vm1983 = vcmp.eq.s32.totalorder %v710, %v1968
        %vm1984 = vcmp.eq.s32.totalorder %v711, %v1968
        %v1985 = vsel %vm1969, 1, 0
        %v1986 = vsel %vm1970, 1, 0
        %v1987 = vsel %vm1971, 1, 0
        %v1988 = vsel %vm1972, 1, 0
        %v1989 = vsel %vm1973, 1, 0
        %v1990 = vsel %vm1974, 1, 0
        %v1991 = vsel %vm1975, 1, 0
        %v1992 = vsel %vm1976, 1, 0
        %v1993 = vsel %vm1977, 1, 0
        %v1994 = vsel %vm1978, 1, 0
        %v1995 = vsel %vm1979, 1, 0
        %v1996 = vsel %vm1980, 1, 0
        %v1997 = vsel %vm1981, 1, 0
        %v1998 = vsel %vm1982, 1, 0
        %v1999 = vsel %vm1983, 1, 0
        %v2000 = vsel %vm1984, 1, 0
        %v2001 = vcvt.s32.f32 %v1985
        %v2002 = vcvt.s32.f32 %v1986
        %v2003 = vcvt.s32.f32 %v1987
        %v2004 = vcvt.s32.f32 %v1988
        %v2005 = vcvt.s32.f32 %v1989
        %v2006 = vcvt.s32.f32 %v1990
        %v2007 = vcvt.s32.f32 %v1991
        %v2008 = vcvt.s32.f32 %v1992
        %v2009 = vcvt.s32.f32 %v1993
        %v2010 = vcvt.s32.f32 %v1994
        %v2011 = vcvt.s32.f32 %v1995
        %v2012 = vcvt.s32.f32 %v1996
        %v2013 = vcvt.s32.f32 %v1997
        %v2014 = vcvt.s32.f32 %v1998
        %v2015 = vcvt.s32.f32 %v1999
        %v2016 = vcvt.s32.f32 %v2000
        %v2017 = vlaneseq
        %v2018 = vshrl.u32 %v2017, 7
        %v2019 = vsub.s32 7, %v2018
        %v2020 = vrot.slane %v693, %v2019
        %vm2021 = vcmp.eq.s32.totalorder %v696, %v2020
        %vm2022 = vcmp.eq.s32.totalorder %v697, %v2020
        %vm2023 = vcmp.eq.s32.totalorder %v698, %v2020
        %vm2024 = vcmp.eq.s32.totalorder %v699, %v2020
        %vm2025 = vcmp.eq.s32.totalorder %v700, %v2020
        %vm2026 = vcmp.eq.s32.totalorder %v701, %v2020
        %vm2027 = vcmp.eq.s32.totalorder %v702, %v2020
        %vm2028 = vcmp.eq.s32.totalorder %v703, %v2020
        %vm2029 = vcmp.eq.s32.totalorder %v704, %v2020
        %vm2030 = vcmp.eq.s32.totalorder %v705, %v2020
        %vm2031 = vcmp.eq.s32.totalorder %v706, %v2020
        %vm2032 = vcmp.eq.s32.totalorder %v707, %v2020
        %vm2033 = vcmp.eq.s32.totalorder %v708, %v2020
        %vm2034 = vcmp.eq.s32.totalorder %v709, %v2020
        %vm2035 = vcmp.eq.s32.totalorder %v710, %v2020
        %vm2036 = vcmp.eq.s32.totalorder %v711, %v2020
        %v2037 = vsel %vm2021, 1, 0
        %v2038 = vsel %vm2022, 1, 0
        %v2039 = vsel %vm2023, 1, 0
        %v2040 = vsel %vm2024, 1, 0
        %v2041 = vsel %vm2025, 1, 0
        %v2042 = vsel %vm2026, 1, 0
        %v2043 = vsel %vm2027, 1, 0
        %v2044 = vsel %vm2028, 1, 0
        %v2045 = vsel %vm2029, 1, 0
        %v2046 = vsel %vm2030, 1, 0
        %v2047 = vsel %vm2031, 1, 0
        %v2048 = vsel %vm2032, 1, 0
        %v2049 = vsel %vm2033, 1, 0
        %v2050 = vsel %vm2034, 1, 0
        %v2051 = vsel %vm2035, 1, 0
        %v2052 = vsel %vm2036, 1, 0
        %v2053 = vcvt.s32.f32 %v2037
        %v2054 = vcvt.s32.f32 %v2038
        %v2055 = vcvt.s32.f32 %v2039
        %v2056 = vcvt.s32.f32 %v2040
        %v2057 = vcvt.s32.f32 %v2041
        %v2058 = vcvt.s32.f32 %v2042
        %v2059 = vcvt.s32.f32 %v2043
        %v2060 = vcvt.s32.f32 %v2044
        %v2061 = vcvt.s32.f32 %v2045
        %v2062 = vcvt.s32.f32 %v2046
        %v2063 = vcvt.s32.f32 %v2047
        %v2064 = vcvt.s32.f32 %v2048
        %v2065 = vcvt.s32.f32 %v2049
        %v2066 = vcvt.s32.f32 %v2050
        %v2067 = vcvt.s32.f32 %v2051
        %v2068 = vcvt.s32.f32 %v2052
        %v2069 = vmul.f32 %v2001, %v645
        %v2070 = vmul.f32 %v2002, %v648
        %v2071 = vmul.f32 %v2003, %v651
        %v2072 = vmul.f32 %v2004, %v654
        %v2073 = vmul.f32 %v2005, %v657
        %v2074 = vmul.f32 %v2006, %v660
        %v2075 = vmul.f32 %v2007, %v663
        %v2076 = vmul.f32 %v2008, %v666
        %v2077 = vmul.f32 %v2009, %v669
        %v2078 = vmul.f32 %v2010, %v672
        %v2079 = vmul.f32 %v2011, %v675
        %v2080 = vmul.f32 %v2012, %v678
        %v2081 = vmul.f32 %v2013, %v681
        %v2082 = vmul.f32 %v2014, %v684
        %v2083 = vmul.f32 %v2015, %v687
        %v2084 = vmul.f32 %v2016, %v690
        %v2085 = vadd.f32 %v2069, %v2070
        %v2086 = vadd.f32 %v2085, %v2071
        %v2087 = vadd.f32 %v2086, %v2072
        %v2088 = vadd.f32 %v2087, %v2073
        %v2089 = vadd.f32 %v2088, %v2074
        %v2090 = vadd.f32 %v2089, %v2075
        %v2091 = vadd.f32 %v2090, %v2076
        %v2092 = vadd.f32 %v2091, %v2077
        %v2093 = vadd.f32 %v2092, %v2078
        %v2094 = vadd.f32 %v2093, %v2079
        %v2095 = vadd.f32 %v2094, %v2080
        %v2096 = vadd.f32 %v2095, %v2081
        %v2097 = vadd.f32 %v2096, %v2082
        %v2098 = vadd.f32 %v2097, %v2083
        %v2099 = vadd.f32 %v2098, %v2084
        %v2100 = vrot.slane %v2099, 4
        %v2101 = vadd.f32 %v2099, %v2100
        %v2102 = vrot.slane %v2101, 2
        %v2103 = vadd.f32 %v2101, %v2102
        %v2104 = vrot.slane %v2103, 1
        %v2105 = vadd.f32 %v2103, %v2104
        %v2106 = vmul.f32 %v2053, %v574
        %v2107 = vmul.f32 %v2054, %v577
        %v2108 = vmul.f32 %v2055, %v580
        %v2109 = vmul.f32 %v2056, %v583
        %v2110 = vmul.f32 %v2057, %v586
        %v2111 = vmul.f32 %v2058, %v589
        %v2112 = vmul.f32 %v2059, %v592
        %v2113 = vmul.f32 %v2060, %v595
        %v2114 = vmul.f32 %v2061, %v598
        %v2115 = vmul.f32 %v2062, %v601
        %v2116 = vmul.f32 %v2063, %v604
        %v2117 = vmul.f32 %v2064, %v607
        %v2118 = vmul.f32 %v2065, %v610
        %v2119 = vmul.f32 %v2066, %v613
        %v2120 = vmul.f32 %v2067, %v616
        %v2121 = vmul.f32 %v2068, %v619
        %v2122 = vadd.f32 %v2106, %v2107
        %v2123 = vadd.f32 %v2122, %v2108
        %v2124 = vadd.f32 %v2123, %v2109
        %v2125 = vadd.f32 %v2124, %v2110
        %v2126 = vadd.f32 %v2125, %v2111
        %v2127 = vadd.f32 %v2126, %v2112
        %v2128 = vadd.f32 %v2127, %v2113
        %v2129 = vadd.f32 %v2128, %v2114
        %v2130 = vadd.f32 %v2129, %v2115
        %v2131 = vadd.f32 %v2130, %v2116
        %v2132 = vadd.f32 %v2131, %v2117
        %v2133 = vadd.f32 %v2132, %v2118
        %v2134 = vadd.f32 %v2133, %v2119
        %v2135 = vadd.f32 %v2134, %v2120
        %v2136 = vadd.f32 %v2135, %v2121
        %v2137 = vrot.slane %v2136, 4
        %v2138 = vadd.f32 %v2136, %v2137
        %v2139 = vrot.slane %v2138, 2
        %v2140 = vadd.f32 %v2138, %v2139
        %v2141 = vrot.slane %v2140, 1
        %v2142 = vadd.f32 %v2140, %v2141
        %v2143 = vadd.f32 %v2142, %v2105
        %v2144 = vlaneseq
        %v2145 = vshrl.u32 %v2144, 7
        %v2146 = vsub.s32 0, %v2145
        %v2147 = vrot.slane %v692, %v2146
        %vm2148 = vcmp.eq.s32.totalorder %v696, %v2147
        %vm2149 = vcmp.eq.s32.totalorder %v697, %v2147
        %vm2150 = vcmp.eq.s32.totalorder %v698, %v2147
        %vm2151 = vcmp.eq.s32.totalorder %v699, %v2147
        %vm2152 = vcmp.eq.s32.totalorder %v700, %v2147
        %vm2153 = vcmp.eq.s32.totalorder %v701, %v2147
        %vm2154 = vcmp.eq.s32.totalorder %v702, %v2147
        %vm2155 = vcmp.eq.s32.totalorder %v703, %v2147
        %vm2156 = vcmp.eq.s32.totalorder %v704, %v2147
        %vm2157 = vcmp.eq.s32.totalorder %v705, %v2147
        %vm2158 = vcmp.eq.s32.totalorder %v706, %v2147
        %vm2159 = vcmp.eq.s32.totalorder %v707, %v2147
        %vm2160 = vcmp.eq.s32.totalorder %v708, %v2147
        %vm2161 = vcmp.eq.s32.totalorder %v709, %v2147
        %vm2162 = vcmp.eq.s32.totalorder %v710, %v2147
        %vm2163 = vcmp.eq.s32.totalorder %v711, %v2147
        %v2164 = vsel %vm2148, 1, 0
        %v2165 = vsel %vm2149, 1, 0
        %v2166 = vsel %vm2150, 1, 0
        %v2167 = vsel %vm2151, 1, 0
        %v2168 = vsel %vm2152, 1, 0
        %v2169 = vsel %vm2153, 1, 0
        %v2170 = vsel %vm2154, 1, 0
        %v2171 = vsel %vm2155, 1, 0
        %v2172 = vsel %vm2156, 1, 0
        %v2173 = vsel %vm2157, 1, 0
        %v2174 = vsel %vm2158, 1, 0
        %v2175 = vsel %vm2159, 1, 0
        %v2176 = vsel %vm2160, 1, 0
        %v2177 = vsel %vm2161, 1, 0
        %v2178 = vsel %vm2162, 1, 0
        %v2179 = vsel %vm2163, 1, 0
        %v2180 = vcvt.s32.f32 %v2164
        %v2181 = vcvt.s32.f32 %v2165
        %v2182 = vcvt.s32.f32 %v2166
        %v2183 = vcvt.s32.f32 %v2167
        %v2184 = vcvt.s32.f32 %v2168
        %v2185 = vcvt.s32.f32 %v2169
        %v2186 = vcvt.s32.f32 %v2170
        %v2187 = vcvt.s32.f32 %v2171
        %v2188 = vcvt.s32.f32 %v2172
        %v2189 = vcvt.s32.f32 %v2173
        %v2190 = vcvt.s32.f32 %v2174
        %v2191 = vcvt.s32.f32 %v2175
        %v2192 = vcvt.s32.f32 %v2176
        %v2193 = vcvt.s32.f32 %v2177
        %v2194 = vcvt.s32.f32 %v2178
        %v2195 = vcvt.s32.f32 %v2179
        %v2196 = vlaneseq
        %v2197 = vshrl.u32 %v2196, 7
        %v2198 = vsub.s32 0, %v2197
        %v2199 = vrot.slane %v694, %v2198
        %vm2200 = vcmp.eq.s32.totalorder %v696, %v2199
        %vm2201 = vcmp.eq.s32.totalorder %v697, %v2199
        %vm2202 = vcmp.eq.s32.totalorder %v698, %v2199
        %vm2203 = vcmp.eq.s32.totalorder %v699, %v2199
        %vm2204 = vcmp.eq.s32.totalorder %v700, %v2199
        %vm2205 = vcmp.eq.s32.totalorder %v701, %v2199
        %vm2206 = vcmp.eq.s32.totalorder %v702, %v2199
        %vm2207 = vcmp.eq.s32.totalorder %v703, %v2199
        %vm2208 = vcmp.eq.s32.totalorder %v704, %v2199
        %vm2209 = vcmp.eq.s32.totalorder %v705, %v2199
        %vm2210 = vcmp.eq.s32.totalorder %v706, %v2199
        %vm2211 = vcmp.eq.s32.totalorder %v707, %v2199
        %vm2212 = vcmp.eq.s32.totalorder %v708, %v2199
        %vm2213 = vcmp.eq.s32.totalorder %v709, %v2199
        %vm2214 = vcmp.eq.s32.totalorder %v710, %v2199
        %vm2215 = vcmp.eq.s32.totalorder %v711, %v2199
        %v2216 = vsel %vm2200, 1, 0
        %v2217 = vsel %vm2201, 1, 0
        %v2218 = vsel %vm2202, 1, 0
        %v2219 = vsel %vm2203, 1, 0
        %v2220 = vsel %vm2204, 1, 0
        %v2221 = vsel %vm2205, 1, 0
        %v2222 = vsel %vm2206, 1, 0
        %v2223 = vsel %vm2207, 1, 0
        %v2224 = vsel %vm2208, 1, 0
        %v2225 = vsel %vm2209, 1, 0
        %v2226 = vsel %vm2210, 1, 0
        %v2227 = vsel %vm2211, 1, 0
        %v2228 = vsel %vm2212, 1, 0
        %v2229 = vsel %vm2213, 1, 0
        %v2230 = vsel %vm2214, 1, 0
        %v2231 = vsel %vm2215, 1, 0
        %v2232 = vcvt.s32.f32 %v2216
        %v2233 = vcvt.s32.f32 %v2217
        %v2234 = vcvt.s32.f32 %v2218
        %v2235 = vcvt.s32.f32 %v2219
        %v2236 = vcvt.s32.f32 %v2220
        %v2237 = vcvt.s32.f32 %v2221
        %v2238 = vcvt.s32.f32 %v2222
        %v2239 = vcvt.s32.f32 %v2223
        %v2240 = vcvt.s32.f32 %v2224
        %v2241 = vcvt.s32.f32 %v2225
        %v2242 = vcvt.s32.f32 %v2226
        %v2243 = vcvt.s32.f32 %v2227
        %v2244 = vcvt.s32.f32 %v2228
        %v2245 = vcvt.s32.f32 %v2229
        %v2246 = vcvt.s32.f32 %v2230
        %v2247 = vcvt.s32.f32 %v2231
        %v2248 = vmul.f32 %v2180, %v645
        %v2249 = vmul.f32 %v2181, %v648
        %v2250 = vmul.f32 %v2182, %v651
        %v2251 = vmul.f32 %v2183, %v654
        %v2252 = vmul.f32 %v2184, %v657
        %v2253 = vmul.f32 %v2185, %v660
        %v2254 = vmul.f32 %v2186, %v663
        %v2255 = vmul.f32 %v2187, %v666
        %v2256 = vmul.f32 %v2188, %v669
        %v2257 = vmul.f32 %v2189, %v672
        %v2258 = vmul.f32 %v2190, %v675
        %v2259 = vmul.f32 %v2191, %v678
        %v2260 = vmul.f32 %v2192, %v681
        %v2261 = vmul.f32 %v2193, %v684
        %v2262 = vmul.f32 %v2194, %v687
        %v2263 = vmul.f32 %v2195, %v690
        %v2264 = vadd.f32 %v2248, %v2249
        %v2265 = vadd.f32 %v2264, %v2250
        %v2266 = vadd.f32 %v2265, %v2251
        %v2267 = vadd.f32 %v2266, %v2252
        %v2268 = vadd.f32 %v2267, %v2253
        %v2269 = vadd.f32 %v2268, %v2254
        %v2270 = vadd.f32 %v2269, %v2255
        %v2271 = vadd.f32 %v2270, %v2256
        %v2272 = vadd.f32 %v2271, %v2257
        %v2273 = vadd.f32 %v2272, %v2258
        %v2274 = vadd.f32 %v2273, %v2259
        %v2275 = vadd.f32 %v2274, %v2260
        %v2276 = vadd.f32 %v2275, %v2261
        %v2277 = vadd.f32 %v2276, %v2262
        %v2278 = vadd.f32 %v2277, %v2263
        %v2279 = vrot.slane %v2278, 4
        %v2280 = vadd.f32 %v2278, %v2279
        %v2281 = vrot.slane %v2280, 2
        %v2282 = vadd.f32 %v2280, %v2281
        %v2283 = vrot.slane %v2282, 1
        %v2284 = vadd.f32 %v2282, %v2283
        %v2285 = vmul.f32 %v2232, %v574
        %v2286 = vmul.f32 %v2233, %v577
        %v2287 = vmul.f32 %v2234, %v580
        %v2288 = vmul.f32 %v2235, %v583
        %v2289 = vmul.f32 %v2236, %v586
        %v2290 = vmul.f32 %v2237, %v589
        %v2291 = vmul.f32 %v2238, %v592
        %v2292 = vmul.f32 %v2239, %v595
        %v2293 = vmul.f32 %v2240, %v598
        %v2294 = vmul.f32 %v2241, %v601
        %v2295 = vmul.f32 %v2242, %v604
        %v2296 = vmul.f32 %v2243, %v607
        %v2297 = vmul.f32 %v2244, %v610
        %v2298 = vmul.f32 %v2245, %v613
        %v2299 = vmul.f32 %v2246, %v616
        %v2300 = vmul.f32 %v2247, %v619
        %v2301 = vadd.f32 %v2285, %v2286
        %v2302 = vadd.f32 %v2301, %v2287
        %v2303 = vadd.f32 %v2302, %v2288
        %v2304 = vadd.f32 %v2303, %v2289
        %v2305 = vadd.f32 %v2304, %v2290
        %v2306 = vadd.f32 %v2305, %v2291
        %v2307 = vadd.f32 %v2306, %v2292
        %v2308 = vadd.f32 %v2307, %v2293
        %v2309 = vadd.f32 %v2308, %v2294
        %v2310 = vadd.f32 %v2309, %v2295
        %v2311 = vadd.f32 %v2310, %v2296
        %v2312 = vadd.f32 %v2311, %v2297
        %v2313 = vadd.f32 %v2312, %v2298
        %v2314 = vadd.f32 %v2313, %v2299
        %v2315 = vadd.f32 %v2314, %v2300
        %v2316 = vrot.slane %v2315, 4
        %v2317 = vadd.f32 %v2315, %v2316
        %v2318 = vrot.slane %v2317, 2
        %v2319 = vadd.f32 %v2317, %v2318
        %v2320 = vrot.slane %v2319, 1
        %v2321 = vadd.f32 %v2319, %v2320
        %v2322 = vadd.f32 %v2321, %v2284
        %vm2323 = vcmask 1040384
        %v2324 = vsel %vm2323, %v890, %v1069
        %vm2325 = vcmask 1041408
        %v2326 = vsel %vm2325, %v2324, %v1248
        %vm2327 = vcmask 1042432
        %v2328 = vsel %vm2327, %v2326, %v1427
        %v2329 = vsel %vm383, %v2328, %v1606
        %vm2330 = vcmask 1044480
        %v2331 = vsel %vm2330, %v2329, %v1785
        %vm2332 = vcmask 1045504
        %v2333 = vsel %vm2332, %v2331, %v1964
        %vm2334 = vcmask 1046528
        %v2335 = vsel %vm2334, %v2333, %v2143
        %vm2336 = vcmp.ge.f32.partialorder %v2335, 0.0
        %vm2337 = vcmp.ge.f32.partialorder %v2322, 0.0
        %v2338 = vmul.f32 %v2335, 0.2
        %v2339 = vmul.f32 %v2322, 0.2
        %v2340 = vsel %vm2336, %v2335, %v2338
        %v2341 = vsel %vm2337, %v2322, %v2339
        %v2342 = vsel %vm2323, %v2341, -inf
        %v2343 = vmax.f32 %v2340, %v2342
        %v2344 = vrot.slane %v2343, 4
        %v2345 = vmax.f32 %v2343, %v2344
        %v2346 = vrot.slane %v2345, 2
        %v2347 = vmax.f32 %v2345, %v2346
        %v2348 = vrot.slane %v2347, 1
        %v2349 = vmax.f32 %v2347, %v2348
        %v2350 = vsub.f32 %v2340, %v2349
        %v2351 = vsub.f32 %v2341, %v2349
        %v2352 = vmul.f32 %v2350, 1.442695
        %v2353 = vpow.pop %v2352
        %v2354 = vmul.f32 %v2351, 1.442695
        %v2355 = vpow.pop %v2354
        %v2356 = vsel %vm2323, %v2355, 0.0
        %v2357 = vadd.f32 %v2353, %v2356
        %v2358 = vrot.slane %v2357, 4
        %v2359 = vadd.f32 %v2357, %v2358
        %v2360 = vrot.slane %v2359, 2
        %v2361 = vadd.f32 %v2359, %v2360
        %v2362 = vrot.slane %v2361, 1
        %v2363 = vadd.f32 %v2361, %v2362
        %v2364 = vrcp.pop %v2363
        %v2365 = vlaneseq
        %v2366 = vshrl.u32 %v2365, 7
        %v2367 = vsub.s32 0, %v2366
        %v2368 = vrot.slane %v2353, %v2367
        %v2369 = vmul.f32 %v748, %v2368
        %v2370 = vmul.f32 %v749, %v2368
        %v2371 = vmul.f32 %v750, %v2368
        %v2372 = vmul.f32 %v751, %v2368
        %v2373 = vmul.f32 %v752, %v2368
        %v2374 = vmul.f32 %v753, %v2368
        %v2375 = vmul.f32 %v754, %v2368
        %v2376 = vmul.f32 %v755, %v2368
        %v2377 = vmul.f32 %v756, %v2368
        %v2378 = vmul.f32 %v757, %v2368
        %v2379 = vmul.f32 %v758, %v2368
        %v2380 = vmul.f32 %v759, %v2368
        %v2381 = vmul.f32 %v760, %v2368
        %v2382 = vmul.f32 %v761, %v2368
        %v2383 = vmul.f32 %v762, %v2368
        %v2384 = vmul.f32 %v763, %v2368
        %v2385 = vadd.f32 %v2369, 0.0
        %v2386 = vadd.f32 %v2370, 0.0
        %v2387 = vadd.f32 %v2371, 0.0
        %v2388 = vadd.f32 %v2372, 0.0
        %v2389 = vadd.f32 %v2373, 0.0
        %v2390 = vadd.f32 %v2374, 0.0
        %v2391 = vadd.f32 %v2375, 0.0
        %v2392 = vadd.f32 %v2376, 0.0
        %v2393 = vadd.f32 %v2377, 0.0
        %v2394 = vadd.f32 %v2378, 0.0
        %v2395 = vadd.f32 %v2379, 0.0
        %v2396 = vadd.f32 %v2380, 0.0
        %v2397 = vadd.f32 %v2381, 0.0
        %v2398 = vadd.f32 %v2382, 0.0
        %v2399 = vadd.f32 %v2383, 0.0
        %v2400 = vadd.f32 %v2384, 0.0
        %v2401 = vlaneseq
        %v2402 = vshrl.u32 %v2401, 7
        %v2403 = vsub.s32 1, %v2402
        %v2404 = vrot.slane %v2353, %v2403
        %v2405 = vmul.f32 %v927, %v2404
        %v2406 = vmul.f32 %v928, %v2404
        %v2407 = vmul.f32 %v929, %v2404
        %v2408 = vmul.f32 %v930, %v2404
        %v2409 = vmul.f32 %v931, %v2404
        %v2410 = vmul.f32 %v932, %v2404
        %v2411 = vmul.f32 %v933, %v2404
        %v2412 = vmul.f32 %v934, %v2404
        %v2413 = vmul.f32 %v935, %v2404
        %v2414 = vmul.f32 %v936, %v2404
        %v2415 = vmul.f32 %v937, %v2404
        %v2416 = vmul.f32 %v938, %v2404
        %v2417 = vmul.f32 %v939, %v2404
        %v2418 = vmul.f32 %v940, %v2404
        %v2419 = vmul.f32 %v941, %v2404
        %v2420 = vmul.f32 %v942, %v2404
        %v2421 = vadd.f32 %v2385, %v2405
        %v2422 = vadd.f32 %v2386, %v2406
        %v2423 = vadd.f32 %v2387, %v2407
        %v2424 = vadd.f32 %v2388, %v2408
        %v2425 = vadd.f32 %v2389, %v2409
        %v2426 = vadd.f32 %v2390, %v2410
        %v2427 = vadd.f32 %v2391, %v2411
        %v2428 = vadd.f32 %v2392, %v2412
        %v2429 = vadd.f32 %v2393, %v2413
        %v2430 = vadd.f32 %v2394, %v2414
        %v2431 = vadd.f32 %v2395, %v2415
        %v2432 = vadd.f32 %v2396, %v2416
        %v2433 = vadd.f32 %v2397, %v2417
        %v2434 = vadd.f32 %v2398, %v2418
        %v2435 = vadd.f32 %v2399, %v2419
        %v2436 = vadd.f32 %v2400, %v2420
        %v2437 = vlaneseq
        %v2438 = vshrl.u32 %v2437, 7
        %v2439 = vsub.s32 2, %v2438
        %v2440 = vrot.slane %v2353, %v2439
        %v2441 = vmul.f32 %v1106, %v2440
        %v2442 = vmul.f32 %v1107, %v2440
        %v2443 = vmul.f32 %v1108, %v2440
        %v2444 = vmul.f32 %v1109, %v2440
        %v2445 = vmul.f32 %v1110, %v2440
        %v2446 = vmul.f32 %v1111, %v2440
        %v2447 = vmul.f32 %v1112, %v2440
        %v2448 = vmul.f32 %v1113, %v2440
        %v2449 = vmul.f32 %v1114, %v2440
        %v2450 = vmul.f32 %v1115, %v2440
        %v2451 = vmul.f32 %v1116, %v2440
        %v2452 = vmul.f32 %v1117, %v2440
        %v2453 = vmul.f32 %v1118, %v2440
        %v2454 = vmul.f32 %v1119, %v2440
        %v2455 = vmul.f32 %v1120, %v2440
        %v2456 = vmul.f32 %v1121, %v2440
        %v2457 = vadd.f32 %v2421, %v2441
        %v2458 = vadd.f32 %v2422, %v2442
        %v2459 = vadd.f32 %v2423, %v2443
        %v2460 = vadd.f32 %v2424, %v2444
        %v2461 = vadd.f32 %v2425, %v2445
        %v2462 = vadd.f32 %v2426, %v2446
        %v2463 = vadd.f32 %v2427, %v2447
        %v2464 = vadd.f32 %v2428, %v2448
        %v2465 = vadd.f32 %v2429, %v2449
        %v2466 = vadd.f32 %v2430, %v2450
        %v2467 = vadd.f32 %v2431, %v2451
        %v2468 = vadd.f32 %v2432, %v2452
        %v2469 = vadd.f32 %v2433, %v2453
        %v2470 = vadd.f32 %v2434, %v2454
        %v2471 = vadd.f32 %v2435, %v2455
        %v2472 = vadd.f32 %v2436, %v2456
        %v2473 = vlaneseq
        %v2474 = vshrl.u32 %v2473, 7
        %v2475 = vsub.s32 3, %v2474
        %v2476 = vrot.slane %v2353, %v2475
        %v2477 = vmul.f32 %v1285, %v2476
        %v2478 = vmul.f32 %v1286, %v2476
        %v2479 = vmul.f32 %v1287, %v2476
        %v2480 = vmul.f32 %v1288, %v2476
        %v2481 = vmul.f32 %v1289, %v2476
        %v2482 = vmul.f32 %v1290, %v2476
        %v2483 = vmul.f32 %v1291, %v2476
        %v2484 = vmul.f32 %v1292, %v2476
        %v2485 = vmul.f32 %v1293, %v2476
        %v2486 = vmul.f32 %v1294, %v2476
        %v2487 = vmul.f32 %v1295, %v2476
        %v2488 = vmul.f32 %v1296, %v2476
        %v2489 = vmul.f32 %v1297, %v2476
        %v2490 = vmul.f32 %v1298, %v2476
        %v2491 = vmul.f32 %v1299, %v2476
        %v2492 = vmul.f32 %v1300, %v2476
        %v2493 = vadd.f32 %v2457, %v2477
        %v2494 = vadd.f32 %v2458, %v2478
        %v2495 = vadd.f32 %v2459, %v2479
        %v2496 = vadd.f32 %v2460, %v2480
        %v2497 = vadd.f32 %v2461, %v2481
        %v2498 = vadd.f32 %v2462, %v2482
        %v2499 = vadd.f32 %v2463, %v2483
        %v2500 = vadd.f32 %v2464, %v2484
        %v2501 = vadd.f32 %v2465, %v2485
        %v2502 = vadd.f32 %v2466, %v2486
        %v2503 = vadd.f32 %v2467, %v2487
        %v2504 = vadd.f32 %v2468, %v2488
        %v2505 = vadd.f32 %v2469, %v2489
        %v2506 = vadd.f32 %v2470, %v2490
        %v2507 = vadd.f32 %v2471, %v2491
        %v2508 = vadd.f32 %v2472, %v2492
        %v2509 = vlaneseq
        %v2510 = vshrl.u32 %v2509, 7
        %v2511 = vsub.s32 4, %v2510
        %v2512 = vrot.slane %v2353, %v2511
        %v2513 = vmul.f32 %v1464, %v2512
        %v2514 = vmul.f32 %v1465, %v2512
        %v2515 = vmul.f32 %v1466, %v2512
        %v2516 = vmul.f32 %v1467, %v2512
        %v2517 = vmul.f32 %v1468, %v2512
        %v2518 = vmul.f32 %v1469, %v2512
        %v2519 = vmul.f32 %v1470, %v2512
        %v2520 = vmul.f32 %v1471, %v2512
        %v2521 = vmul.f32 %v1472, %v2512
        %v2522 = vmul.f32 %v1473, %v2512
        %v2523 = vmul.f32 %v1474, %v2512
        %v2524 = vmul.f32 %v1475, %v2512
        %v2525 = vmul.f32 %v1476, %v2512
        %v2526 = vmul.f32 %v1477, %v2512
        %v2527 = vmul.f32 %v1478, %v2512
        %v2528 = vmul.f32 %v1479, %v2512
        %v2529 = vadd.f32 %v2493, %v2513
        %v2530 = vadd.f32 %v2494, %v2514
        %v2531 = vadd.f32 %v2495, %v2515
        %v2532 = vadd.f32 %v2496, %v2516
        %v2533 = vadd.f32 %v2497, %v2517
        %v2534 = vadd.f32 %v2498, %v2518
        %v2535 = vadd.f32 %v2499, %v2519
        %v2536 = vadd.f32 %v2500, %v2520
        %v2537 = vadd.f32 %v2501, %v2521
        %v2538 = vadd.f32 %v2502, %v2522
        %v2539 = vadd.f32 %v2503, %v2523
        %v2540 = vadd.f32 %v2504, %v2524
        %v2541 = vadd.f32 %v2505, %v2525
        %v2542 = vadd.f32 %v2506, %v2526
        %v2543 = vadd.f32 %v2507, %v2527
        %v2544 = vadd.f32 %v2508, %v2528
        %v2545 = vlaneseq
        %v2546 = vshrl.u32 %v2545, 7
        %v2547 = vsub.s32 5, %v2546
        %v2548 = vrot.slane %v2353, %v2547
        %v2549 = vmul.f32 %v1643, %v2548
        %v2550 = vmul.f32 %v1644, %v2548
        %v2551 = vmul.f32 %v1645, %v2548
        %v2552 = vmul.f32 %v1646, %v2548
        %v2553 = vmul.f32 %v1647, %v2548
        %v2554 = vmul.f32 %v1648, %v2548
        %v2555 = vmul.f32 %v1649, %v2548
        %v2556 = vmul.f32 %v1650, %v2548
        %v2557 = vmul.f32 %v1651, %v2548
        %v2558 = vmul.f32 %v1652, %v2548
        %v2559 = vmul.f32 %v1653, %v2548
        %v2560 = vmul.f32 %v1654, %v2548
        %v2561 = vmul.f32 %v1655, %v2548
        %v2562 = vmul.f32 %v1656, %v2548
        %v2563 = vmul.f32 %v1657, %v2548
        %v2564 = vmul.f32 %v1658, %v2548
        %v2565 = vadd.f32 %v2529, %v2549
        %v2566 = vadd.f32 %v2530, %v2550
        %v2567 = vadd.f32 %v2531, %v2551
        %v2568 = vadd.f32 %v2532, %v2552
        %v2569 = vadd.f32 %v2533, %v2553
        %v2570 = vadd.f32 %v2534, %v2554
        %v2571 = vadd.f32 %v2535, %v2555
        %v2572 = vadd.f32 %v2536, %v2556
        %v2573 = vadd.f32 %v2537, %v2557
        %v2574 = vadd.f32 %v2538, %v2558
        %v2575 = vadd.f32 %v2539, %v2559
        %v2576 = vadd.f32 %v2540, %v2560
        %v2577 = vadd.f32 %v2541, %v2561
        %v2578 = vadd.f32 %v2542, %v2562
        %v2579 = vadd.f32 %v2543, %v2563
        %v2580 = vadd.f32 %v2544, %v2564
        %v2581 = vlaneseq
        %v2582 = vshrl.u32 %v2581, 7
        %v2583 = vsub.s32 6, %v2582
        %v2584 = vrot.slane %v2353, %v2583
        %v2585 = vmul.f32 %v1822, %v2584
        %v2586 = vmul.f32 %v1823, %v2584
        %v2587 = vmul.f32 %v1824, %v2584
        %v2588 = vmul.f32 %v1825, %v2584
        %v2589 = vmul.f32 %v1826, %v2584
        %v2590 = vmul.f32 %v1827, %v2584
        %v2591 = vmul.f32 %v1828, %v2584
        %v2592 = vmul.f32 %v1829, %v2584
        %v2593 = vmul.f32 %v1830, %v2584
        %v2594 = vmul.f32 %v1831, %v2584
        %v2595 = vmul.f32 %v1832, %v2584
        %v2596 = vmul.f32 %v1833, %v2584
        %v2597 = vmul.f32 %v1834, %v2584
        %v2598 = vmul.f32 %v1835, %v2584
        %v2599 = vmul.f32 %v1836, %v2584
        %v2600 = vmul.f32 %v1837, %v2584
        %v2601 = vadd.f32 %v2565, %v2585
        %v2602 = vadd.f32 %v2566, %v2586
        %v2603 = vadd.f32 %v2567, %v2587
        %v2604 = vadd.f32 %v2568, %v2588
        %v2605 = vadd.f32 %v2569, %v2589
        %v2606 = vadd.f32 %v2570, %v2590
        %v2607 = vadd.f32 %v2571, %v2591
        %v2608 = vadd.f32 %v2572, %v2592
        %v2609 = vadd.f32 %v2573, %v2593
        %v2610 = vadd.f32 %v2574, %v2594
        %v2611 = vadd.f32 %v2575, %v2595
        %v2612 = vadd.f32 %v2576, %v2596
        %v2613 = vadd.f32 %v2577, %v2597
        %v2614 = vadd.f32 %v2578, %v2598
        %v2615 = vadd.f32 %v2579, %v2599
        %v2616 = vadd.f32 %v2580, %v2600
        %v2617 = vlaneseq
        %v2618 = vshrl.u32 %v2617, 7
        %v2619 = vsub.s32 7, %v2618
        %v2620 = vrot.slane %v2353, %v2619
        %v2621 = vmul.f32 %v2001, %v2620
        %v2622 = vmul.f32 %v2002, %v2620
        %v2623 = vmul.f32 %v2003, %v2620
        %v2624 = vmul.f32 %v2004, %v2620
        %v2625 = vmul.f32 %v2005, %v2620
        %v2626 = vmul.f32 %v2006, %v2620
        %v2627 = vmul.f32 %v2007, %v2620
        %v2628 = vmul.f32 %v2008, %v2620
        %v2629 = vmul.f32 %v2009, %v2620
        %v2630 = vmul.f32 %v2010, %v2620
        %v2631 = vmul.f32 %v2011, %v2620
        %v2632 = vmul.f32 %v2012, %v2620
        %v2633 = vmul.f32 %v2013, %v2620
        %v2634 = vmul.f32 %v2014, %v2620
        %v2635 = vmul.f32 %v2015, %v2620
        %v2636 = vmul.f32 %v2016, %v2620
        %v2637 = vadd.f32 %v2601, %v2621
        %v2638 = vadd.f32 %v2602, %v2622
        %v2639 = vadd.f32 %v2603, %v2623
        %v2640 = vadd.f32 %v2604, %v2624
        %v2641 = vadd.f32 %v2605, %v2625
        %v2642 = vadd.f32 %v2606, %v2626
        %v2643 = vadd.f32 %v2607, %v2627
        %v2644 = vadd.f32 %v2608, %v2628
        %v2645 = vadd.f32 %v2609, %v2629
        %v2646 = vadd.f32 %v2610, %v2630
        %v2647 = vadd.f32 %v2611, %v2631
        %v2648 = vadd.f32 %v2612, %v2632
        %v2649 = vadd.f32 %v2613, %v2633
        %v2650 = vadd.f32 %v2614, %v2634
        %v2651 = vadd.f32 %v2615, %v2635
        %v2652 = vadd.f32 %v2616, %v2636
        %v2653 = vlaneseq
        %v2654 = vshrl.u32 %v2653, 7
        %v2655 = vsub.s32 0, %v2654
        %v2656 = vrot.slane %v2355, %v2655
        %v2657 = vmul.f32 %v2180, %v2656
        %v2658 = vmul.f32 %v2181, %v2656
        %v2659 = vmul.f32 %v2182, %v2656
        %v2660 = vmul.f32 %v2183, %v2656
        %v2661 = vmul.f32 %v2184, %v2656
        %v2662 = vmul.f32 %v2185, %v2656
        %v2663 = vmul.f32 %v2186, %v2656
        %v2664 = vmul.f32 %v2187, %v2656
        %v2665 = vmul.f32 %v2188, %v2656
        %v2666 = vmul.f32 %v2189, %v2656
        %v2667 = vmul.f32 %v2190, %v2656
        %v2668 = vmul.f32 %v2191, %v2656
        %v2669 = vmul.f32 %v2192, %v2656
        %v2670 = vmul.f32 %v2193, %v2656
        %v2671 = vmul.f32 %v2194, %v2656
        %v2672 = vmul.f32 %v2195, %v2656
        %v2673 = vadd.f32 %v2637, %v2657
        %v2674 = vadd.f32 %v2638, %v2658
        %v2675 = vadd.f32 %v2639, %v2659
        %v2676 = vadd.f32 %v2640, %v2660
        %v2677 = vadd.f32 %v2641, %v2661
        %v2678 = vadd.f32 %v2642, %v2662
        %v2679 = vadd.f32 %v2643, %v2663
        %v2680 = vadd.f32 %v2644, %v2664
        %v2681 = vadd.f32 %v2645, %v2665
        %v2682 = vadd.f32 %v2646, %v2666
        %v2683 = vadd.f32 %v2647, %v2667
        %v2684 = vadd.f32 %v2648, %v2668
        %v2685 = vadd.f32 %v2649, %v2669
        %v2686 = vadd.f32 %v2650, %v2670
        %v2687 = vadd.f32 %v2651, %v2671
        %v2688 = vadd.f32 %v2652, %v2672
        %2689 = vxpose.xlu0.b32.start [1/16] %v532, 128
        %2690 = vxpose.xlu0.b32.cont [2/16] %v533, 128
        %2691 = vxpose.xlu0.b32.cont [3/16] %v534, 128
        %2692 = vxpose.xlu0.b32.cont [4/16] %v535, 128
        %2693 = vxpose.xlu0.b32.cont [5/16] %v536, 128
        %2694 = vxpose.xlu0.b32.cont [6/16] %v537, 128
        %2695 = vxpose.xlu0.b32.cont [7/16] %v538, 128
        %2696 = vxpose.xlu0.b32.cont [8/16] %v539, 128
        %2697 = vxpose.xlu0.b32.cont [9/16] %v540, 128
        %2698 = vxpose.xlu0.b32.cont [10/16] %v541, 128
        %2699 = vxpose.xlu0.b32.cont [11/16] %v542, 128
        %2700 = vxpose.xlu0.b32.cont [12/16] %v543, 128
        %2701 = vxpose.xlu0.b32.cont [13/16] %v544, 128
        %2702 = vxpose.xlu0.b32.cont [14/16] %v545, 128
        %2703 = vxpose.xlu0.b32.cont [15/16] %v546, 128
        %2704 = vxpose.xlu0.b32.end [16/16] %v547, 128
        %v2705 = vpop.trf.xlu0
        %v2706 = vpop.trf.xlu0
        %v2707 = vpop.trf.xlu0
        %v2708 = vpop.trf.xlu0
        %v2709 = vpop.trf.xlu0
        %v2710 = vpop.trf.xlu0
        %v2711 = vpop.trf.xlu0
        %v2712 = vpop.trf.xlu0
        %v2713 = vpop.trf.xlu0
        %v2714 = vpop.trf.xlu0
        %v2715 = vpop.trf.xlu0
        %v2716 = vpop.trf.xlu0
        %v2717 = vpop.trf.xlu0
        %v2718 = vpop.trf.xlu0
        %v2719 = vpop.trf.xlu0
        %v2720 = vpop.trf.xlu0
        %2721 = vmatprep.subr.mxu0 0.0
        %2722 = vmatpush1.msra.mxu0 %v2688
        %2723 = vmatprep.subr.mxu0 0.0
        %2724 = vmatpush1.msra.mxu0 %v2687
        %2725 = vmatprep.subr.mxu0 0.0
        %2726 = vmatpush1.msra.mxu0 %v2686
        %2727 = vmatprep.subr.mxu0 0.0
        %2728 = vmatpush1.msra.mxu0 %v2685
        %2729 = vmatprep.subr.mxu0 0.0
        %2730 = vmatpush1.msra.mxu0 %v2684
        %2731 = vmatprep.subr.mxu0 0.0
        %2732 = vmatpush1.msra.mxu0 %v2683
        %2733 = vmatprep.subr.mxu0 0.0
        %2734 = vmatpush1.msra.mxu0 %v2682
        %2735 = vmatprep.subr.mxu0 0.0
        %2736 = vmatpush1.msra.mxu0 %v2681
        %2737 = vmatprep.subr.mxu0 0.0
        %2738 = vmatpush1.msra.mxu0 %v2680
        %2739 = vmatprep.subr.mxu0 0.0
        %2740 = vmatpush1.msra.mxu0 %v2679
        %2741 = vmatprep.subr.mxu0 0.0
        %2742 = vmatpush1.msra.mxu0 %v2678
        %2743 = vmatprep.subr.mxu0 0.0
        %2744 = vmatpush1.msra.mxu0 %v2677
        %2745 = vmatprep.subr.mxu0 0.0
        %2746 = vmatpush1.msra.mxu0 %v2676
        %2747 = vmatprep.subr.mxu0 0.0
        %2748 = vmatpush1.msra.mxu0 %v2675
        %2749 = vmatprep.subr.mxu0 0.0
        %2750 = vmatpush1.msra.mxu0 %v2674
        %2751 = vmatprep.subr.mxu0 0.0
        %2752 = vmatpush1.msra.mxu0 %v2673
        %2753 = vmatprep.subr.mxu0 0.0
        %2754 = vmatpush2.msra.mxu0 0.0
        %2755 = vmatprep.subr.mxu0 0.0
        %2756 = vmatpush2.msra.mxu0 0.0
        %2757 = vmatprep.subr.mxu0 0.0
        %2758 = vmatpush2.msra.mxu0 0.0
        %2759 = vmatprep.subr.mxu0 0.0
        %2760 = vmatpush2.msra.mxu0 0.0
        %2761 = vmatprep.subr.mxu0 0.0
        %2762 = vmatpush2.msra.mxu0 0.0
        %2763 = vmatprep.subr.mxu0 0.0
        %2764 = vmatpush2.msra.mxu0 0.0
        %2765 = vmatprep.subr.mxu0 0.0
        %2766 = vmatpush2.msra.mxu0 0.0
        %2767 = vmatprep.subr.mxu0 0.0
        %2768 = vmatpush2.msra.mxu0 0.0
        %2769 = vmatprep.subr.mxu0 0.0
        %2770 = vmatpush2.msra.mxu0 0.0
        %2771 = vmatprep.subr.mxu0 0.0
        %2772 = vmatpush2.msra.mxu0 0.0
        %2773 = vmatprep.subr.mxu0 0.0
        %2774 = vmatpush2.msra.mxu0 0.0
        %2775 = vmatprep.subr.mxu0 0.0
        %2776 = vmatpush2.msra.mxu0 0.0
        %2777 = vmatprep.subr.mxu0 0.0
        %2778 = vmatpush2.msra.mxu0 0.0
        %2779 = vmatprep.subr.mxu0 0.0
        %2780 = vmatpush2.msra.mxu0 0.0
        %2781 = vmatprep.subr.mxu0 0.0
        %2782 = vmatpush2.msra.mxu0 0.0
        %2783 = vmatprep.subr.mxu0 0.0
        %2784 = vmatpush2.msra.mxu0 0.0
        %2785 = vmatprep.mubr.f32.mxu0 0.0
        %2786 = vmatmul.mubr.f32.gmra.mxu0 %v2705
        %v2787 = vpop.f32.mrf.mxu0
        %v2788 = vadd.f32 0.0, %v2787
        %v2789 = vpop.f32.mrf.mxu0
        %2790 = vdwg.mxu0
        %v2791 = vmul.f32 %v2788, %v2364
        %v2792 = vld [vmem:[%s6] sm:$0xff]
        %2794 = vset.pattern.permute.xlu0 0
        %2795 = vperm.xlu0 %2794, %v2792
        %v2796 = vpop.permute.xlu0 %2795
        %v2798 = vadd.f32 %v2791, %v2796
        %2799 = vst [vmem:[%s301] sm:$0xff] %v2798
        %s2800 = sand.u32 %s191, 1
        %s2801 = scalar_lea.sflag [#allocation3], %s2800
        %s2802 = sand.u32 %s191, 1
        %s2803 = smul.addr %s2802, 8
        %s2804 = scalar_lea.vmem [#allocation2], %s2803
        // Predicated region
        $region49: #{tpu_custom_call.1} parent=47 // pred_check
          %p2805 = pneg %p201
        $region50: #{tpu_custom_call.1} parent=47 // pred_check_branch
          %2807 = sbr.rel (%p2805) target = $region52
        $region51: #{tpu_custom_call.1} parent=47 // pred_region
          %s2809 = ssub.s32 128, 128
          %2810 = vsyncadd %s2801, %s2809
          %s2811 = smul.addr %s21, 128
          %s2812 = scalar_lea.hbm %s7, %s2811
          %s2814 = sshll.u32 %s2804, 4
          %s2815 = int_to_ptr.vmem [resolvable:$true] %s2814
          %2817 = dma.vmem_to_hbm [thread:$0]  %s2815, 128, %s2812, %s2801
        $region52: #{tpu_custom_call.1} parent=47 // pred_fallthru
          _
      $region48: #{tpu_custom_call.1} parent=5 // pred_fallthru
        _
      %p2818 = scmp.le.s32.totalorder 2, %s16
      // Predicated region
      $region53: #{tpu_custom_call.1} parent=5 // pred_check
        %p2819 = pneg %p2818
      $region54: #{tpu_custom_call.1} parent=5 // pred_check_branch
        %2821 = sbr.rel (%p2819) target = $region56
      $region55: #{tpu_custom_call.1} parent=5 // pred_region
        %s2822 = ssub.s32 %s16, 2
        // Predicated region
        $region57: #{tpu_custom_call.1} parent=55 // pred_check
          %p2823 = pneg %p207
        $region58: #{tpu_custom_call.1} parent=55 // pred_check_branch
          %2825 = sbr.rel (%p2823) target = $region60
        $region59: #{tpu_custom_call.1} parent=55 // pred_region
          %s2826 = sand.u32 %s192, 1
          %s2827 = scalar_lea.sflag [#allocation3], %s2826
          %s2828 = sand.u32 %s192, 1
          %s2829 = smul.addr %s2828, 8
          %s2830 = scalar_lea.vmem [#allocation2], %s2829
          %2831 = dma.done %s2827, 128
        $region60: #{tpu_custom_call.1} parent=55 // pred_fallthru
          _
      $region56: #{tpu_custom_call.1} parent=5 // pred_fallthru
        _
    $region6: #{tpu_custom_call.1} parent=1 // loop_footer
      %s20 = sadd.s32 1, %s16
    $region7: #{tpu_custom_call.1} parent=1 // loop_footer_branch
      %15 = sbr.rel target = $region3
    $region8: #{tpu_custom_call.1} parent=1 // loop_exit
      _
    %2832 = vsyncpa [#allocation3], 1
    %s2833 = scalar_lea.sflag [#allocation3], 1
    %2834 = vsyncpa %s2833, 1

</llo_original>
